<compile_context>
chip_gen: v5e
topology: v5e:2x2
jax: 0.10.0
libtpu: 0.0.40
codegen_flags: <defaults>
</compile_context>

<pallas_src>
import jax
import jax.numpy as jnp
from jax.experimental import pallas as pl
from jax.experimental.pallas import tpu as pltpu

LN_EPS = 1e-5


def _round_up(x, m):
    return (x + m - 1) // m * m


def moe_sublayer_kernel(x_ref, p_ref, w1_ref, b1_ref, w2_ref, o_ref,
                        xn_ref, acc_ref):
    """Grid = (token tiles, F tiles).  p_ref packs [gamma; beta; b2] as (3, D)."""
    kf = pl.program_id(1)

    @pl.when(kf == 0)
    def _init():
        # LayerNorm (computed once per token tile) -> bf16 scratch.
        x = x_ref[...].astype(jnp.float32)                   # (tm, D)
        p = p_ref[...]                                       # (3, D) f32
        mean = jnp.mean(x, axis=-1, keepdims=True)
        mean_sq = jnp.mean(x * x, axis=-1, keepdims=True)
        var = mean_sq - mean * mean                          # E[x^2] - E[x]^2
        xn = (x - mean) * jax.lax.rsqrt(var + LN_EPS)
        xn = xn * p[0:1, :] + p[1:2, :]                      # affine (f32)
        xn_ref[...] = xn.astype(jnp.bfloat16)
        acc_ref[...] = jnp.zeros_like(acc_ref)

    # ff1 tile + relu: bf16 MXU inputs, f32 accumulation; cast to bf16 ASAP.
    h = jnp.dot(xn_ref[...], w1_ref[...],
                preferred_element_type=jnp.float32)          # (tm, tf) f32
    h = jnp.maximum(h + b1_ref[...], 0.0).astype(jnp.bfloat16)

    # partial ff2 for this F slice, accumulated in f32.
    acc_ref[...] += jnp.dot(h, w2_ref[...],
                            preferred_element_type=jnp.float32)   # (tm, D)

    @pl.when(kf == pl.num_programs(1) - 1)
    def _finalize():
        x = x_ref[...].astype(jnp.float32)
        b2 = p_ref[...][2:3, :]
        o_ref[...] = (x + acc_ref[...] + b2).astype(o_ref.dtype)


def moe_sublayer(xs, gamma, beta, w1, b1, w2, b2, *, tm=512, tf=None):
    """xs: (T, B, D) f32 or bf16. Returns same shape/dtype.

    D and F should be multiples of 128 for full lane utilization (D a multiple
    of 256 best uses the 256x256 MXU on v6e/v7x; that is a shape choice, not a
    kernel choice).
    """
    T, B, D = xs.shape
    F = w1.shape[1]
    N = T * B
    itemsize = jnp.dtype(xs.dtype).itemsize
    sub = {4: 8, 2: 16, 1: 32}.get(itemsize, 8)     # sublane multiple per dtype

    # --- token tiling ---------------------------------------------------
    tm_eff = min(tm, _round_up(N, sub))
    # Prefer >= 2 token steps (v7x has 2 TensorCores sharing the "parallel"
    # axis) as long as each tile stays non-trivial.
    if _round_up(N, tm_eff) // tm_eff < 2 and N > 2 * sub:
        tm_eff = _round_up((N + 1) // 2, sub)
    n_pad = _round_up(N, tm_eff)

    # --- F (ffn) tiling ---------------------------------------------------
    if tf is None:
        tf = 2048
    tf = max(256, _round_up(tf, 256))
    tf = min(tf, _round_up(F, 256))
    f_pad = _round_up(F, tf)

    # --- operand prep -----------------------------------------------------
    x2d = xs.reshape(N, D)
    if n_pad != N:
        x2d = jnp.pad(x2d, ((0, n_pad - N), (0, 0)))

    gamma2 = gamma.reshape(1, D).astype(jnp.float32)
    beta2 = beta.reshape(1, D).astype(jnp.float32)
    b2_2 = b2.reshape(1, D).astype(jnp.float32)
    params = jnp.concatenate([gamma2, beta2, b2_2], axis=0)      # (3, D)

    w1_b = w1.astype(jnp.bfloat16)
    w2_b = w2.astype(jnp.bfloat16)
    b1_f = b1.reshape(1, F).astype(jnp.float32)
    if f_pad != F:
        # zero-padded F columns give relu(0)=0 and hit zero rows of W2 -> no-op
        w1_b = jnp.pad(w1_b, ((0, 0), (0, f_pad - F)))
        b1_f = jnp.pad(b1_f, ((0, 0), (0, f_pad - F)))
        w2_b = jnp.pad(w2_b, ((0, f_pad - F), (0, 0)))

    n_m = n_pad // tm_eff
    n_f = f_pad // tf
    grid = (n_m, n_f)

    # --- VMEM budget (derived, not hardcoded) ------------------------------
    vmem_need = (
        2 * tm_eff * D * itemsize                 # x tiles, double-buffered
        + 2 * tm_eff * D * itemsize               # out tiles
        + 2 * 2 * D * tf * 2                      # W1 + W2 bf16 tiles, 2 buffers
        + 2 * 8 * max(tf, 128) * 4                # b1 tile (sublane-padded)
        + 2 * 8 * max(D, 128) * 4                 # packed params
        + tm_eff * D * (2 + 4)                    # xn (bf16) + acc (f32) scratch
    )
    try:
        cap = int(pltpu.get_tpu_info().vmem_capacity_bytes * 0.8)
    except Exception:
        cap = 48 * 1024 * 1024                    # safe on v5e/v6e/v7x
    vmem_limit = int(min(max(vmem_need * 3 // 2 + (2 << 20), 32 << 20), cap))

    cost = pl.CostEstimate(
        flops=4 * n_pad * D * f_pad,              # two matmuls
        transcendentals=n_pad,                    # one rsqrt per token
        bytes_accessed=(
            2 * n_pad * D * itemsize              # x in + out
            + n_m * (2 * D * f_pad * 2 + f_pad * 4)   # weights re-streamed per token tile
            + 3 * D * 4                           # packed params
        ),
    )

    out2d = pl.pallas_call(
        moe_sublayer_kernel,
        out_shape=jax.ShapeDtypeStruct((n_pad, D), xs.dtype),
        grid_spec=pltpu.PrefetchScalarGridSpec(
            num_scalar_prefetch=0,
            grid=grid,
            in_specs=[
                pl.BlockSpec((tm_eff, D), lambda i, kf: (i, 0)),   # x tile
                pl.BlockSpec((3, D), lambda i, kf: (0, 0)),        # gamma/beta/b2
                pl.BlockSpec((D, tf), lambda i, kf: (0, kf)),      # W1 tile (bf16)
                pl.BlockSpec((1, tf), lambda i, kf: (0, kf)),      # b1 tile
                pl.BlockSpec((tf, D), lambda i, kf: (kf, 0)),      # W2 tile (bf16)
            ],
            out_specs=pl.BlockSpec((tm_eff, D), lambda i, kf: (i, 0)),
            scratch_shapes=[
                pltpu.VMEM((tm_eff, D), jnp.bfloat16),   # normalized activations
                pltpu.VMEM((tm_eff, D), jnp.float32),    # ff2 accumulator
            ],
        ),
        compiler_params=pltpu.CompilerParams(
            dimension_semantics=("parallel", "arbitrary"),
            vmem_limit_bytes=vmem_limit,
        ),
        cost_estimate=cost,
    )(x2d, params, w1_b, b1_f, w2_b)

    return out2d[:N].reshape(T, B, D)


def moe_sublayer_ref(xs, gamma, beta, w1, b1, w2, b2):
    """Plain-JAX (f32) reference mirroring the PyTorch forward."""
    x = xs.astype(jnp.float32)
    mu = jnp.mean(x, axis=-1, keepdims=True)
    var = jnp.mean((x - mu) ** 2, axis=-1, keepdims=True)
    xn = (x - mu) * jax.lax.rsqrt(var + LN_EPS) * gamma.reshape(-1) + beta.reshape(-1)
    h = jnp.maximum(xn @ w1 + b1.reshape(-1), 0.0)
    y = h @ w2 + b2.reshape(-1)
    return (x + y).astype(xs.dtype)


if __name__ == "__main__":
    # Lane-dense decoder-like shapes: seq=128, batch=8, embed=128, ffn=512
    # -> N=1024 tokens, tm=512 -> 2 "parallel" token steps.
    T, B, D, F = 128, 8, 128, 512

    key = jax.random.PRNGKey(0)
    k_x, k_w1, k_b1, k_w2, k_b2, k_x2 = jax.random.split(key, 6)

    xs = jax.random.normal(k_x, (T, B, D), dtype=jnp.float32)

    # LayerNorm params (PyTorch default init: gamma=1, beta=0).
    gamma = jnp.ones((1, D), dtype=jnp.float32)
    beta = jnp.zeros((1, D), dtype=jnp.float32)

    # ff1: Linear(D -> F); stored transposed (in, out).
    bound1 = 1.0 / (D ** 0.5)
    w1 = jax.random.uniform(k_w1, (D, F), jnp.float32, -bound1, bound1)
    b1 = jax.random.uniform(k_b1, (1, F), jnp.float32, -bound1, bound1)

    # ff2: Linear(F -> D); weight explicitly zeroed in the module's __init__.
    bound2 = 1.0 / (F ** 0.5)
    w2_zero = jnp.zeros((F, D), dtype=jnp.float32)
    w2_rand = jax.random.uniform(k_w2, (F, D), jnp.float32, -bound2, bound2)
    b2 = jax.random.uniform(k_b2, (1, D), jnp.float32, -bound2, bound2)

    # Check 1: spec-faithful init (ff2 weight zeroed) -> out == xs + b2.
    out = jax.block_until_ready(moe_sublayer(xs, gamma, beta, w1, b1, w2_zero, b2))
    ref = moe_sublayer_ref(xs, gamma, beta, w1, b1, w2_zero, b2)
    assert out.shape == xs.shape and out.dtype == xs.dtype
    assert jnp.allclose(out, ref, atol=1e-5, rtol=1e-5), "mismatch (zero ff2 weight)"

    # Check 2: random ff2 weight with tf=256 -> exercises the F-reduction axis
    # (grid (2, 2)) and the bf16 MXU path with the f32 accumulator.
    out2 = jax.block_until_ready(
        moe_sublayer(xs, gamma, beta, w1, b1, w2_rand, b2, tf=256))
    ref2 = moe_sublayer_ref(xs, gamma, beta, w1, b1, w2_rand, b2)
    assert jnp.allclose(out2, ref2, atol=3e-2, rtol=3e-2), "mismatch (random ff2, tf=256)"

    # Check 3: bf16 activations in / out (halves activation HBM traffic;
    # biggest win on v5e). LN/residual math stays f32 inside the kernel.
    xs_bf = xs.astype(jnp.bfloat16)
    out3 = jax.block_until_ready(
        moe_sublayer(xs_bf, gamma, beta, w1, b1, w2_rand, b2))
    assert out3.dtype == jnp.bfloat16
    ref3 = moe_sublayer_ref(xs_bf, gamma, beta, w1, b1, w2_rand, b2)
    assert jnp.allclose(out3.astype(jnp.float32), ref3.astype(jnp.float32),
                        atol=1e-1, rtol=1e-1), "mismatch (bf16 activations)"

    # Check 4: ragged token count (N=51) -> exercises the padding + tile-clamp
    # path (padded rows are sliced off before returning).
    xs_r = jax.random.normal(k_x2, (17, 3, D), dtype=jnp.float32)
    out4 = jax.block_until_ready(
        moe_sublayer(xs_r, gamma, beta, w1, b1, w2_rand, b2))
    ref4 = moe_sublayer_ref(xs_r, gamma, beta, w1, b1, w2_rand, b2)
    assert out4.shape == xs_r.shape
    assert jnp.allclose(out4, ref4, atol=3e-2, rtol=3e-2), "mismatch (ragged N)"

    print("KERNEL_OK")
</pallas_src>

<mosaic_0001>
module attributes {stable_mosaic.version = 11 : i64} {
  func.func @moe_sublayer_kernel(%arg0: i32, %arg1: i32, %arg2: memref<512x128xf32, #tpu.memory_space<vmem>>, %arg3: memref<3x128xf32, #tpu.memory_space<vmem>>, %arg4: memref<128x512xbf16, #tpu.memory_space<vmem>>, %arg5: memref<1x512xf32, #tpu.memory_space<vmem>>, %arg6: memref<512x128xbf16, #tpu.memory_space<vmem>>, %arg7: memref<512x128xf32, #tpu.memory_space<vmem>>, %arg8: memref<512x128xbf16, #tpu.memory_space<vmem>>, %arg9: memref<512x128xf32, #tpu.memory_space<vmem>>) attributes {dimension_semantics = [#tpu.dimension_semantics<parallel>, #tpu.dimension_semantics<arbitrary>], iteration_bounds = array<i64: 2, 1>, scalar_prefetch = 0 : i64, scratch_operands = 2 : i64, tpu.core_type = #tpu.core_type<tc>, window_params = [{transform_indices = @transform_0, window_bounds = array<i64: 512, 128>}, {pipeline_mode = #tpu.pipeline_mode<synchronous>, transform_indices = @transform_1, window_bounds = array<i64: 3, 128>}, {transform_indices = @transform_2, window_bounds = array<i64: 128, 512>}, {transform_indices = @transform_3, window_bounds = array<i64: 1, 512>}, {transform_indices = @transform_4, window_bounds = array<i64: 512, 128>}, {transform_indices = @transform_5, window_bounds = array<i64: 512, 128>}]} {
    %c0_i32 = arith.constant 0 : i32
    %0 = arith.cmpi eq, %arg1, %c0_i32 : i32
    %1 = arith.extui %0 : i1 to i32
    %c0_i32_0 = arith.constant 0 : i32
    %2 = arith.cmpi ne, %1, %c0_i32_0 : i32
    scf.if %2 {
      %c0_16 = arith.constant 0 : index
      %c0_17 = arith.constant 0 : index
      %20 = vector.load %arg2[%c0_16, %c0_17] : memref<512x128xf32, #tpu.memory_space<vmem>>, vector<512x128xf32>
      %c0_18 = arith.constant 0 : index
      %c0_19 = arith.constant 0 : index
      %21 = vector.load %arg3[%c0_18, %c0_19] : memref<3x128xf32, #tpu.memory_space<vmem>>, vector<3x128xf32>
      %cst_20 = arith.constant dense<0.000000e+00> : vector<512xf32>
      %22 = vector.multi_reduction <add>, %20, %cst_20 [1] : vector<512x128xf32> to vector<512xf32>
      %23 = vector.shape_cast %22 : vector<512xf32> to vector<512x1xf32>
      %cst_21 = arith.constant 1.280000e+02 : f32
      %24 = vector.broadcast %cst_21 : f32 to vector<512x1xf32>
      %25 = arith.divf %23, %24 : vector<512x1xf32>
      %26 = arith.mulf %20, %20 : vector<512x128xf32>
      %cst_22 = arith.constant dense<0.000000e+00> : vector<512xf32>
      %27 = vector.multi_reduction <add>, %26, %cst_22 [1] : vector<512x128xf32> to vector<512xf32>
      %28 = vector.shape_cast %27 : vector<512xf32> to vector<512x1xf32>
      %cst_23 = arith.constant 1.280000e+02 : f32
      %29 = vector.broadcast %cst_23 : f32 to vector<512x1xf32>
      %30 = arith.divf %28, %29 : vector<512x1xf32>
      %31 = arith.mulf %25, %25 : vector<512x1xf32>
      %32 = arith.subf %30, %31 : vector<512x1xf32>
      %33 = vector.broadcast %25 : vector<512x1xf32> to vector<512x128xf32>
      %34 = arith.subf %20, %33 : vector<512x128xf32>
      %cst_24 = arith.constant 9.99999974E-6 : f32
      %35 = vector.broadcast %cst_24 : f32 to vector<512x1xf32>
      %36 = arith.addf %32, %35 : vector<512x1xf32>
      %37 = math.rsqrt %36 : vector<512x1xf32>
      %38 = vector.broadcast %37 : vector<512x1xf32> to vector<512x128xf32>
      %39 = arith.mulf %34, %38 : vector<512x128xf32>
      %40 = vector.extract_strided_slice %21 {offsets = [0, 0], sizes = [1, 128], strides = [1, 1]} : vector<3x128xf32> to vector<1x128xf32>
      %41 = vector.broadcast %40 : vector<1x128xf32> to vector<512x128xf32>
      %42 = arith.mulf %39, %41 : vector<512x128xf32>
      %43 = vector.extract_strided_slice %21 {offsets = [1, 0], sizes = [1, 128], strides = [1, 1]} : vector<3x128xf32> to vector<1x128xf32>
      %44 = vector.broadcast %43 : vector<1x128xf32> to vector<512x128xf32>
      %45 = arith.addf %42, %44 : vector<512x128xf32>
      %46 = arith.truncf %45 : vector<512x128xf32> to vector<512x128xbf16>
      %c0_25 = arith.constant 0 : index
      %c0_26 = arith.constant 0 : index
      %47 = vector.load %arg8[%c0_25, %c0_26] : memref<512x128xbf16, #tpu.memory_space<vmem>>, vector<512x128xbf16>
      tpu.vector_store %arg8[%c0_25, %c0_26], %46 {strides = array<i32>} : memref<512x128xbf16, #tpu.memory_space<vmem>>, vector<512x128xbf16>,
      %cst_27 = arith.constant 0.000000e+00 : f32
      %48 = vector.broadcast %cst_27 : f32 to vector<512x128xf32>
      %c0_28 = arith.constant 0 : index
      %c0_29 = arith.constant 0 : index
      %49 = vector.load %arg9[%c0_28, %c0_29] : memref<512x128xf32, #tpu.memory_space<vmem>>, vector<512x128xf32>
      tpu.vector_store %arg9[%c0_28, %c0_29], %48 {strides = array<i32>} : memref<512x128xf32, #tpu.memory_space<vmem>>, vector<512x128xf32>,
    } else {
    }
    %c0 = arith.constant 0 : index
    %c0_1 = arith.constant 0 : index
    %3 = vector.load %arg8[%c0, %c0_1] : memref<512x128xbf16, #tpu.memory_space<vmem>>, vector<512x128xbf16>
    %c0_2 = arith.constant 0 : index
    %c0_3 = arith.constant 0 : index
    %4 = vector.load %arg4[%c0_2, %c0_3] : memref<128x512xbf16, #tpu.memory_space<vmem>>, vector<128x512xbf16>
    %cst = arith.constant dense<0.000000e+00> : vector<512x512xf32>
    %5 = tpu.matmul %3, %4, %cst {dimension_numbers = #tpu.dot_dimension_numbers<[1], [0], [0], [1], [0, 0, 1, 1], [], []>} : vector<512x128xbf16>, vector<128x512xbf16>, vector<512x512xf32> -> vector<512x512xf32>
    %c0_4 = arith.constant 0 : index
    %c0_5 = arith.constant 0 : index
    %6 = vector.load %arg5[%c0_4, %c0_5] : memref<1x512xf32, #tpu.memory_space<vmem>>, vector<1x512xf32>
    %7 = vector.broadcast %6 : vector<1x512xf32> to vector<512x512xf32>
    %8 = arith.addf %5, %7 : vector<512x512xf32>
    %cst_6 = arith.constant 0.000000e+00 : f32
    %9 = vector.broadcast %cst_6 : f32 to vector<512x512xf32>
    %10 = arith.maximumf %8, %9 : vector<512x512xf32>
    %11 = arith.truncf %10 : vector<512x512xf32> to vector<512x512xbf16>
    %c0_7 = arith.constant 0 : index
    %c0_8 = arith.constant 0 : index
    %12 = vector.load %arg9[%c0_7, %c0_8] : memref<512x128xf32, #tpu.memory_space<vmem>>, vector<512x128xf32>
    %c0_9 = arith.constant 0 : index
    %c0_10 = arith.constant 0 : index
    %13 = vector.load %arg6[%c0_9, %c0_10] : memref<512x128xbf16, #tpu.memory_space<vmem>>, vector<512x128xbf16>
    %cst_11 = arith.constant dense<0.000000e+00> : vector<512x128xf32>
    %14 = tpu.matmul %11, %13, %cst_11 {dimension_numbers = #tpu.dot_dimension_numbers<[1], [0], [0], [1], [0, 0, 1, 1], [], []>} : vector<512x512xbf16>, vector<512x128xbf16>, vector<512x128xf32> -> vector<512x128xf32>
    %15 = arith.addf %12, %14 : vector<512x128xf32>
    %c0_12 = arith.constant 0 : index
    %c0_13 = arith.constant 0 : index
    %16 = vector.load %arg9[%c0_12, %c0_13] : memref<512x128xf32, #tpu.memory_space<vmem>>, vector<512x128xf32>
    tpu.vector_store %arg9[%c0_12, %c0_13], %15 {strides = array<i32>} : memref<512x128xf32, #tpu.memory_space<vmem>>, vector<512x128xf32>,
    %c0_i32_14 = arith.constant 0 : i32
    %17 = arith.cmpi eq, %arg1, %c0_i32_14 : i32
    %18 = arith.extui %17 : i1 to i32
    %c0_i32_15 = arith.constant 0 : i32
    %19 = arith.cmpi ne, %18, %c0_i32_15 : i32
    scf.if %19 {
      %c0_16 = arith.constant 0 : index
      %c0_17 = arith.constant 0 : index
      %20 = vector.load %arg2[%c0_16, %c0_17] : memref<512x128xf32, #tpu.memory_space<vmem>>, vector<512x128xf32>
      %c0_18 = arith.constant 0 : index
      %c0_19 = arith.constant 0 : index
      %21 = vector.load %arg3[%c0_18, %c0_19] : memref<3x128xf32, #tpu.memory_space<vmem>>, vector<3x128xf32>
      %22 = vector.extract_strided_slice %21 {offsets = [2, 0], sizes = [1, 128], strides = [1, 1]} : vector<3x128xf32> to vector<1x128xf32>
      %c0_20 = arith.constant 0 : index
      %c0_21 = arith.constant 0 : index
      %23 = vector.load %arg9[%c0_20, %c0_21] : memref<512x128xf32, #tpu.memory_space<vmem>>, vector<512x128xf32>
      %24 = arith.addf %20, %23 : vector<512x128xf32>
      %25 = vector.broadcast %22 : vector<1x128xf32> to vector<512x128xf32>
      %26 = arith.addf %24, %25 : vector<512x128xf32>
      %c0_22 = arith.constant 0 : index
      %c0_23 = arith.constant 0 : index
      %27 = vector.load %arg7[%c0_22, %c0_23] : memref<512x128xf32, #tpu.memory_space<vmem>>, vector<512x128xf32>
      tpu.vector_store %arg7[%c0_22, %c0_23], %26 {strides = array<i32>} : memref<512x128xf32, #tpu.memory_space<vmem>>, vector<512x128xf32>,
    } else {
    }
    return
  }
  func.func @transform_0(%arg0: i32, %arg1: i32) -> (i32, i32) {
    %c0_i32 = arith.constant 0 : i32
    %c0_i32_0 = arith.constant 0 : i32
    return %arg0, %c0_i32 : i32, i32
  }
  func.func @transform_1(%arg0: i32, %arg1: i32) -> (i32, i32) {
    %c0_i32 = arith.constant 0 : i32
    %c0_i32_0 = arith.constant 0 : i32
    %c0_i32_1 = arith.constant 0 : i32
    return %c0_i32, %c0_i32_0 : i32, i32
  }
  func.func @transform_2(%arg0: i32, %arg1: i32) -> (i32, i32) {
    %c0_i32 = arith.constant 0 : i32
    %c0_i32_0 = arith.constant 0 : i32
    return %c0_i32, %arg1 : i32, i32
  }
  func.func @transform_3(%arg0: i32, %arg1: i32) -> (i32, i32) {
    %c0_i32 = arith.constant 0 : i32
    %c0_i32_0 = arith.constant 0 : i32
    return %c0_i32, %arg1 : i32, i32
  }
  func.func @transform_4(%arg0: i32, %arg1: i32) -> (i32, i32) {
    %c0_i32 = arith.constant 0 : i32
    %c0_i32_0 = arith.constant 0 : i32
    return %arg1, %c0_i32 : i32, i32
  }
  func.func @transform_5(%arg0: i32, %arg1: i32) -> (i32, i32) {
    %c0_i32 = arith.constant 0 : i32
    %c0_i32_0 = arith.constant 0 : i32
    return %arg0, %c0_i32 : i32, i32
  }
}

</mosaic_0001>

<llo_original>
// kernel: tpu_custom_call.1
$region0: #{tpu_custom_call.1}
  #allocation0 [shape = 'u32[]', space=smem, size = 0x4, offset = 0x4, fixed_abs, tag = 'smem constant byte address 0x4 - core index']
  #allocation1 [shape = 'u32[72,128]{1,0:T(1,128)}', space=vmem, size = 0x9000, scoped, tag = 'internal scratch']
  #allocation2 [shape = 'bf16[512,128]{1,0:T(8,128)(2,1)}', space=vmem, size = 0x20000, scoped, tag = 'scratch operand']
  #allocation3 [shape = 'f32[512,128]{1,0:T(8,128)}', space=vmem, size = 0x40000, scoped, tag = 'scratch operand']
  %s0 = inlined_call_operand.hbm [shape: f32[1024,128], index: 0, kind: input, shape index: {}]
  %s1 = inlined_call_operand.hbm [shape: f32[3,128], index: 1, kind: input, shape index: {}]
  %s2 = inlined_call_operand.hbm [shape: bf16[128,512], index: 2, kind: input, shape index: {}]
  %s3 = inlined_call_operand.hbm [shape: f32[1,512], index: 3, kind: input, shape index: {}]
  %s4 = inlined_call_operand.hbm [shape: bf16[512,128], index: 4, kind: input, shape index: {}]
  %s5 = inlined_call_operand.hbm [shape: f32[1024,128], index: 5, kind: output, shape index: {}]
  %s6 = sld [smem:[#allocation0]]
  $region81: #{tpu_custom_call.1} parent=0
    _
  %s8 = ssub.s32 1, %s6
  %s9 = scalar_select 0, %s8, %s6
  $region1: #{tpu_custom_call.1} parent=0
    #allocation4 [shape = 'u8[524288]{0}', space=vmem, size = 0x80000, scoped, tag = 'input window, operand 0']
    #allocation5 [shape = 's32[2]{0}', space=sflag, size = 0x8, scoped, tag = 'scoped memory for tpu_custom_call.1']
    #allocation6 [shape = 's32[2]{0}', space=sflag, size = 0x8, scoped, tag = 'scoped memory for tpu_custom_call.1']
    #allocation7 [shape = 'u8[2048]{0}', space=vmem, size = 0x800, scoped, tag = 'input window, operand 1, single buffered']
    #allocation8 [shape = 's32[1]{0}', space=sflag, size = 0x4, scoped, tag = 'scoped memory for tpu_custom_call.1']
    #allocation9 [shape = 'u8[131072]{0}', space=vmem, size = 0x20000, scoped, tag = 'input window, operand 2, single buffered']
    #allocation10 [shape = 'u8[2048]{0}', space=vmem, size = 0x800, scoped, tag = 'input window, operand 3, single buffered']
    #allocation11 [shape = 's32[1]{0}', space=sflag, size = 0x4, scoped, tag = 'scoped memory for tpu_custom_call.1']
    #allocation12 [shape = 'u8[131072]{0}', space=vmem, size = 0x20000, scoped, tag = 'input window, operand 4, single buffered']
    #allocation13 [shape = 'u8[524288]{0}', space=vmem, size = 0x80000, scoped, tag = 'output window, operand 0']
    %10 = vsyncpa [#allocation5], 0
    %s11 = scalar_lea.sflag [#allocation5], 1
    %12 = vsyncpa %s11, 0
    %13 = vsyncpa [#allocation8], 0
    %14 = vsyncpa [#allocation11], 0
    %15 = vsyncpa [#allocation6], 0
    %s16 = scalar_lea.sflag [#allocation6], 1
    %17 = vsyncpa %s16, 0
    loop: start=0, step=1, limit=4
    $region2: #{tpu_custom_call.1} parent=1 // loop_pre_header
      _
    $region3: #{tpu_custom_call.1} parent=1 // loop_header
      %s19 = sphi 0, %s23
      %p20 = scmp.ge.s32.totalorder %s19, 4
      %s26 = sphi 0, %s38
      %s27 = sphi 0, %s34
      %s28 = sphi 0, %s26
      %s29 = sphi 0, %s27
      %s30 = sphi 0, %s28
      %s31 = sphi 0, %s29
      %s41 = sphi 0, %s43
      %s44 = sphi 0, %s41
      %s45 = sphi 0, %s44
      %s61 = sphi 0, %s45
      %s65 = sphi 0, %s65
      %s67 = sphi 0, %s65
      %s68 = sphi 0, %s67
      %s82 = sphi 0, %s68
      %s88 = sphi 0, %s90
      %s91 = sphi 0, %s88
      %s92 = sphi 0, %s91
      %s108 = sphi 0, %s92
      %s114 = sphi 0, %s116
      %s117 = sphi 0, %s114
      %s118 = sphi 0, %s117
      %s134 = sphi 0, %s118
      %s140 = sphi 0, %s142
      %s143 = sphi 0, %s140
      %s144 = sphi 0, %s143
      %s160 = sphi 0, %s144
      %s166 = sphi 0, %s168
      %s169 = sphi 0, %s166
      %s170 = sphi 0, %s169
      %s186 = sphi 0, %s170
    $region4: #{tpu_custom_call.1} parent=1 // loop_header_branch
      %22 = sbr.rel (%p20) target = $region8
    $region5: #{tpu_custom_call.1} parent=1 // loop_body
      %s24 = ssub.s32 %s19, 1
      %s25 = ssub.s32 %s19, 2
      %s32 = sadd.s32 1, %s27
      %p33 = scmp.ge.s32.totalorder %s32, 1
      %s34 = scalar_select %p33, 0, %s32
      %s35 = sadd.s32 1, %s26
      %s36 = scalar_select %p33, %s35, %s26
      %p37 = scmp.ge.s32.totalorder %s36, 2
      %s38 = scalar_select %p37, 0, %s36
      %s39 = ssub.s32 %s26, %s38
      %p40 = scmp.eq.s32.totalorder %s39, 0
      %s42 = sadd.s32 %s41, 1
      %s43 = scalar_select %p40, %s41, %s42
      %p46 = pneg %p40
      %p47 = scmp.eq.s32.totalorder %s19, 1
      %p48 = por %p46, %p47
      %p49 = scmp.ne.s32.totalorder %s41, %s44
      %p50 = scmp.eq.s32.totalorder %s19, 0
      %p51 = por %p49, %p50
      %p52 = scmp.ne.s32.totalorder %s41, %s44
      %p53 = scmp.eq.s32.totalorder %s24, 1
      %p54 = por %p52, %p53
      %p55 = scmp.ne.s32.totalorder %s44, %s45
      %p56 = scmp.eq.s32.totalorder %s24, 0
      %p57 = por %p55, %p56
      %p58 = scmp.ne.s32.totalorder %s44, %s45
      %p59 = scmp.eq.s32.totalorder %s25, 1
      %p60 = por %p58, %p59
      %p62 = scmp.ne.s32.totalorder %s45, %s61
      %p63 = scmp.eq.s32.totalorder %s25, 0
      %p64 = por %p62, %p63
      %s66 = sadd.s32 %s65, 1
      %p69 = scmp.eq.s32.totalorder %s19, 1
      %p70 = scmp.ne.s32.totalorder %s65, %s67
      %p71 = scmp.eq.s32.totalorder %s19, 0
      %p72 = por %p70, %p71
      %p73 = scmp.ne.s32.totalorder %s65, %s67
      %p74 = scmp.eq.s32.totalorder %s24, 1
      %p75 = por %p73, %p74
      %p76 = scmp.ne.s32.totalorder %s67, %s68
      %p77 = scmp.eq.s32.totalorder %s24, 0
      %p78 = por %p76, %p77
      %p79 = scmp.ne.s32.totalorder %s67, %s68
      %p80 = scmp.eq.s32.totalorder %s25, 1
      %p81 = por %p79, %p80
      %p83 = scmp.ne.s32.totalorder %s68, %s82
      %p84 = scmp.eq.s32.totalorder %s25, 0
      %p85 = por %p83, %p84
      %s86 = ssub.s32 %s27, %s34
      %p87 = scmp.eq.s32.totalorder %s86, 0
      %s89 = sadd.s32 %s88, 1
      %s90 = scalar_select %p87, %s88, %s89
      %p93 = pneg %p87
      %p94 = scmp.eq.s32.totalorder %s19, 1
      %p95 = por %p93, %p94
      %p96 = scmp.ne.s32.totalorder %s88, %s91
      %p97 = scmp.eq.s32.totalorder %s19, 0
      %p98 = por %p96, %p97
      %p99 = scmp.ne.s32.totalorder %s88, %s91
      %p100 = scmp.eq.s32.totalorder %s24, 1
      %p101 = por %p99, %p100
      %p102 = scmp.ne.s32.totalorder %s91, %s92
      %p103 = scmp.eq.s32.totalorder %s24, 0
      %p104 = por %p102, %p103
      %p105 = scmp.ne.s32.totalorder %s91, %s92
      %p106 = scmp.eq.s32.totalorder %s25, 1
      %p107 = por %p105, %p106
      %p109 = scmp.ne.s32.totalorder %s92, %s108
      %p110 = scmp.eq.s32.totalorder %s25, 0
      %p111 = por %p109, %p110
      %s112 = ssub.s32 %s27, %s34
      %p113 = scmp.eq.s32.totalorder %s112, 0
      %s115 = sadd.s32 %s114, 1
      %s116 = scalar_select %p113, %s114, %s115
      %p119 = pneg %p113
      %p120 = scmp.eq.s32.totalorder %s19, 1
      %p121 = por %p119, %p120
      %p122 = scmp.ne.s32.totalorder %s114, %s117
      %p123 = scmp.eq.s32.totalorder %s19, 0
      %p124 = por %p122, %p123
      %p125 = scmp.ne.s32.totalorder %s114, %s117
      %p126 = scmp.eq.s32.totalorder %s24, 1
      %p127 = por %p125, %p126
      %p128 = scmp.ne.s32.totalorder %s117, %s118
      %p129 = scmp.eq.s32.totalorder %s24, 0
      %p130 = por %p128, %p129
      %p131 = scmp.ne.s32.totalorder %s117, %s118
      %p132 = scmp.eq.s32.totalorder %s25, 1
      %p133 = por %p131, %p132
      %p135 = scmp.ne.s32.totalorder %s118, %s134
      %p136 = scmp.eq.s32.totalorder %s25, 0
      %p137 = por %p135, %p136
      %s138 = ssub.s32 %s27, %s34
      %p139 = scmp.eq.s32.totalorder %s138, 0
      %s141 = sadd.s32 %s140, 1
      %s142 = scalar_select %p139, %s140, %s141
      %p145 = pneg %p139
      %p146 = scmp.eq.s32.totalorder %s19, 1
      %p147 = por %p145, %p146
      %p148 = scmp.ne.s32.totalorder %s140, %s143
      %p149 = scmp.eq.s32.totalorder %s19, 0
      %p150 = por %p148, %p149
      %p151 = scmp.ne.s32.totalorder %s140, %s143
      %p152 = scmp.eq.s32.totalorder %s24, 1
      %p153 = por %p151, %p152
      %p154 = scmp.ne.s32.totalorder %s143, %s144
      %p155 = scmp.eq.s32.totalorder %s24, 0
      %p156 = por %p154, %p155
      %p157 = scmp.ne.s32.totalorder %s143, %s144
      %p158 = scmp.eq.s32.totalorder %s25, 1
      %p159 = por %p157, %p158
      %p161 = scmp.ne.s32.totalorder %s144, %s160
      %p162 = scmp.eq.s32.totalorder %s25, 0
      %p163 = por %p161, %p162
      %s164 = ssub.s32 %s26, %s38
      %p165 = scmp.eq.s32.totalorder %s164, 0
      %s167 = sadd.s32 %s166, 1
      %s168 = scalar_select %p165, %s166, %s167
      %p171 = pneg %p165
      %p172 = scmp.eq.s32.totalorder %s19, 1
      %p173 = por %p171, %p172
      %p174 = scmp.ne.s32.totalorder %s166, %s169
      %p175 = scmp.eq.s32.totalorder %s19, 0
      %p176 = por %p174, %p175
      %p177 = scmp.ne.s32.totalorder %s166, %s169
      %p178 = scmp.eq.s32.totalorder %s24, 1
      %p179 = por %p177, %p178
      %p180 = scmp.ne.s32.totalorder %s169, %s170
      %p181 = scmp.eq.s32.totalorder %s24, 0
      %p182 = por %p180, %p181
      %p183 = scmp.ne.s32.totalorder %s169, %s170
      %p184 = scmp.eq.s32.totalorder %s25, 1
      %p185 = por %p183, %p184
      %p187 = scmp.ne.s32.totalorder %s170, %s186
      %p188 = scmp.eq.s32.totalorder %s25, 0
      %p189 = por %p187, %p188
      %p190 = scmp.le.s32.totalorder 1, %s19
      %p191 = scmp.lt.s32.totalorder %s19, 3
      %p192 = pnand %p190, %p191
      %p193 = pneg %p192
      // Predicated region
      $region9: #{tpu_custom_call.1} parent=5 // pred_check
        _
      $region10: #{tpu_custom_call.1} parent=5 // pred_check_branch
        %195 = sbr.rel (%p192) target = $region12
      $region11: #{tpu_custom_call.1} parent=5 // pred_region
        %s196 = ssub.s32 %s19, 1
        // Predicated region
        $region13: #{tpu_custom_call.1} parent=11 // pred_check
          %p197 = pneg %p78
        $region14: #{tpu_custom_call.1} parent=11 // pred_check_branch
          %199 = sbr.rel (%p197) target = $region16
        $region15: #{tpu_custom_call.1} parent=11 // pred_region
          %201 = vsyncadd [#allocation8], 0
          %s203 = sshll.u32 %s1, 4
          %s204 = int_to_ptr.hbm [resolvable:$true] %s203
          %s205 = sshll.u32 [#allocation7], 4
          %s206 = int_to_ptr.vmem [resolvable:$true] %s205
          %208 = dma.hbm_to_vmem [thread:$0]  %s204, 64, %s206, [#allocation8]
        $region16: #{tpu_custom_call.1} parent=11 // pred_fallthru
          _
        // Predicated region
        $region17: #{tpu_custom_call.1} parent=11 // pred_check
          %p209 = pneg %p104
        $region18: #{tpu_custom_call.1} parent=11 // pred_check_branch
          %211 = sbr.rel (%p209) target = $region20
        $region19: #{tpu_custom_call.1} parent=11 // pred_region
          %s212 = smul.u32 4, %s29
          %214 = vsyncadd [#allocation8], 0
          %s215 = smul.addr %s212, 4
          %s216 = scalar_lea.hbm %s2, %s215
          %s217 = sshll.u32 %s216, 4
          %s218 = int_to_ptr.hbm [resolvable:$true] %s217
          %s219 = sshll.u32 [#allocation9], 4
          %s220 = int_to_ptr.vmem [resolvable:$true] %s219
          %225 = dma.hbm_to_vmem [thread:$0]  %s218, 4096, %s220, [#allocation8], 256, 256, 16
        $region20: #{tpu_custom_call.1} parent=11 // pred_fallthru
          _
        // Predicated region
        $region21: #{tpu_custom_call.1} parent=11 // pred_check
          %p226 = pneg %p130
        $region22: #{tpu_custom_call.1} parent=11 // pred_check_branch
          %228 = sbr.rel (%p226) target = $region24
        $region23: #{tpu_custom_call.1} parent=11 // pred_region
          %s229 = smul.u32 4, %s29
          %231 = vsyncadd [#allocation11], 0
          %s232 = scalar_lea.hbm %s3, %s229
          %s234 = sshll.u32 %s232, 4
          %s235 = int_to_ptr.hbm [resolvable:$true] %s234
          %s236 = sshll.u32 [#allocation10], 4
          %s237 = int_to_ptr.vmem [resolvable:$true] %s236
          %239 = dma.hbm_to_vmem [thread:$0]  %s235, 64, %s237, [#allocation11]
        $region24: #{tpu_custom_call.1} parent=11 // pred_fallthru
          _
        // Predicated region
        $region25: #{tpu_custom_call.1} parent=11 // pred_check
          %p240 = pneg %p156
        $region26: #{tpu_custom_call.1} parent=11 // pred_check_branch
          %242 = sbr.rel (%p240) target = $region28
        $region27: #{tpu_custom_call.1} parent=11 // pred_region
          %s243 = smul.u32 64, %s29
          %245 = vsyncadd [#allocation11], 0
          %s246 = smul.addr %s243, 4
          %s247 = scalar_lea.hbm %s4, %s246
          %s248 = sshll.u32 %s247, 4
          %s249 = int_to_ptr.hbm [resolvable:$true] %s248
          %s250 = sshll.u32 [#allocation12], 4
          %s251 = int_to_ptr.vmem [resolvable:$true] %s250
          %256 = dma.hbm_to_vmem [thread:$0]  %s249, 4096, %s251, [#allocation11], 64, 64, 4
        $region28: #{tpu_custom_call.1} parent=11 // pred_fallthru
          _
      $region12: #{tpu_custom_call.1} parent=5 // pred_fallthru
        _
      %p257 = scmp.lt.s32.totalorder %s19, 2
      // Predicated region
      $region29: #{tpu_custom_call.1} parent=5 // pred_check
        %p258 = pneg %p257
      $region30: #{tpu_custom_call.1} parent=5 // pred_check_branch
        %260 = sbr.rel (%p258) target = $region32
      $region31: #{tpu_custom_call.1} parent=5 // pred_region
        // Predicated region
        $region33: #{tpu_custom_call.1} parent=31 // pred_check
          %p261 = pneg %p51
        $region34: #{tpu_custom_call.1} parent=31 // pred_check_branch
          %263 = sbr.rel (%p261) target = $region36
        $region35: #{tpu_custom_call.1} parent=31 // pred_region
          %s264 = sand.u32 %s41, 1
          %s265 = scalar_lea.sflag [#allocation5], %s264
          %s266 = sand.u32 %s41, 1
          %s267 = smul.addr %s266, 512
          %s268 = scalar_lea.vmem [#allocation4], %s267
          %s269 = smul.u32 64, %s26
          %271 = vsyncadd %s265, 0
          %s272 = smul.addr %s269, 8
          %s273 = scalar_lea.hbm %s0, %s272
          %s274 = sshll.u32 %s273, 4
          %s275 = int_to_ptr.hbm [resolvable:$true] %s274
          %s276 = sshll.u32 %s268, 4
          %s277 = int_to_ptr.vmem [resolvable:$true] %s276
          %282 = dma.hbm_to_vmem [thread:$0]  %s275, 8192, %s277, %s265, 128, 128, 8
        $region36: #{tpu_custom_call.1} parent=31 // pred_fallthru
          _
      $region32: #{tpu_custom_call.1} parent=5 // pred_fallthru
        _
      %p283 = scmp.le.s32.totalorder 1, %s19
      %p284 = scmp.lt.s32.totalorder %s19, 3
      %p285 = pnand %p283, %p284
      %p286 = pneg %p285
      // Predicated region
      $region37: #{tpu_custom_call.1} parent=5 // pred_check
        _
      $region38: #{tpu_custom_call.1} parent=5 // pred_check_branch
        %288 = sbr.rel (%p285) target = $region40
      $region39: #{tpu_custom_call.1} parent=5 // pred_region
        %s289 = ssub.s32 %s19, 1
        %s290 = sand.u32 %s44, 1
        %s291 = scalar_lea.sflag [#allocation5], %s290
        %s292 = sand.u32 %s44, 1
        %s293 = smul.addr %s292, 512
        %s294 = scalar_lea.vmem [#allocation4], %s293
        // Predicated region
        $region41: #{tpu_custom_call.1} parent=39 // pred_check
          %p295 = pneg %p57
        $region42: #{tpu_custom_call.1} parent=39 // pred_check_branch
          %297 = sbr.rel (%p295) target = $region44
        $region43: #{tpu_custom_call.1} parent=39 // pred_region
          %299 = dma.done %s291, 8192
        $region44: #{tpu_custom_call.1} parent=39 // pred_fallthru
          _
        // Predicated region
        $region45: #{tpu_custom_call.1} parent=39 // pred_check
          %p300 = pneg %p78
        $region46: #{tpu_custom_call.1} parent=39 // pred_check_branch
          %302 = sbr.rel (%p300) target = $region48
        $region47: #{tpu_custom_call.1} parent=39 // pred_region
          %304 = dma.done [#allocation8], 64
        $region48: #{tpu_custom_call.1} parent=39 // pred_fallthru
          _
        // Predicated region
        $region49: #{tpu_custom_call.1} parent=39 // pred_check
          %p305 = pneg %p104
        $region50: #{tpu_custom_call.1} parent=39 // pred_check_branch
          %307 = sbr.rel (%p305) target = $region52
        $region51: #{tpu_custom_call.1} parent=39 // pred_region
          %309 = dma.done [#allocation8], 4096
        $region52: #{tpu_custom_call.1} parent=39 // pred_fallthru
          _
        // Predicated region
        $region53: #{tpu_custom_call.1} parent=39 // pred_check
          %p310 = pneg %p130
        $region54: #{tpu_custom_call.1} parent=39 // pred_check_branch
          %312 = sbr.rel (%p310) target = $region56
        $region55: #{tpu_custom_call.1} parent=39 // pred_region
          %314 = dma.done [#allocation11], 64
        $region56: #{tpu_custom_call.1} parent=39 // pred_fallthru
          _
        // Predicated region
        $region57: #{tpu_custom_call.1} parent=39 // pred_check
          %p315 = pneg %p156
        $region58: #{tpu_custom_call.1} parent=39 // pred_check_branch
          %317 = sbr.rel (%p315) target = $region60
        $region59: #{tpu_custom_call.1} parent=39 // pred_region
          %319 = dma.done [#allocation11], 4096
        $region60: #{tpu_custom_call.1} parent=39 // pred_fallthru
          _
        %s320 = sand.u32 %s44, 1
        %s321 = scalar_lea.sflag [#allocation5], %s320
        %s322 = sand.u32 %s44, 1
        %s323 = smul.addr %s322, 512
        %s324 = scalar_lea.vmem [#allocation4], %s323
        %p325 = pneg %p57
        %p326 = pneg %p54
        %p327 = pneg %p78
        %p328 = pneg %p75
        %p329 = pneg %p104
        %p330 = pneg %p101
        %p331 = pneg %p130
        %p332 = pneg %p127
        %p333 = pneg %p156
        %p334 = pneg %p153
        %p335 = pneg %p182
        %p336 = pneg %p179
        %s337 = sand.u32 %s169, 1
        %s338 = scalar_lea.sflag [#allocation6], %s337
        %s339 = sand.u32 %s169, 1
        %s340 = smul.addr %s339, 512
        %s341 = scalar_lea.vmem [#allocation13], %s340
        %s342 = smul.u32 64, %s28
        %s343 = smul.u32 4, %s29
        %s344 = smul.u32 4, %s29
        %s345 = smul.u32 64, %s29
        %s346 = smul.u32 64, %s28
        %p347 = scmp.eq.s32.totalorder %s29, 0
        // Predicated region
        $region61: #{tpu_custom_call.1} parent=39 // pred_check
          %p348 = pneg %p347
        $region62: #{tpu_custom_call.1} parent=39 // pred_check_branch
          %350 = sbr.rel (%p348) target = $region64
        $region63: #{tpu_custom_call.1} parent=39 // pred_region
          %v351 = vld [vmem:[%s294] sm:$0xff]
          %v352 = vld [vmem:[%s294 + $0x8] sm:$0xff]
          %v353 = vld [vmem:[%s294 + $0x10] sm:$0xff]
          %v354 = vld [vmem:[%s294 + $0x18] sm:$0xff]
          %v355 = vld [vmem:[%s294 + $0x20] sm:$0xff]
          %v356 = vld [vmem:[%s294 + $0x28] sm:$0xff]
          %v357 = vld [vmem:[%s294 + $0x30] sm:$0xff]
          %v358 = vld [vmem:[%s294 + $0x38] sm:$0xff]
          %v359 = vld [vmem:[%s294 + $0x40] sm:$0xff]
          %v360 = vld [vmem:[%s294 + $0x48] sm:$0xff]
          %v361 = vld [vmem:[%s294 + $0x50] sm:$0xff]
          %v362 = vld [vmem:[%s294 + $0x58] sm:$0xff]
          %v363 = vld [vmem:[%s294 + $0x60] sm:$0xff]
          %v364 = vld [vmem:[%s294 + $0x68] sm:$0xff]
          %v365 = vld [vmem:[%s294 + $0x70] sm:$0xff]
          %v366 = vld [vmem:[%s294 + $0x78] sm:$0xff]
          %v367 = vld [vmem:[%s294 + $0x80] sm:$0xff]
          %v368 = vld [vmem:[%s294 + $0x88] sm:$0xff]
          %v369 = vld [vmem:[%s294 + $0x90] sm:$0xff]
          %v370 = vld [vmem:[%s294 + $0x98] sm:$0xff]
          %v371 = vld [vmem:[%s294 + $0xa0] sm:$0xff]
          %v372 = vld [vmem:[%s294 + $0xa8] sm:$0xff]
          %v373 = vld [vmem:[%s294 + $0xb0] sm:$0xff]
          %v374 = vld [vmem:[%s294 + $0xb8] sm:$0xff]
          %v375 = vld [vmem:[%s294 + $0xc0] sm:$0xff]
          %v376 = vld [vmem:[%s294 + $0xc8] sm:$0xff]
          %v377 = vld [vmem:[%s294 + $0xd0] sm:$0xff]
          %v378 = vld [vmem:[%s294 + $0xd8] sm:$0xff]
          %v379 = vld [vmem:[%s294 + $0xe0] sm:$0xff]
          %v380 = vld [vmem:[%s294 + $0xe8] sm:$0xff]
          %v381 = vld [vmem:[%s294 + $0xf0] sm:$0xff]
          %v382 = vld [vmem:[%s294 + $0xf8] sm:$0xff]
          %v383 = vld [vmem:[%s294 + $0x100] sm:$0xff]
          %v384 = vld [vmem:[%s294 + $0x108] sm:$0xff]
          %v385 = vld [vmem:[%s294 + $0x110] sm:$0xff]
          %v386 = vld [vmem:[%s294 + $0x118] sm:$0xff]
          %v387 = vld [vmem:[%s294 + $0x120] sm:$0xff]
          %v388 = vld [vmem:[%s294 + $0x128] sm:$0xff]
          %v389 = vld [vmem:[%s294 + $0x130] sm:$0xff]
          %v390 = vld [vmem:[%s294 + $0x138] sm:$0xff]
          %v391 = vld [vmem:[%s294 + $0x140] sm:$0xff]
          %v392 = vld [vmem:[%s294 + $0x148] sm:$0xff]
          %v393 = vld [vmem:[%s294 + $0x150] sm:$0xff]
          %v394 = vld [vmem:[%s294 + $0x158] sm:$0xff]
          %v395 = vld [vmem:[%s294 + $0x160] sm:$0xff]
          %v396 = vld [vmem:[%s294 + $0x168] sm:$0xff]
          %v397 = vld [vmem:[%s294 + $0x170] sm:$0xff]
          %v398 = vld [vmem:[%s294 + $0x178] sm:$0xff]
          %v399 = vld [vmem:[%s294 + $0x180] sm:$0xff]
          %v400 = vld [vmem:[%s294 + $0x188] sm:$0xff]
          %v401 = vld [vmem:[%s294 + $0x190] sm:$0xff]
          %v402 = vld [vmem:[%s294 + $0x198] sm:$0xff]
          %v403 = vld [vmem:[%s294 + $0x1a0] sm:$0xff]
          %v404 = vld [vmem:[%s294 + $0x1a8] sm:$0xff]
          %v405 = vld [vmem:[%s294 + $0x1b0] sm:$0xff]
          %v406 = vld [vmem:[%s294 + $0x1b8] sm:$0xff]
          %v407 = vld [vmem:[%s294 + $0x1c0] sm:$0xff]
          %v408 = vld [vmem:[%s294 + $0x1c8] sm:$0xff]
          %v409 = vld [vmem:[%s294 + $0x1d0] sm:$0xff]
          %v410 = vld [vmem:[%s294 + $0x1d8] sm:$0xff]
          %v411 = vld [vmem:[%s294 + $0x1e0] sm:$0xff]
          %v412 = vld [vmem:[%s294 + $0x1e8] sm:$0xff]
          %v413 = vld [vmem:[%s294 + $0x1f0] sm:$0xff]
          %v414 = vld [vmem:[%s294 + $0x1f8] sm:$0xff]
          %v415 = vld [vmem:[#allocation7] sm:$0x7]
          %416 = vadd.xlane.f32.xlu0 %v351
          %v417 = vpop.xlane.xlu0 %416
          %418 = vadd.xlane.f32.xlu0 %v352
          %v419 = vpop.xlane.xlu0 %418
          %420 = vadd.xlane.f32.xlu0 %v353
          %v421 = vpop.xlane.xlu0 %420
          %422 = vadd.xlane.f32.xlu0 %v354
          %v423 = vpop.xlane.xlu0 %422
          %424 = vadd.xlane.f32.xlu0 %v355
          %v425 = vpop.xlane.xlu0 %424
          %426 = vadd.xlane.f32.xlu0 %v356
          %v427 = vpop.xlane.xlu0 %426
          %428 = vadd.xlane.f32.xlu0 %v357
          %v429 = vpop.xlane.xlu0 %428
          %430 = vadd.xlane.f32.xlu0 %v358
          %v431 = vpop.xlane.xlu0 %430
          %432 = vadd.xlane.f32.xlu0 %v359
          %v433 = vpop.xlane.xlu0 %432
          %434 = vadd.xlane.f32.xlu0 %v360
          %v435 = vpop.xlane.xlu0 %434
          %436 = vadd.xlane.f32.xlu0 %v361
          %v437 = vpop.xlane.xlu0 %436
          %438 = vadd.xlane.f32.xlu0 %v362
          %v439 = vpop.xlane.xlu0 %438
          %440 = vadd.xlane.f32.xlu0 %v363
          %v441 = vpop.xlane.xlu0 %440
          %442 = vadd.xlane.f32.xlu0 %v364
          %v443 = vpop.xlane.xlu0 %442
          %444 = vadd.xlane.f32.xlu0 %v365
          %v445 = vpop.xlane.xlu0 %444
          %446 = vadd.xlane.f32.xlu0 %v366
          %v447 = vpop.xlane.xlu0 %446
          %448 = vadd.xlane.f32.xlu0 %v367
          %v449 = vpop.xlane.xlu0 %448
          %450 = vadd.xlane.f32.xlu0 %v368
          %v451 = vpop.xlane.xlu0 %450
          %452 = vadd.xlane.f32.xlu0 %v369
          %v453 = vpop.xlane.xlu0 %452
          %454 = vadd.xlane.f32.xlu0 %v370
          %v455 = vpop.xlane.xlu0 %454
          %456 = vadd.xlane.f32.xlu0 %v371
          %v457 = vpop.xlane.xlu0 %456
          %458 = vadd.xlane.f32.xlu0 %v372
          %v459 = vpop.xlane.xlu0 %458
          %460 = vadd.xlane.f32.xlu0 %v373
          %v461 = vpop.xlane.xlu0 %460
          %462 = vadd.xlane.f32.xlu0 %v374
          %v463 = vpop.xlane.xlu0 %462
          %464 = vadd.xlane.f32.xlu0 %v375
          %v465 = vpop.xlane.xlu0 %464
          %466 = vadd.xlane.f32.xlu0 %v376
          %v467 = vpop.xlane.xlu0 %466
          %468 = vadd.xlane.f32.xlu0 %v377
          %v469 = vpop.xlane.xlu0 %468
          %470 = vadd.xlane.f32.xlu0 %v378
          %v471 = vpop.xlane.xlu0 %470
          %472 = vadd.xlane.f32.xlu0 %v379
          %v473 = vpop.xlane.xlu0 %472
          %474 = vadd.xlane.f32.xlu0 %v380
          %v475 = vpop.xlane.xlu0 %474
          %476 = vadd.xlane.f32.xlu0 %v381
          %v477 = vpop.xlane.xlu0 %476
          %478 = vadd.xlane.f32.xlu0 %v382
          %v479 = vpop.xlane.xlu0 %478
          %480 = vadd.xlane.f32.xlu0 %v383
          %v481 = vpop.xlane.xlu0 %480
          %482 = vadd.xlane.f32.xlu0 %v384
          %v483 = vpop.xlane.xlu0 %482
          %484 = vadd.xlane.f32.xlu0 %v385
          %v485 = vpop.xlane.xlu0 %484
          %486 = vadd.xlane.f32.xlu0 %v386
          %v487 = vpop.xlane.xlu0 %486
          %488 = vadd.xlane.f32.xlu0 %v387
          %v489 = vpop.xlane.xlu0 %488
          %490 = vadd.xlane.f32.xlu0 %v388
          %v491 = vpop.xlane.xlu0 %490
          %492 = vadd.xlane.f32.xlu0 %v389
          %v493 = vpop.xlane.xlu0 %492
          %494 = vadd.xlane.f32.xlu0 %v390
          %v495 = vpop.xlane.xlu0 %494
          %496 = vadd.xlane.f32.xlu0 %v391
          %v497 = vpop.xlane.xlu0 %496
          %498 = vadd.xlane.f32.xlu0 %v392
          %v499 = vpop.xlane.xlu0 %498
          %500 = vadd.xlane.f32.xlu0 %v393
          %v501 = vpop.xlane.xlu0 %500
          %502 = vadd.xlane.f32.xlu0 %v394
          %v503 = vpop.xlane.xlu0 %502
          %504 = vadd.xlane.f32.xlu0 %v395
          %v505 = vpop.xlane.xlu0 %504
          %506 = vadd.xlane.f32.xlu0 %v396
          %v507 = vpop.xlane.xlu0 %506
          %508 = vadd.xlane.f32.xlu0 %v397
          %v509 = vpop.xlane.xlu0 %508
          %510 = vadd.xlane.f32.xlu0 %v398
          %v511 = vpop.xlane.xlu0 %510
          %512 = vadd.xlane.f32.xlu0 %v399
          %v513 = vpop.xlane.xlu0 %512
          %514 = vadd.xlane.f32.xlu0 %v400
          %v515 = vpop.xlane.xlu0 %514
          %516 = vadd.xlane.f32.xlu0 %v401
          %v517 = vpop.xlane.xlu0 %516
          %518 = vadd.xlane.f32.xlu0 %v402
          %v519 = vpop.xlane.xlu0 %518
          %520 = vadd.xlane.f32.xlu0 %v403
          %v521 = vpop.xlane.xlu0 %520
          %522 = vadd.xlane.f32.xlu0 %v404
          %v523 = vpop.xlane.xlu0 %522
          %524 = vadd.xlane.f32.xlu0 %v405
          %v525 = vpop.xlane.xlu0 %524
          %526 = vadd.xlane.f32.xlu0 %v406
          %v527 = vpop.xlane.xlu0 %526
          %528 = vadd.xlane.f32.xlu0 %v407
          %v529 = vpop.xlane.xlu0 %528
          %530 = vadd.xlane.f32.xlu0 %v408
          %v531 = vpop.xlane.xlu0 %530
          %532 = vadd.xlane.f32.xlu0 %v409
          %v533 = vpop.xlane.xlu0 %532
          %534 = vadd.xlane.f32.xlu0 %v410
          %v535 = vpop.xlane.xlu0 %534
          %536 = vadd.xlane.f32.xlu0 %v411
          %v537 = vpop.xlane.xlu0 %536
          %538 = vadd.xlane.f32.xlu0 %v412
          %v539 = vpop.xlane.xlu0 %538
          %540 = vadd.xlane.f32.xlu0 %v413
          %v541 = vpop.xlane.xlu0 %540
          %542 = vadd.xlane.f32.xlu0 %v414
          %v543 = vpop.xlane.xlu0 %542
          %v544 = vrcp.pop 128.0
          %v545 = vmul.f32 128.0, %v544
          %v546 = vsub.f32 1.0, %v545
          %v547 = vmul.f32 %v544, %v546
          %v548 = vadd.f32 %v544, %v547
          %vm549 = vweird.f32 %v544
          %v550 = vsel %vm549, %v544, %v548
          %v551 = vmul.f32 %v417, %v550
          %v552 = vmul.f32 %v419, %v550
          %v553 = vmul.f32 %v421, %v550
          %v554 = vmul.f32 %v423, %v550
          %v555 = vmul.f32 %v425, %v550
          %v556 = vmul.f32 %v427, %v550
          %v557 = vmul.f32 %v429, %v550
          %v558 = vmul.f32 %v431, %v550
          %v559 = vmul.f32 %v433, %v550
          %v560 = vmul.f32 %v435, %v550
          %v561 = vmul.f32 %v437, %v550
          %v562 = vmul.f32 %v439, %v550
          %v563 = vmul.f32 %v441, %v550
          %v564 = vmul.f32 %v443, %v550
          %v565 = vmul.f32 %v445, %v550
          %v566 = vmul.f32 %v447, %v550
          %v567 = vmul.f32 %v449, %v550
          %v568 = vmul.f32 %v451, %v550
          %v569 = vmul.f32 %v453, %v550
          %v570 = vmul.f32 %v455, %v550
          %v571 = vmul.f32 %v457, %v550
          %v572 = vmul.f32 %v459, %v550
          %v573 = vmul.f32 %v461, %v550
          %v574 = vmul.f32 %v463, %v550
          %v575 = vmul.f32 %v465, %v550
          %v576 = vmul.f32 %v467, %v550
          %v577 = vmul.f32 %v469, %v550
          %v578 = vmul.f32 %v471, %v550
          %v579 = vmul.f32 %v473, %v550
          %v580 = vmul.f32 %v475, %v550
          %v581 = vmul.f32 %v477, %v550
          %v582 = vmul.f32 %v479, %v550
          %v583 = vmul.f32 %v481, %v550
          %v584 = vmul.f32 %v483, %v550
          %v585 = vmul.f32 %v485, %v550
          %v586 = vmul.f32 %v487, %v550
          %v587 = vmul.f32 %v489, %v550
          %v588 = vmul.f32 %v491, %v550
          %v589 = vmul.f32 %v493, %v550
          %v590 = vmul.f32 %v495, %v550
          %v591 = vmul.f32 %v497, %v550
          %v592 = vmul.f32 %v499, %v550
          %v593 = vmul.f32 %v501, %v550
          %v594 = vmul.f32 %v503, %v550
          %v595 = vmul.f32 %v505, %v550
          %v596 = vmul.f32 %v507, %v550
          %v597 = vmul.f32 %v509, %v550
          %v598 = vmul.f32 %v511, %v550
          %v599 = vmul.f32 %v513, %v550
          %v600 = vmul.f32 %v515, %v550
          %v601 = vmul.f32 %v517, %v550
          %v602 = vmul.f32 %v519, %v550
          %v603 = vmul.f32 %v521, %v550
          %v604 = vmul.f32 %v523, %v550
          %v605 = vmul.f32 %v525, %v550
          %v606 = vmul.f32 %v527, %v550
          %v607 = vmul.f32 %v529, %v550
          %v608 = vmul.f32 %v531, %v550
          %v609 = vmul.f32 %v533, %v550
          %v610 = vmul.f32 %v535, %v550
          %v611 = vmul.f32 %v537, %v550
          %v612 = vmul.f32 %v539, %v550
          %v613 = vmul.f32 %v541, %v550
          %v614 = vmul.f32 %v543, %v550
          %v615 = vmul.f32 %v351, %v351
          %v616 = vmul.f32 %v352, %v352
          %v617 = vmul.f32 %v353, %v353
          %v618 = vmul.f32 %v354, %v354
          %v619 = vmul.f32 %v355, %v355
          %v620 = vmul.f32 %v356, %v356
          %v621 = vmul.f32 %v357, %v357
          %v622 = vmul.f32 %v358, %v358
          %v623 = vmul.f32 %v359, %v359
          %v624 = vmul.f32 %v360, %v360
          %v625 = vmul.f32 %v361, %v361
          %v626 = vmul.f32 %v362, %v362
          %v627 = vmul.f32 %v363, %v363
          %v628 = vmul.f32 %v364, %v364
          %v629 = vmul.f32 %v365, %v365
          %v630 = vmul.f32 %v366, %v366
          %v631 = vmul.f32 %v367, %v367
          %v632 = vmul.f32 %v368, %v368
          %v633 = vmul.f32 %v369, %v369
          %v634 = vmul.f32 %v370, %v370
          %v635 = vmul.f32 %v371, %v371
          %v636 = vmul.f32 %v372, %v372
          %v637 = vmul.f32 %v373, %v373
          %v638 = vmul.f32 %v374, %v374
          %v639 = vmul.f32 %v375, %v375
          %v640 = vmul.f32 %v376, %v376
          %v641 = vmul.f32 %v377, %v377
          %v642 = vmul.f32 %v378, %v378
          %v643 = vmul.f32 %v379, %v379
          %v644 = vmul.f32 %v380, %v380
          %v645 = vmul.f32 %v381, %v381
          %v646 = vmul.f32 %v382, %v382
          %v647 = vmul.f32 %v383, %v383
          %v648 = vmul.f32 %v384, %v384
          %v649 = vmul.f32 %v385, %v385
          %v650 = vmul.f32 %v386, %v386
          %v651 = vmul.f32 %v387, %v387
          %v652 = vmul.f32 %v388, %v388
          %v653 = vmul.f32 %v389, %v389
          %v654 = vmul.f32 %v390, %v390
          %v655 = vmul.f32 %v391, %v391
          %v656 = vmul.f32 %v392, %v392
          %v657 = vmul.f32 %v393, %v393
          %v658 = vmul.f32 %v394, %v394
          %v659 = vmul.f32 %v395, %v395
          %v660 = vmul.f32 %v396, %v396
          %v661 = vmul.f32 %v397, %v397
          %v662 = vmul.f32 %v398, %v398
          %v663 = vmul.f32 %v399, %v399
          %v664 = vmul.f32 %v400, %v400
          %v665 = vmul.f32 %v401, %v401
          %v666 = vmul.f32 %v402, %v402
          %v667 = vmul.f32 %v403, %v403
          %v668 = vmul.f32 %v404, %v404
          %v669 = vmul.f32 %v405, %v405
          %v670 = vmul.f32 %v406, %v406
          %v671 = vmul.f32 %v407, %v407
          %v672 = vmul.f32 %v408, %v408
          %v673 = vmul.f32 %v409, %v409
          %v674 = vmul.f32 %v410, %v410
          %v675 = vmul.f32 %v411, %v411
          %v676 = vmul.f32 %v412, %v412
          %v677 = vmul.f32 %v413, %v413
          %v678 = vmul.f32 %v414, %v414
          %679 = vadd.xlane.f32.xlu0 %v615
          %v680 = vpop.xlane.xlu0 %679
          %681 = vadd.xlane.f32.xlu0 %v616
          %v682 = vpop.xlane.xlu0 %681
          %683 = vadd.xlane.f32.xlu0 %v617
          %v684 = vpop.xlane.xlu0 %683
          %685 = vadd.xlane.f32.xlu0 %v618
          %v686 = vpop.xlane.xlu0 %685
          %687 = vadd.xlane.f32.xlu0 %v619
          %v688 = vpop.xlane.xlu0 %687
          %689 = vadd.xlane.f32.xlu0 %v620
          %v690 = vpop.xlane.xlu0 %689
          %691 = vadd.xlane.f32.xlu0 %v621
          %v692 = vpop.xlane.xlu0 %691
          %693 = vadd.xlane.f32.xlu0 %v622
          %v694 = vpop.xlane.xlu0 %693
          %695 = vadd.xlane.f32.xlu0 %v623
          %v696 = vpop.xlane.xlu0 %695
          %697 = vadd.xlane.f32.xlu0 %v624
          %v698 = vpop.xlane.xlu0 %697
          %699 = vadd.xlane.f32.xlu0 %v625
          %v700 = vpop.xlane.xlu0 %699
          %701 = vadd.xlane.f32.xlu0 %v626
          %v702 = vpop.xlane.xlu0 %701
          %703 = vadd.xlane.f32.xlu0 %v627
          %v704 = vpop.xlane.xlu0 %703
          %705 = vadd.xlane.f32.xlu0 %v628
          %v706 = vpop.xlane.xlu0 %705
          %707 = vadd.xlane.f32.xlu0 %v629
          %v708 = vpop.xlane.xlu0 %707
          %709 = vadd.xlane.f32.xlu0 %v630
          %v710 = vpop.xlane.xlu0 %709
          %711 = vadd.xlane.f32.xlu0 %v631
          %v712 = vpop.xlane.xlu0 %711
          %713 = vadd.xlane.f32.xlu0 %v632
          %v714 = vpop.xlane.xlu0 %713
          %715 = vadd.xlane.f32.xlu0 %v633
          %v716 = vpop.xlane.xlu0 %715
          %717 = vadd.xlane.f32.xlu0 %v634
          %v718 = vpop.xlane.xlu0 %717
          %719 = vadd.xlane.f32.xlu0 %v635
          %v720 = vpop.xlane.xlu0 %719
          %721 = vadd.xlane.f32.xlu0 %v636
          %v722 = vpop.xlane.xlu0 %721
          %723 = vadd.xlane.f32.xlu0 %v637
          %v724 = vpop.xlane.xlu0 %723
          %725 = vadd.xlane.f32.xlu0 %v638
          %v726 = vpop.xlane.xlu0 %725
          %727 = vadd.xlane.f32.xlu0 %v639
          %v728 = vpop.xlane.xlu0 %727
          %729 = vadd.xlane.f32.xlu0 %v640
          %v730 = vpop.xlane.xlu0 %729
          %731 = vadd.xlane.f32.xlu0 %v641
          %v732 = vpop.xlane.xlu0 %731
          %733 = vadd.xlane.f32.xlu0 %v642
          %v734 = vpop.xlane.xlu0 %733
          %735 = vadd.xlane.f32.xlu0 %v643
          %v736 = vpop.xlane.xlu0 %735
          %737 = vadd.xlane.f32.xlu0 %v644
          %v738 = vpop.xlane.xlu0 %737
          %739 = vadd.xlane.f32.xlu0 %v645
          %v740 = vpop.xlane.xlu0 %739
          %741 = vadd.xlane.f32.xlu0 %v646
          %v742 = vpop.xlane.xlu0 %741
          %743 = vadd.xlane.f32.xlu0 %v647
          %v744 = vpop.xlane.xlu0 %743
          %745 = vadd.xlane.f32.xlu0 %v648
          %v746 = vpop.xlane.xlu0 %745
          %747 = vadd.xlane.f32.xlu0 %v649
          %v748 = vpop.xlane.xlu0 %747
          %749 = vadd.xlane.f32.xlu0 %v650
          %v750 = vpop.xlane.xlu0 %749
          %751 = vadd.xlane.f32.xlu0 %v651
          %v752 = vpop.xlane.xlu0 %751
          %753 = vadd.xlane.f32.xlu0 %v652
          %v754 = vpop.xlane.xlu0 %753
          %755 = vadd.xlane.f32.xlu0 %v653
          %v756 = vpop.xlane.xlu0 %755
          %757 = vadd.xlane.f32.xlu0 %v654
          %v758 = vpop.xlane.xlu0 %757
          %759 = vadd.xlane.f32.xlu0 %v655
          %v760 = vpop.xlane.xlu0 %759
          %761 = vadd.xlane.f32.xlu0 %v656
          %v762 = vpop.xlane.xlu0 %761
          %763 = vadd.xlane.f32.xlu0 %v657
          %v764 = vpop.xlane.xlu0 %763
          %765 = vadd.xlane.f32.xlu0 %v658
          %v766 = vpop.xlane.xlu0 %765
          %767 = vadd.xlane.f32.xlu0 %v659
          %v768 = vpop.xlane.xlu0 %767
          %769 = vadd.xlane.f32.xlu0 %v660
          %v770 = vpop.xlane.xlu0 %769
          %771 = vadd.xlane.f32.xlu0 %v661
          %v772 = vpop.xlane.xlu0 %771
          %773 = vadd.xlane.f32.xlu0 %v662
          %v774 = vpop.xlane.xlu0 %773
          %775 = vadd.xlane.f32.xlu0 %v663
          %v776 = vpop.xlane.xlu0 %775
          %777 = vadd.xlane.f32.xlu0 %v664
          %v778 = vpop.xlane.xlu0 %777
          %779 = vadd.xlane.f32.xlu0 %v665
          %v780 = vpop.xlane.xlu0 %779
          %781 = vadd.xlane.f32.xlu0 %v666
          %v782 = vpop.xlane.xlu0 %781
          %783 = vadd.xlane.f32.xlu0 %v667
          %v784 = vpop.xlane.xlu0 %783
          %785 = vadd.xlane.f32.xlu0 %v668
          %v786 = vpop.xlane.xlu0 %785
          %787 = vadd.xlane.f32.xlu0 %v669
          %v788 = vpop.xlane.xlu0 %787
          %789 = vadd.xlane.f32.xlu0 %v670
          %v790 = vpop.xlane.xlu0 %789
          %791 = vadd.xlane.f32.xlu0 %v671
          %v792 = vpop.xlane.xlu0 %791
          %793 = vadd.xlane.f32.xlu0 %v672
          %v794 = vpop.xlane.xlu0 %793
          %795 = vadd.xlane.f32.xlu0 %v673
          %v796 = vpop.xlane.xlu0 %795
          %797 = vadd.xlane.f32.xlu0 %v674
          %v798 = vpop.xlane.xlu0 %797
          %799 = vadd.xlane.f32.xlu0 %v675
          %v800 = vpop.xlane.xlu0 %799
          %801 = vadd.xlane.f32.xlu0 %v676
          %v802 = vpop.xlane.xlu0 %801
          %803 = vadd.xlane.f32.xlu0 %v677
          %v804 = vpop.xlane.xlu0 %803
          %805 = vadd.xlane.f32.xlu0 %v678
          %v806 = vpop.xlane.xlu0 %805
          %v807 = vmul.f32 %v680, %v550
          %v808 = vmul.f32 %v682, %v550
          %v809 = vmul.f32 %v684, %v550
          %v810 = vmul.f32 %v686, %v550
          %v811 = vmul.f32 %v688, %v550
          %v812 = vmul.f32 %v690, %v550
          %v813 = vmul.f32 %v692, %v550
          %v814 = vmul.f32 %v694, %v550
          %v815 = vmul.f32 %v696, %v550
          %v816 = vmul.f32 %v698, %v550
          %v817 = vmul.f32 %v700, %v550
          %v818 = vmul.f32 %v702, %v550
          %v819 = vmul.f32 %v704, %v550
          %v820 = vmul.f32 %v706, %v550
          %v821 = vmul.f32 %v708, %v550
          %v822 = vmul.f32 %v710, %v550
          %v823 = vmul.f32 %v712, %v550
          %v824 = vmul.f32 %v714, %v550
          %v825 = vmul.f32 %v716, %v550
          %v826 = vmul.f32 %v718, %v550
          %v827 = vmul.f32 %v720, %v550
          %v828 = vmul.f32 %v722, %v550
          %v829 = vmul.f32 %v724, %v550
          %v830 = vmul.f32 %v726, %v550
          %v831 = vmul.f32 %v728, %v550
          %v832 = vmul.f32 %v730, %v550
          %v833 = vmul.f32 %v732, %v550
          %v834 = vmul.f32 %v734, %v550
          %v835 = vmul.f32 %v736, %v550
          %v836 = vmul.f32 %v738, %v550
          %v837 = vmul.f32 %v740, %v550
          %v838 = vmul.f32 %v742, %v550
          %v839 = vmul.f32 %v744, %v550
          %v840 = vmul.f32 %v746, %v550
          %v841 = vmul.f32 %v748, %v550
          %v842 = vmul.f32 %v750, %v550
          %v843 = vmul.f32 %v752, %v550
          %v844 = vmul.f32 %v754, %v550
          %v845 = vmul.f32 %v756, %v550
          %v846 = vmul.f32 %v758, %v550
          %v847 = vmul.f32 %v760, %v550
          %v848 = vmul.f32 %v762, %v550
          %v849 = vmul.f32 %v764, %v550
          %v850 = vmul.f32 %v766, %v550
          %v851 = vmul.f32 %v768, %v550
          %v852 = vmul.f32 %v770, %v550
          %v853 = vmul.f32 %v772, %v550
          %v854 = vmul.f32 %v774, %v550
          %v855 = vmul.f32 %v776, %v550
          %v856 = vmul.f32 %v778, %v550
          %v857 = vmul.f32 %v780, %v550
          %v858 = vmul.f32 %v782, %v550
          %v859 = vmul.f32 %v784, %v550
          %v860 = vmul.f32 %v786, %v550
          %v861 = vmul.f32 %v788, %v550
          %v862 = vmul.f32 %v790, %v550
          %v863 = vmul.f32 %v792, %v550
          %v864 = vmul.f32 %v794, %v550
          %v865 = vmul.f32 %v796, %v550
          %v866 = vmul.f32 %v798, %v550
          %v867 = vmul.f32 %v800, %v550
          %v868 = vmul.f32 %v802, %v550
          %v869 = vmul.f32 %v804, %v550
          %v870 = vmul.f32 %v806, %v550
          %v871 = vmul.f32 %v551, %v551
          %v872 = vmul.f32 %v552, %v552
          %v873 = vmul.f32 %v553, %v553
          %v874 = vmul.f32 %v554, %v554
          %v875 = vmul.f32 %v555, %v555
          %v876 = vmul.f32 %v556, %v556
          %v877 = vmul.f32 %v557, %v557
          %v878 = vmul.f32 %v558, %v558
          %v879 = vmul.f32 %v559, %v559
          %v880 = vmul.f32 %v560, %v560
          %v881 = vmul.f32 %v561, %v561
          %v882 = vmul.f32 %v562, %v562
          %v883 = vmul.f32 %v563, %v563
          %v884 = vmul.f32 %v564, %v564
          %v885 = vmul.f32 %v565, %v565
          %v886 = vmul.f32 %v566, %v566
          %v887 = vmul.f32 %v567, %v567
          %v888 = vmul.f32 %v568, %v568
          %v889 = vmul.f32 %v569, %v569
          %v890 = vmul.f32 %v570, %v570
          %v891 = vmul.f32 %v571, %v571
          %v892 = vmul.f32 %v572, %v572
          %v893 = vmul.f32 %v573, %v573
          %v894 = vmul.f32 %v574, %v574
          %v895 = vmul.f32 %v575, %v575
          %v896 = vmul.f32 %v576, %v576
          %v897 = vmul.f32 %v577, %v577
          %v898 = vmul.f32 %v578, %v578
          %v899 = vmul.f32 %v579, %v579
          %v900 = vmul.f32 %v580, %v580
          %v901 = vmul.f32 %v581, %v581
          %v902 = vmul.f32 %v582, %v582
          %v903 = vmul.f32 %v583, %v583
          %v904 = vmul.f32 %v584, %v584
          %v905 = vmul.f32 %v585, %v585
          %v906 = vmul.f32 %v586, %v586
          %v907 = vmul.f32 %v587, %v587
          %v908 = vmul.f32 %v588, %v588
          %v909 = vmul.f32 %v589, %v589
          %v910 = vmul.f32 %v590, %v590
          %v911 = vmul.f32 %v591, %v591
          %v912 = vmul.f32 %v592, %v592
          %v913 = vmul.f32 %v593, %v593
          %v914 = vmul.f32 %v594, %v594
          %v915 = vmul.f32 %v595, %v595
          %v916 = vmul.f32 %v596, %v596
          %v917 = vmul.f32 %v597, %v597
          %v918 = vmul.f32 %v598, %v598
          %v919 = vmul.f32 %v599, %v599
          %v920 = vmul.f32 %v600, %v600
          %v921 = vmul.f32 %v601, %v601
          %v922 = vmul.f32 %v602, %v602
          %v923 = vmul.f32 %v603, %v603
          %v924 = vmul.f32 %v604, %v604
          %v925 = vmul.f32 %v605, %v605
          %v926 = vmul.f32 %v606, %v606
          %v927 = vmul.f32 %v607, %v607
          %v928 = vmul.f32 %v608, %v608
          %v929 = vmul.f32 %v609, %v609
          %v930 = vmul.f32 %v610, %v610
          %v931 = vmul.f32 %v611, %v611
          %v932 = vmul.f32 %v612, %v612
          %v933 = vmul.f32 %v613, %v613
          %v934 = vmul.f32 %v614, %v614
          %v935 = vsub.f32 %v807, %v871
          %v936 = vsub.f32 %v808, %v872
          %v937 = vsub.f32 %v809, %v873
          %v938 = vsub.f32 %v810, %v874
          %v939 = vsub.f32 %v811, %v875
          %v940 = vsub.f32 %v812, %v876
          %v941 = vsub.f32 %v813, %v877
          %v942 = vsub.f32 %v814, %v878
          %v943 = vsub.f32 %v815, %v879
          %v944 = vsub.f32 %v816, %v880
          %v945 = vsub.f32 %v817, %v881
          %v946 = vsub.f32 %v818, %v882
          %v947 = vsub.f32 %v819, %v883
          %v948 = vsub.f32 %v820, %v884
          %v949 = vsub.f32 %v821, %v885
          %v950 = vsub.f32 %v822, %v886
          %v951 = vsub.f32 %v823, %v887
          %v952 = vsub.f32 %v824, %v888
          %v953 = vsub.f32 %v825, %v889
          %v954 = vsub.f32 %v826, %v890
          %v955 = vsub.f32 %v827, %v891
          %v956 = vsub.f32 %v828, %v892
          %v957 = vsub.f32 %v829, %v893
          %v958 = vsub.f32 %v830, %v894
          %v959 = vsub.f32 %v831, %v895
          %v960 = vsub.f32 %v832, %v896
          %v961 = vsub.f32 %v833, %v897
          %v962 = vsub.f32 %v834, %v898
          %v963 = vsub.f32 %v835, %v899
          %v964 = vsub.f32 %v836, %v900
          %v965 = vsub.f32 %v837, %v901
          %v966 = vsub.f32 %v838, %v902
          %v967 = vsub.f32 %v839, %v903
          %v968 = vsub.f32 %v840, %v904
          %v969 = vsub.f32 %v841, %v905
          %v970 = vsub.f32 %v842, %v906
          %v971 = vsub.f32 %v843, %v907
          %v972 = vsub.f32 %v844, %v908
          %v973 = vsub.f32 %v845, %v909
          %v974 = vsub.f32 %v846, %v910
          %v975 = vsub.f32 %v847, %v911
          %v976 = vsub.f32 %v848, %v912
          %v977 = vsub.f32 %v849, %v913
          %v978 = vsub.f32 %v850, %v914
          %v979 = vsub.f32 %v851, %v915
          %v980 = vsub.f32 %v852, %v916
          %v981 = vsub.f32 %v853, %v917
          %v982 = vsub.f32 %v854, %v918
          %v983 = vsub.f32 %v855, %v919
          %v984 = vsub.f32 %v856, %v920
          %v985 = vsub.f32 %v857, %v921
          %v986 = vsub.f32 %v858, %v922
          %v987 = vsub.f32 %v859, %v923
          %v988 = vsub.f32 %v860, %v924
          %v989 = vsub.f32 %v861, %v925
          %v990 = vsub.f32 %v862, %v926
          %v991 = vsub.f32 %v863, %v927
          %v992 = vsub.f32 %v864, %v928
          %v993 = vsub.f32 %v865, %v929
          %v994 = vsub.f32 %v866, %v930
          %v995 = vsub.f32 %v867, %v931
          %v996 = vsub.f32 %v868, %v932
          %v997 = vsub.f32 %v869, %v933
          %v998 = vsub.f32 %v870, %v934
          %v999 = vsub.f32 %v351, %v551
          %v1000 = vsub.f32 %v352, %v552
          %v1001 = vsub.f32 %v353, %v553
          %v1002 = vsub.f32 %v354, %v554
          %v1003 = vsub.f32 %v355, %v555
          %v1004 = vsub.f32 %v356, %v556
          %v1005 = vsub.f32 %v357, %v557
          %v1006 = vsub.f32 %v358, %v558
          %v1007 = vsub.f32 %v359, %v559
          %v1008 = vsub.f32 %v360, %v560
          %v1009 = vsub.f32 %v361, %v561
          %v1010 = vsub.f32 %v362, %v562
          %v1011 = vsub.f32 %v363, %v563
          %v1012 = vsub.f32 %v364, %v564
          %v1013 = vsub.f32 %v365, %v565
          %v1014 = vsub.f32 %v366, %v566
          %v1015 = vsub.f32 %v367, %v567
          %v1016 = vsub.f32 %v368, %v568
          %v1017 = vsub.f32 %v369, %v569
          %v1018 = vsub.f32 %v370, %v570
          %v1019 = vsub.f32 %v371, %v571
          %v1020 = vsub.f32 %v372, %v572
          %v1021 = vsub.f32 %v373, %v573
          %v1022 = vsub.f32 %v374, %v574
          %v1023 = vsub.f32 %v375, %v575
          %v1024 = vsub.f32 %v376, %v576
          %v1025 = vsub.f32 %v377, %v577
          %v1026 = vsub.f32 %v378, %v578
          %v1027 = vsub.f32 %v379, %v579
          %v1028 = vsub.f32 %v380, %v580
          %v1029 = vsub.f32 %v381, %v581
          %v1030 = vsub.f32 %v382, %v582
          %v1031 = vsub.f32 %v383, %v583
          %v1032 = vsub.f32 %v384, %v584
          %v1033 = vsub.f32 %v385, %v585
          %v1034 = vsub.f32 %v386, %v586
          %v1035 = vsub.f32 %v387, %v587
          %v1036 = vsub.f32 %v388, %v588
          %v1037 = vsub.f32 %v389, %v589
          %v1038 = vsub.f32 %v390, %v590
          %v1039 = vsub.f32 %v391, %v591
          %v1040 = vsub.f32 %v392, %v592
          %v1041 = vsub.f32 %v393, %v593
          %v1042 = vsub.f32 %v394, %v594
          %v1043 = vsub.f32 %v395, %v595
          %v1044 = vsub.f32 %v396, %v596
          %v1045 = vsub.f32 %v397, %v597
          %v1046 = vsub.f32 %v398, %v598
          %v1047 = vsub.f32 %v399, %v599
          %v1048 = vsub.f32 %v400, %v600
          %v1049 = vsub.f32 %v401, %v601
          %v1050 = vsub.f32 %v402, %v602
          %v1051 = vsub.f32 %v403, %v603
          %v1052 = vsub.f32 %v404, %v604
          %v1053 = vsub.f32 %v405, %v605
          %v1054 = vsub.f32 %v406, %v606
          %v1055 = vsub.f32 %v407, %v607
          %v1056 = vsub.f32 %v408, %v608
          %v1057 = vsub.f32 %v409, %v609
          %v1058 = vsub.f32 %v410, %v610
          %v1059 = vsub.f32 %v411, %v611
          %v1060 = vsub.f32 %v412, %v612
          %v1061 = vsub.f32 %v413, %v613
          %v1062 = vsub.f32 %v414, %v614
          %v1063 = vadd.f32 %v935, 1e-05
          %v1064 = vadd.f32 %v936, 1e-05
          %v1065 = vadd.f32 %v937, 1e-05
          %v1066 = vadd.f32 %v938, 1e-05
          %v1067 = vadd.f32 %v939, 1e-05
          %v1068 = vadd.f32 %v940, 1e-05
          %v1069 = vadd.f32 %v941, 1e-05
          %v1070 = vadd.f32 %v942, 1e-05
          %v1071 = vadd.f32 %v943, 1e-05
          %v1072 = vadd.f32 %v944, 1e-05
          %v1073 = vadd.f32 %v945, 1e-05
          %v1074 = vadd.f32 %v946, 1e-05
          %v1075 = vadd.f32 %v947, 1e-05
          %v1076 = vadd.f32 %v948, 1e-05
          %v1077 = vadd.f32 %v949, 1e-05
          %v1078 = vadd.f32 %v950, 1e-05
          %v1079 = vadd.f32 %v951, 1e-05
          %v1080 = vadd.f32 %v952, 1e-05
          %v1081 = vadd.f32 %v953, 1e-05
          %v1082 = vadd.f32 %v954, 1e-05
          %v1083 = vadd.f32 %v955, 1e-05
          %v1084 = vadd.f32 %v956, 1e-05
          %v1085 = vadd.f32 %v957, 1e-05
          %v1086 = vadd.f32 %v958, 1e-05
          %v1087 = vadd.f32 %v959, 1e-05
          %v1088 = vadd.f32 %v960, 1e-05
          %v1089 = vadd.f32 %v961, 1e-05
          %v1090 = vadd.f32 %v962, 1e-05
          %v1091 = vadd.f32 %v963, 1e-05
          %v1092 = vadd.f32 %v964, 1e-05
          %v1093 = vadd.f32 %v965, 1e-05
          %v1094 = vadd.f32 %v966, 1e-05
          %v1095 = vadd.f32 %v967, 1e-05
          %v1096 = vadd.f32 %v968, 1e-05
          %v1097 = vadd.f32 %v969, 1e-05
          %v1098 = vadd.f32 %v970, 1e-05
          %v1099 = vadd.f32 %v971, 1e-05
          %v1100 = vadd.f32 %v972, 1e-05
          %v1101 = vadd.f32 %v973, 1e-05
          %v1102 = vadd.f32 %v974, 1e-05
          %v1103 = vadd.f32 %v975, 1e-05
          %v1104 = vadd.f32 %v976, 1e-05
          %v1105 = vadd.f32 %v977, 1e-05
          %v1106 = vadd.f32 %v978, 1e-05
          %v1107 = vadd.f32 %v979, 1e-05
          %v1108 = vadd.f32 %v980, 1e-05
          %v1109 = vadd.f32 %v981, 1e-05
          %v1110 = vadd.f32 %v982, 1e-05
          %v1111 = vadd.f32 %v983, 1e-05
          %v1112 = vadd.f32 %v984, 1e-05
          %v1113 = vadd.f32 %v985, 1e-05
          %v1114 = vadd.f32 %v986, 1e-05
          %v1115 = vadd.f32 %v987, 1e-05
          %v1116 = vadd.f32 %v988, 1e-05
          %v1117 = vadd.f32 %v989, 1e-05
          %v1118 = vadd.f32 %v990, 1e-05
          %v1119 = vadd.f32 %v991, 1e-05
          %v1120 = vadd.f32 %v992, 1e-05
          %v1121 = vadd.f32 %v993, 1e-05
          %v1122 = vadd.f32 %v994, 1e-05
          %v1123 = vadd.f32 %v995, 1e-05
          %v1124 = vadd.f32 %v996, 1e-05
          %v1125 = vadd.f32 %v997, 1e-05
          %v1126 = vadd.f32 %v998, 1e-05
          %v1127 = vrsqrt.pop %v1063
          %v1128 = vmul.f32 %v1127, %v1063
          %v1129 = vmul.f32 %v1128, %v1127
          %v1130 = vmul.f32 0.5, %v1129
          %v1131 = vsub.f32 1.5, %v1130
          %v1132 = vmul.f32 %v1127, %v1131
          %vm1133 = vweird.f32 %v1063
          %vm1134 = vweird.f32 %v1127
          %vm1135 = vmor %vm1133, %vm1134
          %v1136 = vsel %vm1135, %v1127, %v1132
          %v1137 = vrsqrt.pop %v1064
          %v1138 = vmul.f32 %v1137, %v1064
          %v1139 = vmul.f32 %v1138, %v1137
          %v1140 = vmul.f32 0.5, %v1139
          %v1141 = vsub.f32 1.5, %v1140
          %v1142 = vmul.f32 %v1137, %v1141
          %vm1143 = vweird.f32 %v1064
          %vm1144 = vweird.f32 %v1137
          %vm1145 = vmor %vm1143, %vm1144
          %v1146 = vsel %vm1145, %v1137, %v1142
          %v1147 = vrsqrt.pop %v1065
          %v1148 = vmul.f32 %v1147, %v1065
          %v1149 = vmul.f32 %v1148, %v1147
          %v1150 = vmul.f32 0.5, %v1149
          %v1151 = vsub.f32 1.5, %v1150
          %v1152 = vmul.f32 %v1147, %v1151
          %vm1153 = vweird.f32 %v1065
          %vm1154 = vweird.f32 %v1147
          %vm1155 = vmor %vm1153, %vm1154
          %v1156 = vsel %vm1155, %v1147, %v1152
          %v1157 = vrsqrt.pop %v1066
          %v1158 = vmul.f32 %v1157, %v1066
          %v1159 = vmul.f32 %v1158, %v1157
          %v1160 = vmul.f32 0.5, %v1159
          %v1161 = vsub.f32 1.5, %v1160
          %v1162 = vmul.f32 %v1157, %v1161
          %vm1163 = vweird.f32 %v1066
          %vm1164 = vweird.f32 %v1157
          %vm1165 = vmor %vm1163, %vm1164
          %v1166 = vsel %vm1165, %v1157, %v1162
          %v1167 = vrsqrt.pop %v1067
          %v1168 = vmul.f32 %v1167, %v1067
          %v1169 = vmul.f32 %v1168, %v1167
          %v1170 = vmul.f32 0.5, %v1169
          %v1171 = vsub.f32 1.5, %v1170
          %v1172 = vmul.f32 %v1167, %v1171
          %vm1173 = vweird.f32 %v1067
          %vm1174 = vweird.f32 %v1167
          %vm1175 = vmor %vm1173, %vm1174
          %v1176 = vsel %vm1175, %v1167, %v1172
          %v1177 = vrsqrt.pop %v1068
          %v1178 = vmul.f32 %v1177, %v1068
          %v1179 = vmul.f32 %v1178, %v1177
          %v1180 = vmul.f32 0.5, %v1179
          %v1181 = vsub.f32 1.5, %v1180
          %v1182 = vmul.f32 %v1177, %v1181
          %vm1183 = vweird.f32 %v1068
          %vm1184 = vweird.f32 %v1177
          %vm1185 = vmor %vm1183, %vm1184
          %v1186 = vsel %vm1185, %v1177, %v1182
          %v1187 = vrsqrt.pop %v1069
          %v1188 = vmul.f32 %v1187, %v1069
          %v1189 = vmul.f32 %v1188, %v1187
          %v1190 = vmul.f32 0.5, %v1189
          %v1191 = vsub.f32 1.5, %v1190
          %v1192 = vmul.f32 %v1187, %v1191
          %vm1193 = vweird.f32 %v1069
          %vm1194 = vweird.f32 %v1187
          %vm1195 = vmor %vm1193, %vm1194
          %v1196 = vsel %vm1195, %v1187, %v1192
          %v1197 = vrsqrt.pop %v1070
          %v1198 = vmul.f32 %v1197, %v1070
          %v1199 = vmul.f32 %v1198, %v1197
          %v1200 = vmul.f32 0.5, %v1199
          %v1201 = vsub.f32 1.5, %v1200
          %v1202 = vmul.f32 %v1197, %v1201
          %vm1203 = vweird.f32 %v1070
          %vm1204 = vweird.f32 %v1197
          %vm1205 = vmor %vm1203, %vm1204
          %v1206 = vsel %vm1205, %v1197, %v1202
          %v1207 = vrsqrt.pop %v1071
          %v1208 = vmul.f32 %v1207, %v1071
          %v1209 = vmul.f32 %v1208, %v1207
          %v1210 = vmul.f32 0.5, %v1209
          %v1211 = vsub.f32 1.5, %v1210
          %v1212 = vmul.f32 %v1207, %v1211
          %vm1213 = vweird.f32 %v1071
          %vm1214 = vweird.f32 %v1207
          %vm1215 = vmor %vm1213, %vm1214
          %v1216 = vsel %vm1215, %v1207, %v1212
          %v1217 = vrsqrt.pop %v1072
          %v1218 = vmul.f32 %v1217, %v1072
          %v1219 = vmul.f32 %v1218, %v1217
          %v1220 = vmul.f32 0.5, %v1219
          %v1221 = vsub.f32 1.5, %v1220
          %v1222 = vmul.f32 %v1217, %v1221
          %vm1223 = vweird.f32 %v1072
          %vm1224 = vweird.f32 %v1217
          %vm1225 = vmor %vm1223, %vm1224
          %v1226 = vsel %vm1225, %v1217, %v1222
          %v1227 = vrsqrt.pop %v1073
          %v1228 = vmul.f32 %v1227, %v1073
          %v1229 = vmul.f32 %v1228, %v1227
          %v1230 = vmul.f32 0.5, %v1229
          %v1231 = vsub.f32 1.5, %v1230
          %v1232 = vmul.f32 %v1227, %v1231
          %vm1233 = vweird.f32 %v1073
          %vm1234 = vweird.f32 %v1227
          %vm1235 = vmor %vm1233, %vm1234
          %v1236 = vsel %vm1235, %v1227, %v1232
          %v1237 = vrsqrt.pop %v1074
          %v1238 = vmul.f32 %v1237, %v1074
          %v1239 = vmul.f32 %v1238, %v1237
          %v1240 = vmul.f32 0.5, %v1239
          %v1241 = vsub.f32 1.5, %v1240
          %v1242 = vmul.f32 %v1237, %v1241
          %vm1243 = vweird.f32 %v1074
          %vm1244 = vweird.f32 %v1237
          %vm1245 = vmor %vm1243, %vm1244
          %v1246 = vsel %vm1245, %v1237, %v1242
          %v1247 = vrsqrt.pop %v1075
          %v1248 = vmul.f32 %v1247, %v1075
          %v1249 = vmul.f32 %v1248, %v1247
          %v1250 = vmul.f32 0.5, %v1249
          %v1251 = vsub.f32 1.5, %v1250
          %v1252 = vmul.f32 %v1247, %v1251
          %vm1253 = vweird.f32 %v1075
          %vm1254 = vweird.f32 %v1247
          %vm1255 = vmor %vm1253, %vm1254
          %v1256 = vsel %vm1255, %v1247, %v1252
          %v1257 = vrsqrt.pop %v1076
          %v1258 = vmul.f32 %v1257, %v1076
          %v1259 = vmul.f32 %v1258, %v1257
          %v1260 = vmul.f32 0.5, %v1259
          %v1261 = vsub.f32 1.5, %v1260
          %v1262 = vmul.f32 %v1257, %v1261
          %vm1263 = vweird.f32 %v1076
          %vm1264 = vweird.f32 %v1257
          %vm1265 = vmor %vm1263, %vm1264
          %v1266 = vsel %vm1265, %v1257, %v1262
          %v1267 = vrsqrt.pop %v1077
          %v1268 = vmul.f32 %v1267, %v1077
          %v1269 = vmul.f32 %v1268, %v1267
          %v1270 = vmul.f32 0.5, %v1269
          %v1271 = vsub.f32 1.5, %v1270
          %v1272 = vmul.f32 %v1267, %v1271
          %vm1273 = vweird.f32 %v1077
          %vm1274 = vweird.f32 %v1267
          %vm1275 = vmor %vm1273, %vm1274
          %v1276 = vsel %vm1275, %v1267, %v1272
          %v1277 = vrsqrt.pop %v1078
          %v1278 = vmul.f32 %v1277, %v1078
          %v1279 = vmul.f32 %v1278, %v1277
          %v1280 = vmul.f32 0.5, %v1279
          %v1281 = vsub.f32 1.5, %v1280
          %v1282 = vmul.f32 %v1277, %v1281
          %vm1283 = vweird.f32 %v1078
          %vm1284 = vweird.f32 %v1277
          %vm1285 = vmor %vm1283, %vm1284
          %v1286 = vsel %vm1285, %v1277, %v1282
          %v1287 = vrsqrt.pop %v1079
          %v1288 = vmul.f32 %v1287, %v1079
          %v1289 = vmul.f32 %v1288, %v1287
          %v1290 = vmul.f32 0.5, %v1289
          %v1291 = vsub.f32 1.5, %v1290
          %v1292 = vmul.f32 %v1287, %v1291
          %vm1293 = vweird.f32 %v1079
          %vm1294 = vweird.f32 %v1287
          %vm1295 = vmor %vm1293, %vm1294
          %v1296 = vsel %vm1295, %v1287, %v1292
          %v1297 = vrsqrt.pop %v1080
          %v1298 = vmul.f32 %v1297, %v1080
          %v1299 = vmul.f32 %v1298, %v1297
          %v1300 = vmul.f32 0.5, %v1299
          %v1301 = vsub.f32 1.5, %v1300
          %v1302 = vmul.f32 %v1297, %v1301
          %vm1303 = vweird.f32 %v1080
          %vm1304 = vweird.f32 %v1297
          %vm1305 = vmor %vm1303, %vm1304
          %v1306 = vsel %vm1305, %v1297, %v1302
          %v1307 = vrsqrt.pop %v1081
          %v1308 = vmul.f32 %v1307, %v1081
          %v1309 = vmul.f32 %v1308, %v1307
          %v1310 = vmul.f32 0.5, %v1309
          %v1311 = vsub.f32 1.5, %v1310
          %v1312 = vmul.f32 %v1307, %v1311
          %vm1313 = vweird.f32 %v1081
          %vm1314 = vweird.f32 %v1307
          %vm1315 = vmor %vm1313, %vm1314
          %v1316 = vsel %vm1315, %v1307, %v1312
          %v1317 = vrsqrt.pop %v1082
          %v1318 = vmul.f32 %v1317, %v1082
          %v1319 = vmul.f32 %v1318, %v1317
          %v1320 = vmul.f32 0.5, %v1319
          %v1321 = vsub.f32 1.5, %v1320
          %v1322 = vmul.f32 %v1317, %v1321
          %vm1323 = vweird.f32 %v1082
          %vm1324 = vweird.f32 %v1317
          %vm1325 = vmor %vm1323, %vm1324
          %v1326 = vsel %vm1325, %v1317, %v1322
          %v1327 = vrsqrt.pop %v1083
          %v1328 = vmul.f32 %v1327, %v1083
          %v1329 = vmul.f32 %v1328, %v1327
          %v1330 = vmul.f32 0.5, %v1329
          %v1331 = vsub.f32 1.5, %v1330
          %v1332 = vmul.f32 %v1327, %v1331
          %vm1333 = vweird.f32 %v1083
          %vm1334 = vweird.f32 %v1327
          %vm1335 = vmor %vm1333, %vm1334
          %v1336 = vsel %vm1335, %v1327, %v1332
          %v1337 = vrsqrt.pop %v1084
          %v1338 = vmul.f32 %v1337, %v1084
          %v1339 = vmul.f32 %v1338, %v1337
          %v1340 = vmul.f32 0.5, %v1339
          %v1341 = vsub.f32 1.5, %v1340
          %v1342 = vmul.f32 %v1337, %v1341
          %vm1343 = vweird.f32 %v1084
          %vm1344 = vweird.f32 %v1337
          %vm1345 = vmor %vm1343, %vm1344
          %v1346 = vsel %vm1345, %v1337, %v1342
          %v1347 = vrsqrt.pop %v1085
          %v1348 = vmul.f32 %v1347, %v1085
          %v1349 = vmul.f32 %v1348, %v1347
          %v1350 = vmul.f32 0.5, %v1349
          %v1351 = vsub.f32 1.5, %v1350
          %v1352 = vmul.f32 %v1347, %v1351
          %vm1353 = vweird.f32 %v1085
          %vm1354 = vweird.f32 %v1347
          %vm1355 = vmor %vm1353, %vm1354
          %v1356 = vsel %vm1355, %v1347, %v1352
          %v1357 = vrsqrt.pop %v1086
          %v1358 = vmul.f32 %v1357, %v1086
          %v1359 = vmul.f32 %v1358, %v1357
          %v1360 = vmul.f32 0.5, %v1359
          %v1361 = vsub.f32 1.5, %v1360
          %v1362 = vmul.f32 %v1357, %v1361
          %vm1363 = vweird.f32 %v1086
          %vm1364 = vweird.f32 %v1357
          %vm1365 = vmor %vm1363, %vm1364
          %v1366 = vsel %vm1365, %v1357, %v1362
          %v1367 = vrsqrt.pop %v1087
          %v1368 = vmul.f32 %v1367, %v1087
          %v1369 = vmul.f32 %v1368, %v1367
          %v1370 = vmul.f32 0.5, %v1369
          %v1371 = vsub.f32 1.5, %v1370
          %v1372 = vmul.f32 %v1367, %v1371
          %vm1373 = vweird.f32 %v1087
          %vm1374 = vweird.f32 %v1367
          %vm1375 = vmor %vm1373, %vm1374
          %v1376 = vsel %vm1375, %v1367, %v1372
          %v1377 = vrsqrt.pop %v1088
          %v1378 = vmul.f32 %v1377, %v1088
          %v1379 = vmul.f32 %v1378, %v1377
          %v1380 = vmul.f32 0.5, %v1379
          %v1381 = vsub.f32 1.5, %v1380
          %v1382 = vmul.f32 %v1377, %v1381
          %vm1383 = vweird.f32 %v1088
          %vm1384 = vweird.f32 %v1377
          %vm1385 = vmor %vm1383, %vm1384
          %v1386 = vsel %vm1385, %v1377, %v1382
          %v1387 = vrsqrt.pop %v1089
          %v1388 = vmul.f32 %v1387, %v1089
          %v1389 = vmul.f32 %v1388, %v1387
          %v1390 = vmul.f32 0.5, %v1389
          %v1391 = vsub.f32 1.5, %v1390
          %v1392 = vmul.f32 %v1387, %v1391
          %vm1393 = vweird.f32 %v1089
          %vm1394 = vweird.f32 %v1387
          %vm1395 = vmor %vm1393, %vm1394
          %v1396 = vsel %vm1395, %v1387, %v1392
          %v1397 = vrsqrt.pop %v1090
          %v1398 = vmul.f32 %v1397, %v1090
          %v1399 = vmul.f32 %v1398, %v1397
          %v1400 = vmul.f32 0.5, %v1399
          %v1401 = vsub.f32 1.5, %v1400
          %v1402 = vmul.f32 %v1397, %v1401
          %vm1403 = vweird.f32 %v1090
          %vm1404 = vweird.f32 %v1397
          %vm1405 = vmor %vm1403, %vm1404
          %v1406 = vsel %vm1405, %v1397, %v1402
          %v1407 = vrsqrt.pop %v1091
          %v1408 = vmul.f32 %v1407, %v1091
          %v1409 = vmul.f32 %v1408, %v1407
          %v1410 = vmul.f32 0.5, %v1409
          %v1411 = vsub.f32 1.5, %v1410
          %v1412 = vmul.f32 %v1407, %v1411
          %vm1413 = vweird.f32 %v1091
          %vm1414 = vweird.f32 %v1407
          %vm1415 = vmor %vm1413, %vm1414
          %v1416 = vsel %vm1415, %v1407, %v1412
          %v1417 = vrsqrt.pop %v1092
          %v1418 = vmul.f32 %v1417, %v1092
          %v1419 = vmul.f32 %v1418, %v1417
          %v1420 = vmul.f32 0.5, %v1419
          %v1421 = vsub.f32 1.5, %v1420
          %v1422 = vmul.f32 %v1417, %v1421
          %vm1423 = vweird.f32 %v1092
          %vm1424 = vweird.f32 %v1417
          %vm1425 = vmor %vm1423, %vm1424
          %v1426 = vsel %vm1425, %v1417, %v1422
          %v1427 = vrsqrt.pop %v1093
          %v1428 = vmul.f32 %v1427, %v1093
          %v1429 = vmul.f32 %v1428, %v1427
          %v1430 = vmul.f32 0.5, %v1429
          %v1431 = vsub.f32 1.5, %v1430
          %v1432 = vmul.f32 %v1427, %v1431
          %vm1433 = vweird.f32 %v1093
          %vm1434 = vweird.f32 %v1427
          %vm1435 = vmor %vm1433, %vm1434
          %v1436 = vsel %vm1435, %v1427, %v1432
          %v1437 = vrsqrt.pop %v1094
          %v1438 = vmul.f32 %v1437, %v1094
          %v1439 = vmul.f32 %v1438, %v1437
          %v1440 = vmul.f32 0.5, %v1439
          %v1441 = vsub.f32 1.5, %v1440
          %v1442 = vmul.f32 %v1437, %v1441
          %vm1443 = vweird.f32 %v1094
          %vm1444 = vweird.f32 %v1437
          %vm1445 = vmor %vm1443, %vm1444
          %v1446 = vsel %vm1445, %v1437, %v1442
          %v1447 = vrsqrt.pop %v1095
          %v1448 = vmul.f32 %v1447, %v1095
          %v1449 = vmul.f32 %v1448, %v1447
          %v1450 = vmul.f32 0.5, %v1449
          %v1451 = vsub.f32 1.5, %v1450
          %v1452 = vmul.f32 %v1447, %v1451
          %vm1453 = vweird.f32 %v1095
          %vm1454 = vweird.f32 %v1447
          %vm1455 = vmor %vm1453, %vm1454
          %v1456 = vsel %vm1455, %v1447, %v1452
          %v1457 = vrsqrt.pop %v1096
          %v1458 = vmul.f32 %v1457, %v1096
          %v1459 = vmul.f32 %v1458, %v1457
          %v1460 = vmul.f32 0.5, %v1459
          %v1461 = vsub.f32 1.5, %v1460
          %v1462 = vmul.f32 %v1457, %v1461
          %vm1463 = vweird.f32 %v1096
          %vm1464 = vweird.f32 %v1457
          %vm1465 = vmor %vm1463, %vm1464
          %v1466 = vsel %vm1465, %v1457, %v1462
          %v1467 = vrsqrt.pop %v1097
          %v1468 = vmul.f32 %v1467, %v1097
          %v1469 = vmul.f32 %v1468, %v1467
          %v1470 = vmul.f32 0.5, %v1469
          %v1471 = vsub.f32 1.5, %v1470
          %v1472 = vmul.f32 %v1467, %v1471
          %vm1473 = vweird.f32 %v1097
          %vm1474 = vweird.f32 %v1467
          %vm1475 = vmor %vm1473, %vm1474
          %v1476 = vsel %vm1475, %v1467, %v1472
          %v1477 = vrsqrt.pop %v1098
          %v1478 = vmul.f32 %v1477, %v1098
          %v1479 = vmul.f32 %v1478, %v1477
          %v1480 = vmul.f32 0.5, %v1479
          %v1481 = vsub.f32 1.5, %v1480
          %v1482 = vmul.f32 %v1477, %v1481
          %vm1483 = vweird.f32 %v1098
          %vm1484 = vweird.f32 %v1477
          %vm1485 = vmor %vm1483, %vm1484
          %v1486 = vsel %vm1485, %v1477, %v1482
          %v1487 = vrsqrt.pop %v1099
          %v1488 = vmul.f32 %v1487, %v1099
          %v1489 = vmul.f32 %v1488, %v1487
          %v1490 = vmul.f32 0.5, %v1489
          %v1491 = vsub.f32 1.5, %v1490
          %v1492 = vmul.f32 %v1487, %v1491
          %vm1493 = vweird.f32 %v1099
          %vm1494 = vweird.f32 %v1487
          %vm1495 = vmor %vm1493, %vm1494
          %v1496 = vsel %vm1495, %v1487, %v1492
          %v1497 = vrsqrt.pop %v1100
          %v1498 = vmul.f32 %v1497, %v1100
          %v1499 = vmul.f32 %v1498, %v1497
          %v1500 = vmul.f32 0.5, %v1499
          %v1501 = vsub.f32 1.5, %v1500
          %v1502 = vmul.f32 %v1497, %v1501
          %vm1503 = vweird.f32 %v1100
          %vm1504 = vweird.f32 %v1497
          %vm1505 = vmor %vm1503, %vm1504
          %v1506 = vsel %vm1505, %v1497, %v1502
          %v1507 = vrsqrt.pop %v1101
          %v1508 = vmul.f32 %v1507, %v1101
          %v1509 = vmul.f32 %v1508, %v1507
          %v1510 = vmul.f32 0.5, %v1509
          %v1511 = vsub.f32 1.5, %v1510
          %v1512 = vmul.f32 %v1507, %v1511
          %vm1513 = vweird.f32 %v1101
          %vm1514 = vweird.f32 %v1507
          %vm1515 = vmor %vm1513, %vm1514
          %v1516 = vsel %vm1515, %v1507, %v1512
          %v1517 = vrsqrt.pop %v1102
          %v1518 = vmul.f32 %v1517, %v1102
          %v1519 = vmul.f32 %v1518, %v1517
          %v1520 = vmul.f32 0.5, %v1519
          %v1521 = vsub.f32 1.5, %v1520
          %v1522 = vmul.f32 %v1517, %v1521
          %vm1523 = vweird.f32 %v1102
          %vm1524 = vweird.f32 %v1517
          %vm1525 = vmor %vm1523, %vm1524
          %v1526 = vsel %vm1525, %v1517, %v1522
          %v1527 = vrsqrt.pop %v1103
          %v1528 = vmul.f32 %v1527, %v1103
          %v1529 = vmul.f32 %v1528, %v1527
          %v1530 = vmul.f32 0.5, %v1529
          %v1531 = vsub.f32 1.5, %v1530
          %v1532 = vmul.f32 %v1527, %v1531
          %vm1533 = vweird.f32 %v1103
          %vm1534 = vweird.f32 %v1527
          %vm1535 = vmor %vm1533, %vm1534
          %v1536 = vsel %vm1535, %v1527, %v1532
          %v1537 = vrsqrt.pop %v1104
          %v1538 = vmul.f32 %v1537, %v1104
          %v1539 = vmul.f32 %v1538, %v1537
          %v1540 = vmul.f32 0.5, %v1539
          %v1541 = vsub.f32 1.5, %v1540
          %v1542 = vmul.f32 %v1537, %v1541
          %vm1543 = vweird.f32 %v1104
          %vm1544 = vweird.f32 %v1537
          %vm1545 = vmor %vm1543, %vm1544
          %v1546 = vsel %vm1545, %v1537, %v1542
          %v1547 = vrsqrt.pop %v1105
          %v1548 = vmul.f32 %v1547, %v1105
          %v1549 = vmul.f32 %v1548, %v1547
          %v1550 = vmul.f32 0.5, %v1549
          %v1551 = vsub.f32 1.5, %v1550
          %v1552 = vmul.f32 %v1547, %v1551
          %vm1553 = vweird.f32 %v1105
          %vm1554 = vweird.f32 %v1547
          %vm1555 = vmor %vm1553, %vm1554
          %v1556 = vsel %vm1555, %v1547, %v1552
          %v1557 = vrsqrt.pop %v1106
          %v1558 = vmul.f32 %v1557, %v1106
          %v1559 = vmul.f32 %v1558, %v1557
          %v1560 = vmul.f32 0.5, %v1559
          %v1561 = vsub.f32 1.5, %v1560
          %v1562 = vmul.f32 %v1557, %v1561
          %vm1563 = vweird.f32 %v1106
          %vm1564 = vweird.f32 %v1557
          %vm1565 = vmor %vm1563, %vm1564
          %v1566 = vsel %vm1565, %v1557, %v1562
          %v1567 = vrsqrt.pop %v1107
          %v1568 = vmul.f32 %v1567, %v1107
          %v1569 = vmul.f32 %v1568, %v1567
          %v1570 = vmul.f32 0.5, %v1569
          %v1571 = vsub.f32 1.5, %v1570
          %v1572 = vmul.f32 %v1567, %v1571
          %vm1573 = vweird.f32 %v1107
          %vm1574 = vweird.f32 %v1567
          %vm1575 = vmor %vm1573, %vm1574
          %v1576 = vsel %vm1575, %v1567, %v1572
          %v1577 = vrsqrt.pop %v1108
          %v1578 = vmul.f32 %v1577, %v1108
          %v1579 = vmul.f32 %v1578, %v1577
          %v1580 = vmul.f32 0.5, %v1579
          %v1581 = vsub.f32 1.5, %v1580
          %v1582 = vmul.f32 %v1577, %v1581
          %vm1583 = vweird.f32 %v1108
          %vm1584 = vweird.f32 %v1577
          %vm1585 = vmor %vm1583, %vm1584
          %v1586 = vsel %vm1585, %v1577, %v1582
          %v1587 = vrsqrt.pop %v1109
          %v1588 = vmul.f32 %v1587, %v1109
          %v1589 = vmul.f32 %v1588, %v1587
          %v1590 = vmul.f32 0.5, %v1589
          %v1591 = vsub.f32 1.5, %v1590
          %v1592 = vmul.f32 %v1587, %v1591
          %vm1593 = vweird.f32 %v1109
          %vm1594 = vweird.f32 %v1587
          %vm1595 = vmor %vm1593, %vm1594
          %v1596 = vsel %vm1595, %v1587, %v1592
          %v1597 = vrsqrt.pop %v1110
          %v1598 = vmul.f32 %v1597, %v1110
          %v1599 = vmul.f32 %v1598, %v1597
          %v1600 = vmul.f32 0.5, %v1599
          %v1601 = vsub.f32 1.5, %v1600
          %v1602 = vmul.f32 %v1597, %v1601
          %vm1603 = vweird.f32 %v1110
          %vm1604 = vweird.f32 %v1597
          %vm1605 = vmor %vm1603, %vm1604
          %v1606 = vsel %vm1605, %v1597, %v1602
          %v1607 = vrsqrt.pop %v1111
          %v1608 = vmul.f32 %v1607, %v1111
          %v1609 = vmul.f32 %v1608, %v1607
          %v1610 = vmul.f32 0.5, %v1609
          %v1611 = vsub.f32 1.5, %v1610
          %v1612 = vmul.f32 %v1607, %v1611
          %vm1613 = vweird.f32 %v1111
          %vm1614 = vweird.f32 %v1607
          %vm1615 = vmor %vm1613, %vm1614
          %v1616 = vsel %vm1615, %v1607, %v1612
          %v1617 = vrsqrt.pop %v1112
          %v1618 = vmul.f32 %v1617, %v1112
          %v1619 = vmul.f32 %v1618, %v1617
          %v1620 = vmul.f32 0.5, %v1619
          %v1621 = vsub.f32 1.5, %v1620
          %v1622 = vmul.f32 %v1617, %v1621
          %vm1623 = vweird.f32 %v1112
          %vm1624 = vweird.f32 %v1617
          %vm1625 = vmor %vm1623, %vm1624
          %v1626 = vsel %vm1625, %v1617, %v1622
          %v1627 = vrsqrt.pop %v1113
          %v1628 = vmul.f32 %v1627, %v1113
          %v1629 = vmul.f32 %v1628, %v1627
          %v1630 = vmul.f32 0.5, %v1629
          %v1631 = vsub.f32 1.5, %v1630
          %v1632 = vmul.f32 %v1627, %v1631
          %vm1633 = vweird.f32 %v1113
          %vm1634 = vweird.f32 %v1627
          %vm1635 = vmor %vm1633, %vm1634
          %v1636 = vsel %vm1635, %v1627, %v1632
          %v1637 = vrsqrt.pop %v1114
          %v1638 = vmul.f32 %v1637, %v1114
          %v1639 = vmul.f32 %v1638, %v1637
          %v1640 = vmul.f32 0.5, %v1639
          %v1641 = vsub.f32 1.5, %v1640
          %v1642 = vmul.f32 %v1637, %v1641
          %vm1643 = vweird.f32 %v1114
          %vm1644 = vweird.f32 %v1637
          %vm1645 = vmor %vm1643, %vm1644
          %v1646 = vsel %vm1645, %v1637, %v1642
          %v1647 = vrsqrt.pop %v1115
          %v1648 = vmul.f32 %v1647, %v1115
          %v1649 = vmul.f32 %v1648, %v1647
          %v1650 = vmul.f32 0.5, %v1649
          %v1651 = vsub.f32 1.5, %v1650
          %v1652 = vmul.f32 %v1647, %v1651
          %vm1653 = vweird.f32 %v1115
          %vm1654 = vweird.f32 %v1647
          %vm1655 = vmor %vm1653, %vm1654
          %v1656 = vsel %vm1655, %v1647, %v1652
          %v1657 = vrsqrt.pop %v1116
          %v1658 = vmul.f32 %v1657, %v1116
          %v1659 = vmul.f32 %v1658, %v1657
          %v1660 = vmul.f32 0.5, %v1659
          %v1661 = vsub.f32 1.5, %v1660
          %v1662 = vmul.f32 %v1657, %v1661
          %vm1663 = vweird.f32 %v1116
          %vm1664 = vweird.f32 %v1657
          %vm1665 = vmor %vm1663, %vm1664
          %v1666 = vsel %vm1665, %v1657, %v1662
          %v1667 = vrsqrt.pop %v1117
          %v1668 = vmul.f32 %v1667, %v1117
          %v1669 = vmul.f32 %v1668, %v1667
          %v1670 = vmul.f32 0.5, %v1669
          %v1671 = vsub.f32 1.5, %v1670
          %v1672 = vmul.f32 %v1667, %v1671
          %vm1673 = vweird.f32 %v1117
          %vm1674 = vweird.f32 %v1667
          %vm1675 = vmor %vm1673, %vm1674
          %v1676 = vsel %vm1675, %v1667, %v1672
          %v1677 = vrsqrt.pop %v1118
          %v1678 = vmul.f32 %v1677, %v1118
          %v1679 = vmul.f32 %v1678, %v1677
          %v1680 = vmul.f32 0.5, %v1679
          %v1681 = vsub.f32 1.5, %v1680
          %v1682 = vmul.f32 %v1677, %v1681
          %vm1683 = vweird.f32 %v1118
          %vm1684 = vweird.f32 %v1677
          %vm1685 = vmor %vm1683, %vm1684
          %v1686 = vsel %vm1685, %v1677, %v1682
          %v1687 = vrsqrt.pop %v1119
          %v1688 = vmul.f32 %v1687, %v1119
          %v1689 = vmul.f32 %v1688, %v1687
          %v1690 = vmul.f32 0.5, %v1689
          %v1691 = vsub.f32 1.5, %v1690
          %v1692 = vmul.f32 %v1687, %v1691
          %vm1693 = vweird.f32 %v1119
          %vm1694 = vweird.f32 %v1687
          %vm1695 = vmor %vm1693, %vm1694
          %v1696 = vsel %vm1695, %v1687, %v1692
          %v1697 = vrsqrt.pop %v1120
          %v1698 = vmul.f32 %v1697, %v1120
          %v1699 = vmul.f32 %v1698, %v1697
          %v1700 = vmul.f32 0.5, %v1699
          %v1701 = vsub.f32 1.5, %v1700
          %v1702 = vmul.f32 %v1697, %v1701
          %vm1703 = vweird.f32 %v1120
          %vm1704 = vweird.f32 %v1697
          %vm1705 = vmor %vm1703, %vm1704
          %v1706 = vsel %vm1705, %v1697, %v1702
          %v1707 = vrsqrt.pop %v1121
          %v1708 = vmul.f32 %v1707, %v1121
          %v1709 = vmul.f32 %v1708, %v1707
          %v1710 = vmul.f32 0.5, %v1709
          %v1711 = vsub.f32 1.5, %v1710
          %v1712 = vmul.f32 %v1707, %v1711
          %vm1713 = vweird.f32 %v1121
          %vm1714 = vweird.f32 %v1707
          %vm1715 = vmor %vm1713, %vm1714
          %v1716 = vsel %vm1715, %v1707, %v1712
          %v1717 = vrsqrt.pop %v1122
          %v1718 = vmul.f32 %v1717, %v1122
          %v1719 = vmul.f32 %v1718, %v1717
          %v1720 = vmul.f32 0.5, %v1719
          %v1721 = vsub.f32 1.5, %v1720
          %v1722 = vmul.f32 %v1717, %v1721
          %vm1723 = vweird.f32 %v1122
          %vm1724 = vweird.f32 %v1717
          %vm1725 = vmor %vm1723, %vm1724
          %v1726 = vsel %vm1725, %v1717, %v1722
          %v1727 = vrsqrt.pop %v1123
          %v1728 = vmul.f32 %v1727, %v1123
          %v1729 = vmul.f32 %v1728, %v1727
          %v1730 = vmul.f32 0.5, %v1729
          %v1731 = vsub.f32 1.5, %v1730
          %v1732 = vmul.f32 %v1727, %v1731
          %vm1733 = vweird.f32 %v1123
          %vm1734 = vweird.f32 %v1727
          %vm1735 = vmor %vm1733, %vm1734
          %v1736 = vsel %vm1735, %v1727, %v1732
          %v1737 = vrsqrt.pop %v1124
          %v1738 = vmul.f32 %v1737, %v1124
          %v1739 = vmul.f32 %v1738, %v1737
          %v1740 = vmul.f32 0.5, %v1739
          %v1741 = vsub.f32 1.5, %v1740
          %v1742 = vmul.f32 %v1737, %v1741
          %vm1743 = vweird.f32 %v1124
          %vm1744 = vweird.f32 %v1737
          %vm1745 = vmor %vm1743, %vm1744
          %v1746 = vsel %vm1745, %v1737, %v1742
          %v1747 = vrsqrt.pop %v1125
          %v1748 = vmul.f32 %v1747, %v1125
          %v1749 = vmul.f32 %v1748, %v1747
          %v1750 = vmul.f32 0.5, %v1749
          %v1751 = vsub.f32 1.5, %v1750
          %v1752 = vmul.f32 %v1747, %v1751
          %vm1753 = vweird.f32 %v1125
          %vm1754 = vweird.f32 %v1747
          %vm1755 = vmor %vm1753, %vm1754
          %v1756 = vsel %vm1755, %v1747, %v1752
          %v1757 = vrsqrt.pop %v1126
          %v1758 = vmul.f32 %v1757, %v1126
          %v1759 = vmul.f32 %v1758, %v1757
          %v1760 = vmul.f32 0.5, %v1759
          %v1761 = vsub.f32 1.5, %v1760
          %v1762 = vmul.f32 %v1757, %v1761
          %vm1763 = vweird.f32 %v1126
          %vm1764 = vweird.f32 %v1757
          %vm1765 = vmor %vm1763, %vm1764
          %v1766 = vsel %vm1765, %v1757, %v1762
          %v1767 = vmul.f32 %v999, %v1136
          %v1768 = vmul.f32 %v1000, %v1146
          %v1769 = vmul.f32 %v1001, %v1156
          %v1770 = vmul.f32 %v1002, %v1166
          %v1771 = vmul.f32 %v1003, %v1176
          %v1772 = vmul.f32 %v1004, %v1186
          %v1773 = vmul.f32 %v1005, %v1196
          %v1774 = vmul.f32 %v1006, %v1206
          %v1775 = vmul.f32 %v1007, %v1216
          %v1776 = vmul.f32 %v1008, %v1226
          %v1777 = vmul.f32 %v1009, %v1236
          %v1778 = vmul.f32 %v1010, %v1246
          %v1779 = vmul.f32 %v1011, %v1256
          %v1780 = vmul.f32 %v1012, %v1266
          %v1781 = vmul.f32 %v1013, %v1276
          %v1782 = vmul.f32 %v1014, %v1286
          %v1783 = vmul.f32 %v1015, %v1296
          %v1784 = vmul.f32 %v1016, %v1306
          %v1785 = vmul.f32 %v1017, %v1316
          %v1786 = vmul.f32 %v1018, %v1326
          %v1787 = vmul.f32 %v1019, %v1336
          %v1788 = vmul.f32 %v1020, %v1346
          %v1789 = vmul.f32 %v1021, %v1356
          %v1790 = vmul.f32 %v1022, %v1366
          %v1791 = vmul.f32 %v1023, %v1376
          %v1792 = vmul.f32 %v1024, %v1386
          %v1793 = vmul.f32 %v1025, %v1396
          %v1794 = vmul.f32 %v1026, %v1406
          %v1795 = vmul.f32 %v1027, %v1416
          %v1796 = vmul.f32 %v1028, %v1426
          %v1797 = vmul.f32 %v1029, %v1436
          %v1798 = vmul.f32 %v1030, %v1446
          %v1799 = vmul.f32 %v1031, %v1456
          %v1800 = vmul.f32 %v1032, %v1466
          %v1801 = vmul.f32 %v1033, %v1476
          %v1802 = vmul.f32 %v1034, %v1486
          %v1803 = vmul.f32 %v1035, %v1496
          %v1804 = vmul.f32 %v1036, %v1506
          %v1805 = vmul.f32 %v1037, %v1516
          %v1806 = vmul.f32 %v1038, %v1526
          %v1807 = vmul.f32 %v1039, %v1536
          %v1808 = vmul.f32 %v1040, %v1546
          %v1809 = vmul.f32 %v1041, %v1556
          %v1810 = vmul.f32 %v1042, %v1566
          %v1811 = vmul.f32 %v1043, %v1576
          %v1812 = vmul.f32 %v1044, %v1586
          %v1813 = vmul.f32 %v1045, %v1596
          %v1814 = vmul.f32 %v1046, %v1606
          %v1815 = vmul.f32 %v1047, %v1616
          %v1816 = vmul.f32 %v1048, %v1626
          %v1817 = vmul.f32 %v1049, %v1636
          %v1818 = vmul.f32 %v1050, %v1646
          %v1819 = vmul.f32 %v1051, %v1656
          %v1820 = vmul.f32 %v1052, %v1666
          %v1821 = vmul.f32 %v1053, %v1676
          %v1822 = vmul.f32 %v1054, %v1686
          %v1823 = vmul.f32 %v1055, %v1696
          %v1824 = vmul.f32 %v1056, %v1706
          %v1825 = vmul.f32 %v1057, %v1716
          %v1826 = vmul.f32 %v1058, %v1726
          %v1827 = vmul.f32 %v1059, %v1736
          %v1828 = vmul.f32 %v1060, %v1746
          %v1829 = vmul.f32 %v1061, %v1756
          %v1830 = vmul.f32 %v1062, %v1766
          %v1831 = vperm.slane %v415, 0
          %v1832 = vmul.f32 %v1767, %v1831
          %v1833 = vmul.f32 %v1768, %v1831
          %v1834 = vmul.f32 %v1769, %v1831
          %v1835 = vmul.f32 %v1770, %v1831
          %v1836 = vmul.f32 %v1771, %v1831
          %v1837 = vmul.f32 %v1772, %v1831
          %v1838 = vmul.f32 %v1773, %v1831
          %v1839 = vmul.f32 %v1774, %v1831
          %v1840 = vmul.f32 %v1775, %v1831
          %v1841 = vmul.f32 %v1776, %v1831
          %v1842 = vmul.f32 %v1777, %v1831
          %v1843 = vmul.f32 %v1778, %v1831
          %v1844 = vmul.f32 %v1779, %v1831
          %v1845 = vmul.f32 %v1780, %v1831
          %v1846 = vmul.f32 %v1781, %v1831
          %v1847 = vmul.f32 %v1782, %v1831
          %v1848 = vmul.f32 %v1783, %v1831
          %v1849 = vmul.f32 %v1784, %v1831
          %v1850 = vmul.f32 %v1785, %v1831
          %v1851 = vmul.f32 %v1786, %v1831
          %v1852 = vmul.f32 %v1787, %v1831
          %v1853 = vmul.f32 %v1788, %v1831
          %v1854 = vmul.f32 %v1789, %v1831
          %v1855 = vmul.f32 %v1790, %v1831
          %v1856 = vmul.f32 %v1791, %v1831
          %v1857 = vmul.f32 %v1792, %v1831
          %v1858 = vmul.f32 %v1793, %v1831
          %v1859 = vmul.f32 %v1794, %v1831
          %v1860 = vmul.f32 %v1795, %v1831
          %v1861 = vmul.f32 %v1796, %v1831
          %v1862 = vmul.f32 %v1797, %v1831
          %v1863 = vmul.f32 %v1798, %v1831
          %v1864 = vmul.f32 %v1799, %v1831
          %v1865 = vmul.f32 %v1800, %v1831
          %v1866 = vmul.f32 %v1801, %v1831
          %v1867 = vmul.f32 %v1802, %v1831
          %v1868 = vmul.f32 %v1803, %v1831
          %v1869 = vmul.f32 %v1804, %v1831
          %v1870 = vmul.f32 %v1805, %v1831
          %v1871 = vmul.f32 %v1806, %v1831
          %v1872 = vmul.f32 %v1807, %v1831
          %v1873 = vmul.f32 %v1808, %v1831
          %v1874 = vmul.f32 %v1809, %v1831
          %v1875 = vmul.f32 %v1810, %v1831
          %v1876 = vmul.f32 %v1811, %v1831
          %v1877 = vmul.f32 %v1812, %v1831
          %v1878 = vmul.f32 %v1813, %v1831
          %v1879 = vmul.f32 %v1814, %v1831
          %v1880 = vmul.f32 %v1815, %v1831
          %v1881 = vmul.f32 %v1816, %v1831
          %v1882 = vmul.f32 %v1817, %v1831
          %v1883 = vmul.f32 %v1818, %v1831
          %v1884 = vmul.f32 %v1819, %v1831
          %v1885 = vmul.f32 %v1820, %v1831
          %v1886 = vmul.f32 %v1821, %v1831
          %v1887 = vmul.f32 %v1822, %v1831
          %v1888 = vmul.f32 %v1823, %v1831
          %v1889 = vmul.f32 %v1824, %v1831
          %v1890 = vmul.f32 %v1825, %v1831
          %v1891 = vmul.f32 %v1826, %v1831
          %v1892 = vmul.f32 %v1827, %v1831
          %v1893 = vmul.f32 %v1828, %v1831
          %v1894 = vmul.f32 %v1829, %v1831
          %v1895 = vmul.f32 %v1830, %v1831
          %v1896 = vperm.slane %v415, 1
          %v1897 = vadd.f32 %v1832, %v1896
          %v1898 = vadd.f32 %v1833, %v1896
          %v1899 = vadd.f32 %v1834, %v1896
          %v1900 = vadd.f32 %v1835, %v1896
          %v1901 = vadd.f32 %v1836, %v1896
          %v1902 = vadd.f32 %v1837, %v1896
          %v1903 = vadd.f32 %v1838, %v1896
          %v1904 = vadd.f32 %v1839, %v1896
          %v1905 = vadd.f32 %v1840, %v1896
          %v1906 = vadd.f32 %v1841, %v1896
          %v1907 = vadd.f32 %v1842, %v1896
          %v1908 = vadd.f32 %v1843, %v1896
          %v1909 = vadd.f32 %v1844, %v1896
          %v1910 = vadd.f32 %v1845, %v1896
          %v1911 = vadd.f32 %v1846, %v1896
          %v1912 = vadd.f32 %v1847, %v1896
          %v1913 = vadd.f32 %v1848, %v1896
          %v1914 = vadd.f32 %v1849, %v1896
          %v1915 = vadd.f32 %v1850, %v1896
          %v1916 = vadd.f32 %v1851, %v1896
          %v1917 = vadd.f32 %v1852, %v1896
          %v1918 = vadd.f32 %v1853, %v1896
          %v1919 = vadd.f32 %v1854, %v1896
          %v1920 = vadd.f32 %v1855, %v1896
          %v1921 = vadd.f32 %v1856, %v1896
          %v1922 = vadd.f32 %v1857, %v1896
          %v1923 = vadd.f32 %v1858, %v1896
          %v1924 = vadd.f32 %v1859, %v1896
          %v1925 = vadd.f32 %v1860, %v1896
          %v1926 = vadd.f32 %v1861, %v1896
          %v1927 = vadd.f32 %v1862, %v1896
          %v1928 = vadd.f32 %v1863, %v1896
          %v1929 = vadd.f32 %v1864, %v1896
          %v1930 = vadd.f32 %v1865, %v1896
          %v1931 = vadd.f32 %v1866, %v1896
          %v1932 = vadd.f32 %v1867, %v1896
          %v1933 = vadd.f32 %v1868, %v1896
          %v1934 = vadd.f32 %v1869, %v1896
          %v1935 = vadd.f32 %v1870, %v1896
          %v1936 = vadd.f32 %v1871, %v1896
          %v1937 = vadd.f32 %v1872, %v1896
          %v1938 = vadd.f32 %v1873, %v1896
          %v1939 = vadd.f32 %v1874, %v1896
          %v1940 = vadd.f32 %v1875, %v1896
          %v1941 = vadd.f32 %v1876, %v1896
          %v1942 = vadd.f32 %v1877, %v1896
          %v1943 = vadd.f32 %v1878, %v1896
          %v1944 = vadd.f32 %v1879, %v1896
          %v1945 = vadd.f32 %v1880, %v1896
          %v1946 = vadd.f32 %v1881, %v1896
          %v1947 = vadd.f32 %v1882, %v1896
          %v1948 = vadd.f32 %v1883, %v1896
          %v1949 = vadd.f32 %v1884, %v1896
          %v1950 = vadd.f32 %v1885, %v1896
          %v1951 = vadd.f32 %v1886, %v1896
          %v1952 = vadd.f32 %v1887, %v1896
          %v1953 = vadd.f32 %v1888, %v1896
          %v1954 = vadd.f32 %v1889, %v1896
          %v1955 = vadd.f32 %v1890, %v1896
          %v1956 = vadd.f32 %v1891, %v1896
          %v1957 = vadd.f32 %v1892, %v1896
          %v1958 = vadd.f32 %v1893, %v1896
          %v1959 = vadd.f32 %v1894, %v1896
          %v1960 = vadd.f32 %v1895, %v1896
          %v1961 = vpack.c.bf16 %v1897, %v1897
          %v1962 = vpack.c.bf16 %v1898, %v1898
          %v1963 = vpack.c.bf16 %v1899, %v1899
          %v1964 = vpack.c.bf16 %v1900, %v1900
          %v1965 = vpack.c.bf16 %v1901, %v1901
          %v1966 = vpack.c.bf16 %v1902, %v1902
          %v1967 = vpack.c.bf16 %v1903, %v1903
          %v1968 = vpack.c.bf16 %v1904, %v1904
          %v1969 = vpack.c.bf16 %v1905, %v1905
          %v1970 = vpack.c.bf16 %v1906, %v1906
          %v1971 = vpack.c.bf16 %v1907, %v1907
          %v1972 = vpack.c.bf16 %v1908, %v1908
          %v1973 = vpack.c.bf16 %v1909, %v1909
          %v1974 = vpack.c.bf16 %v1910, %v1910
          %v1975 = vpack.c.bf16 %v1911, %v1911
          %v1976 = vpack.c.bf16 %v1912, %v1912
          %v1977 = vpack.c.bf16 %v1913, %v1913
          %v1978 = vpack.c.bf16 %v1914, %v1914
          %v1979 = vpack.c.bf16 %v1915, %v1915
          %v1980 = vpack.c.bf16 %v1916, %v1916
          %v1981 = vpack.c.bf16 %v1917, %v1917
          %v1982 = vpack.c.bf16 %v1918, %v1918
          %v1983 = vpack.c.bf16 %v1919, %v1919
          %v1984 = vpack.c.bf16 %v1920, %v1920
          %v1985 = vpack.c.bf16 %v1921, %v1921
          %v1986 = vpack.c.bf16 %v1922, %v1922
          %v1987 = vpack.c.bf16 %v1923, %v1923
          %v1988 = vpack.c.bf16 %v1924, %v1924
          %v1989 = vpack.c.bf16 %v1925, %v1925
          %v1990 = vpack.c.bf16 %v1926, %v1926
          %v1991 = vpack.c.bf16 %v1927, %v1927
          %v1992 = vpack.c.bf16 %v1928, %v1928
          %v1993 = vpack.c.bf16 %v1929, %v1929
          %v1994 = vpack.c.bf16 %v1930, %v1930
          %v1995 = vpack.c.bf16 %v1931, %v1931
          %v1996 = vpack.c.bf16 %v1932, %v1932
          %v1997 = vpack.c.bf16 %v1933, %v1933
          %v1998 = vpack.c.bf16 %v1934, %v1934
          %v1999 = vpack.c.bf16 %v1935, %v1935
          %v2000 = vpack.c.bf16 %v1936, %v1936
          %v2001 = vpack.c.bf16 %v1937, %v1937
          %v2002 = vpack.c.bf16 %v1938, %v1938
          %v2003 = vpack.c.bf16 %v1939, %v1939
          %v2004 = vpack.c.bf16 %v1940, %v1940
          %v2005 = vpack.c.bf16 %v1941, %v1941
          %v2006 = vpack.c.bf16 %v1942, %v1942
          %v2007 = vpack.c.bf16 %v1943, %v1943
          %v2008 = vpack.c.bf16 %v1944, %v1944
          %v2009 = vpack.c.bf16 %v1945, %v1945
          %v2010 = vpack.c.bf16 %v1946, %v1946
          %v2011 = vpack.c.bf16 %v1947, %v1947
          %v2012 = vpack.c.bf16 %v1948, %v1948
          %v2013 = vpack.c.bf16 %v1949, %v1949
          %v2014 = vpack.c.bf16 %v1950, %v1950
          %v2015 = vpack.c.bf16 %v1951, %v1951
          %v2016 = vpack.c.bf16 %v1952, %v1952
          %v2017 = vpack.c.bf16 %v1953, %v1953
          %v2018 = vpack.c.bf16 %v1954, %v1954
          %v2019 = vpack.c.bf16 %v1955, %v1955
          %v2020 = vpack.c.bf16 %v1956, %v1956
          %v2021 = vpack.c.bf16 %v1957, %v1957
          %v2022 = vpack.c.bf16 %v1958, %v1958
          %v2023 = vpack.c.bf16 %v1959, %v1959
          %v2024 = vpack.c.bf16 %v1960, %v1960
          %2025 = vst [vmem:[#allocation2] sm:$0xf] %v1961
          %2026 = vst [vmem:[#allocation2 + $0x4] sm:$0xf] %v1962
          %2027 = vst [vmem:[#allocation2 + $0x8] sm:$0xf] %v1963
          %2028 = vst [vmem:[#allocation2 + $0xc] sm:$0xf] %v1964
          %2029 = vst [vmem:[#allocation2 + $0x10] sm:$0xf] %v1965
          %2030 = vst [vmem:[#allocation2 + $0x14] sm:$0xf] %v1966
          %2031 = vst [vmem:[#allocation2 + $0x18] sm:$0xf] %v1967
          %2032 = vst [vmem:[#allocation2 + $0x1c] sm:$0xf] %v1968
          %2033 = vst [vmem:[#allocation2 + $0x20] sm:$0xf] %v1969
          %2034 = vst [vmem:[#allocation2 + $0x24] sm:$0xf] %v1970
          %2035 = vst [vmem:[#allocation2 + $0x28] sm:$0xf] %v1971
          %2036 = vst [vmem:[#allocation2 + $0x2c] sm:$0xf] %v1972
          %2037 = vst [vmem:[#allocation2 + $0x30] sm:$0xf] %v1973
          %2038 = vst [vmem:[#allocation2 + $0x34] sm:$0xf] %v1974
          %2039 = vst [vmem:[#allocation2 + $0x38] sm:$0xf] %v1975
          %2040 = vst [vmem:[#allocation2 + $0x3c] sm:$0xf] %v1976
          %2041 = vst [vmem:[#allocation2 + $0x40] sm:$0xf] %v1977
          %2042 = vst [vmem:[#allocation2 + $0x44] sm:$0xf] %v1978
          %2043 = vst [vmem:[#allocation2 + $0x48] sm:$0xf] %v1979
          %2044 = vst [vmem:[#allocation2 + $0x4c] sm:$0xf] %v1980
          %2045 = vst [vmem:[#allocation2 + $0x50] sm:$0xf] %v1981
          %2046 = vst [vmem:[#allocation2 + $0x54] sm:$0xf] %v1982
          %2047 = vst [vmem:[#allocation2 + $0x58] sm:$0xf] %v1983
          %2048 = vst [vmem:[#allocation2 + $0x5c] sm:$0xf] %v1984
          %2049 = vst [vmem:[#allocation2 + $0x60] sm:$0xf] %v1985
          %2050 = vst [vmem:[#allocation2 + $0x64] sm:$0xf] %v1986
          %2051 = vst [vmem:[#allocation2 + $0x68] sm:$0xf] %v1987
          %2052 = vst [vmem:[#allocation2 + $0x6c] sm:$0xf] %v1988
          %2053 = vst [vmem:[#allocation2 + $0x70] sm:$0xf] %v1989
          %2054 = vst [vmem:[#allocation2 + $0x74] sm:$0xf] %v1990
          %2055 = vst [vmem:[#allocation2 + $0x78] sm:$0xf] %v1991
          %2056 = vst [vmem:[#allocation2 + $0x7c] sm:$0xf] %v1992
          %2057 = vst [vmem:[#allocation2 + $0x80] sm:$0xf] %v1993
          %2058 = vst [vmem:[#allocation2 + $0x84] sm:$0xf] %v1994
          %2059 = vst [vmem:[#allocation2 + $0x88] sm:$0xf] %v1995
          %2060 = vst [vmem:[#allocation2 + $0x8c] sm:$0xf] %v1996
          %2061 = vst [vmem:[#allocation2 + $0x90] sm:$0xf] %v1997
          %2062 = vst [vmem:[#allocation2 + $0x94] sm:$0xf] %v1998
          %2063 = vst [vmem:[#allocation2 + $0x98] sm:$0xf] %v1999
          %2064 = vst [vmem:[#allocation2 + $0x9c] sm:$0xf] %v2000
          %2065 = vst [vmem:[#allocation2 + $0xa0] sm:$0xf] %v2001
          %2066 = vst [vmem:[#allocation2 + $0xa4] sm:$0xf] %v2002
          %2067 = vst [vmem:[#allocation2 + $0xa8] sm:$0xf] %v2003
          %2068 = vst [vmem:[#allocation2 + $0xac] sm:$0xf] %v2004
          %2069 = vst [vmem:[#allocation2 + $0xb0] sm:$0xf] %v2005
          %2070 = vst [vmem:[#allocation2 + $0xb4] sm:$0xf] %v2006
          %2071 = vst [vmem:[#allocation2 + $0xb8] sm:$0xf] %v2007
          %2072 = vst [vmem:[#allocation2 + $0xbc] sm:$0xf] %v2008
          %2073 = vst [vmem:[#allocation2 + $0xc0] sm:$0xf] %v2009
          %2074 = vst [vmem:[#allocation2 + $0xc4] sm:$0xf] %v2010
          %2075 = vst [vmem:[#allocation2 + $0xc8] sm:$0xf] %v2011
          %2076 = vst [vmem:[#allocation2 + $0xcc] sm:$0xf] %v2012
          %2077 = vst [vmem:[#allocation2 + $0xd0] sm:$0xf] %v2013
          %2078 = vst [vmem:[#allocation2 + $0xd4] sm:$0xf] %v2014
          %2079 = vst [vmem:[#allocation2 + $0xd8] sm:$0xf] %v2015
          %2080 = vst [vmem:[#allocation2 + $0xdc] sm:$0xf] %v2016
          %2081 = vst [vmem:[#allocation2 + $0xe0] sm:$0xf] %v2017
          %2082 = vst [vmem:[#allocation2 + $0xe4] sm:$0xf] %v2018
          %2083 = vst [vmem:[#allocation2 + $0xe8] sm:$0xf] %v2019
          %2084 = vst [vmem:[#allocation2 + $0xec] sm:$0xf] %v2020
          %2085 = vst [vmem:[#allocation2 + $0xf0] sm:$0xf] %v2021
          %2086 = vst [vmem:[#allocation2 + $0xf4] sm:$0xf] %v2022
          %2087 = vst [vmem:[#allocation2 + $0xf8] sm:$0xf] %v2023
          %2088 = vst [vmem:[#allocation2 + $0xfc] sm:$0xf] %v2024
          %2089 = vst [vmem:[#allocation3] sm:$0xff] 0.0
          %2090 = vst [vmem:[#allocation3 + $0x8] sm:$0xff] 0.0
          %2091 = vst [vmem:[#allocation3 + $0x10] sm:$0xff] 0.0
          %2092 = vst [vmem:[#allocation3 + $0x18] sm:$0xff] 0.0
          %2093 = vst [vmem:[#allocation3 + $0x20] sm:$0xff] 0.0
          %2094 = vst [vmem:[#allocation3 + $0x28] sm:$0xff] 0.0
          %2095 = vst [vmem:[#allocation3 + $0x30] sm:$0xff] 0.0
          %2096 = vst [vmem:[#allocation3 + $0x38] sm:$0xff] 0.0
          %2097 = vst [vmem:[#allocation3 + $0x40] sm:$0xff] 0.0
          %2098 = vst [vmem:[#allocation3 + $0x48] sm:$0xff] 0.0
          %2099 = vst [vmem:[#allocation3 + $0x50] sm:$0xff] 0.0
          %2100 = vst [vmem:[#allocation3 + $0x58] sm:$0xff] 0.0
          %2101 = vst [vmem:[#allocation3 + $0x60] sm:$0xff] 0.0
          %2102 = vst [vmem:[#allocation3 + $0x68] sm:$0xff] 0.0
          %2103 = vst [vmem:[#allocation3 + $0x70] sm:$0xff] 0.0
          %2104 = vst [vmem:[#allocation3 + $0x78] sm:$0xff] 0.0
          %2105 = vst [vmem:[#allocation3 + $0x80] sm:$0xff] 0.0
          %2106 = vst [vmem:[#allocation3 + $0x88] sm:$0xff] 0.0
          %2107 = vst [vmem:[#allocation3 + $0x90] sm:$0xff] 0.0
          %2108 = vst [vmem:[#allocation3 + $0x98] sm:$0xff] 0.0
          %2109 = vst [vmem:[#allocation3 + $0xa0] sm:$0xff] 0.0
          %2110 = vst [vmem:[#allocation3 + $0xa8] sm:$0xff] 0.0
          %2111 = vst [vmem:[#allocation3 + $0xb0] sm:$0xff] 0.0
          %2112 = vst [vmem:[#allocation3 + $0xb8] sm:$0xff] 0.0
          %2113 = vst [vmem:[#allocation3 + $0xc0] sm:$0xff] 0.0
          %2114 = vst [vmem:[#allocation3 + $0xc8] sm:$0xff] 0.0
          %2115 = vst [vmem:[#allocation3 + $0xd0] sm:$0xff] 0.0
          %2116 = vst [vmem:[#allocation3 + $0xd8] sm:$0xff] 0.0
          %2117 = vst [vmem:[#allocation3 + $0xe0] sm:$0xff] 0.0
          %2118 = vst [vmem:[#allocation3 + $0xe8] sm:$0xff] 0.0
          %2119 = vst [vmem:[#allocation3 + $0xf0] sm:$0xff] 0.0
          %2120 = vst [vmem:[#allocation3 + $0xf8] sm:$0xff] 0.0
          %2121 = vst [vmem:[#allocation3 + $0x100] sm:$0xff] 0.0
          %2122 = vst [vmem:[#allocation3 + $0x108] sm:$0xff] 0.0
          %2123 = vst [vmem:[#allocation3 + $0x110] sm:$0xff] 0.0
          %2124 = vst [vmem:[#allocation3 + $0x118] sm:$0xff] 0.0
          %2125 = vst [vmem:[#allocation3 + $0x120] sm:$0xff] 0.0
          %2126 = vst [vmem:[#allocation3 + $0x128] sm:$0xff] 0.0
          %2127 = vst [vmem:[#allocation3 + $0x130] sm:$0xff] 0.0
          %2128 = vst [vmem:[#allocation3 + $0x138] sm:$0xff] 0.0
          %2129 = vst [vmem:[#allocation3 + $0x140] sm:$0xff] 0.0
          %2130 = vst [vmem:[#allocation3 + $0x148] sm:$0xff] 0.0
          %2131 = vst [vmem:[#allocation3 + $0x150] sm:$0xff] 0.0
          %2132 = vst [vmem:[#allocation3 + $0x158] sm:$0xff] 0.0
          %2133 = vst [vmem:[#allocation3 + $0x160] sm:$0xff] 0.0
          %2134 = vst [vmem:[#allocation3 + $0x168] sm:$0xff] 0.0
          %2135 = vst [vmem:[#allocation3 + $0x170] sm:$0xff] 0.0
          %2136 = vst [vmem:[#allocation3 + $0x178] sm:$0xff] 0.0
          %2137 = vst [vmem:[#allocation3 + $0x180] sm:$0xff] 0.0
          %2138 = vst [vmem:[#allocation3 + $0x188] sm:$0xff] 0.0
          %2139 = vst [vmem:[#allocation3 + $0x190] sm:$0xff] 0.0
          %2140 = vst [vmem:[#allocation3 + $0x198] sm:$0xff] 0.0
          %2141 = vst [vmem:[#allocation3 + $0x1a0] sm:$0xff] 0.0
          %2142 = vst [vmem:[#allocation3 + $0x1a8] sm:$0xff] 0.0
          %2143 = vst [vmem:[#allocation3 + $0x1b0] sm:$0xff] 0.0
          %2144 = vst [vmem:[#allocation3 + $0x1b8] sm:$0xff] 0.0
          %2145 = vst [vmem:[#allocation3 + $0x1c0] sm:$0xff] 0.0
          %2146 = vst [vmem:[#allocation3 + $0x1c8] sm:$0xff] 0.0
          %2147 = vst [vmem:[#allocation3 + $0x1d0] sm:$0xff] 0.0
          %2148 = vst [vmem:[#allocation3 + $0x1d8] sm:$0xff] 0.0
          %2149 = vst [vmem:[#allocation3 + $0x1e0] sm:$0xff] 0.0
          %2150 = vst [vmem:[#allocation3 + $0x1e8] sm:$0xff] 0.0
          %2151 = vst [vmem:[#allocation3 + $0x1f0] sm:$0xff] 0.0
          %2152 = vst [vmem:[#allocation3 + $0x1f8] sm:$0xff] 0.0
        $region64: #{tpu_custom_call.1} parent=39 // pred_fallthru
          _
        %v2153 = vld [vmem:[#allocation2] sm:$0xf]
        %v2154 = vld [vmem:[#allocation2 + $0x4] sm:$0xf]
        %v2155 = vld [vmem:[#allocation2 + $0x8] sm:$0xf]
        %v2156 = vld [vmem:[#allocation2 + $0xc] sm:$0xf]
        %v2157 = vld [vmem:[#allocation2 + $0x10] sm:$0xf]
        %v2158 = vld [vmem:[#allocation2 + $0x14] sm:$0xf]
        %v2159 = vld [vmem:[#allocation2 + $0x18] sm:$0xf]
        %v2160 = vld [vmem:[#allocation2 + $0x1c] sm:$0xf]
        %v2161 = vld [vmem:[#allocation2 + $0x20] sm:$0xf]
        %v2162 = vld [vmem:[#allocation2 + $0x24] sm:$0xf]
        %v2163 = vld [vmem:[#allocation2 + $0x28] sm:$0xf]
        %v2164 = vld [vmem:[#allocation2 + $0x2c] sm:$0xf]
        %v2165 = vld [vmem:[#allocation2 + $0x30] sm:$0xf]
        %v2166 = vld [vmem:[#allocation2 + $0x34] sm:$0xf]
        %v2167 = vld [vmem:[#allocation2 + $0x38] sm:$0xf]
        %v2168 = vld [vmem:[#allocation2 + $0x3c] sm:$0xf]
        %v2169 = vld [vmem:[#allocation2 + $0x40] sm:$0xf]
        %v2170 = vld [vmem:[#allocation2 + $0x44] sm:$0xf]
        %v2171 = vld [vmem:[#allocation2 + $0x48] sm:$0xf]
        %v2172 = vld [vmem:[#allocation2 + $0x4c] sm:$0xf]
        %v2173 = vld [vmem:[#allocation2 + $0x50] sm:$0xf]
        %v2174 = vld [vmem:[#allocation2 + $0x54] sm:$0xf]
        %v2175 = vld [vmem:[#allocation2 + $0x58] sm:$0xf]
        %v2176 = vld [vmem:[#allocation2 + $0x5c] sm:$0xf]
        %v2177 = vld [vmem:[#allocation2 + $0x60] sm:$0xf]
        %v2178 = vld [vmem:[#allocation2 + $0x64] sm:$0xf]
        %v2179 = vld [vmem:[#allocation2 + $0x68] sm:$0xf]
        %v2180 = vld [vmem:[#allocation2 + $0x6c] sm:$0xf]
        %v2181 = vld [vmem:[#allocation2 + $0x70] sm:$0xf]
        %v2182 = vld [vmem:[#allocation2 + $0x74] sm:$0xf]
        %v2183 = vld [vmem:[#allocation2 + $0x78] sm:$0xf]
        %v2184 = vld [vmem:[#allocation2 + $0x7c] sm:$0xf]
        %v2185 = vld [vmem:[#allocation2 + $0x80] sm:$0xf]
        %v2186 = vld [vmem:[#allocation2 + $0x84] sm:$0xf]
        %v2187 = vld [vmem:[#allocation2 + $0x88] sm:$0xf]
        %v2188 = vld [vmem:[#allocation2 + $0x8c] sm:$0xf]
        %v2189 = vld [vmem:[#allocation2 + $0x90] sm:$0xf]
        %v2190 = vld [vmem:[#allocation2 + $0x94] sm:$0xf]
        %v2191 = vld [vmem:[#allocation2 + $0x98] sm:$0xf]
        %v2192 = vld [vmem:[#allocation2 + $0x9c] sm:$0xf]
        %v2193 = vld [vmem:[#allocation2 + $0xa0] sm:$0xf]
        %v2194 = vld [vmem:[#allocation2 + $0xa4] sm:$0xf]
        %v2195 = vld [vmem:[#allocation2 + $0xa8] sm:$0xf]
        %v2196 = vld [vmem:[#allocation2 + $0xac] sm:$0xf]
        %v2197 = vld [vmem:[#allocation2 + $0xb0] sm:$0xf]
        %v2198 = vld [vmem:[#allocation2 + $0xb4] sm:$0xf]
        %v2199 = vld [vmem:[#allocation2 + $0xb8] sm:$0xf]
        %v2200 = vld [vmem:[#allocation2 + $0xbc] sm:$0xf]
        %v2201 = vld [vmem:[#allocation2 + $0xc0] sm:$0xf]
        %v2202 = vld [vmem:[#allocation2 + $0xc4] sm:$0xf]
        %v2203 = vld [vmem:[#allocation2 + $0xc8] sm:$0xf]
        %v2204 = vld [vmem:[#allocation2 + $0xcc] sm:$0xf]
        %v2205 = vld [vmem:[#allocation2 + $0xd0] sm:$0xf]
        %v2206 = vld [vmem:[#allocation2 + $0xd4] sm:$0xf]
        %v2207 = vld [vmem:[#allocation2 + $0xd8] sm:$0xf]
        %v2208 = vld [vmem:[#allocation2 + $0xdc] sm:$0xf]
        %v2209 = vld [vmem:[#allocation2 + $0xe0] sm:$0xf]
        %v2210 = vld [vmem:[#allocation2 + $0xe4] sm:$0xf]
        %v2211 = vld [vmem:[#allocation2 + $0xe8] sm:$0xf]
        %v2212 = vld [vmem:[#allocation2 + $0xec] sm:$0xf]
        %v2213 = vld [vmem:[#allocation2 + $0xf0] sm:$0xf]
        %v2214 = vld [vmem:[#allocation2 + $0xf4] sm:$0xf]
        %v2215 = vld [vmem:[#allocation2 + $0xf8] sm:$0xf]
        %v2216 = vld [vmem:[#allocation2 + $0xfc] sm:$0xf]
        %v2217 = vld [vmem:[#allocation9] sm:$0xff]
        %v2218 = vld [vmem:[#allocation9 + $0x8] sm:$0xff]
        %v2219 = vld [vmem:[#allocation9 + $0x10] sm:$0xff]
        %v2220 = vld [vmem:[#allocation9 + $0x18] sm:$0xff]
        %v2221 = vld [vmem:[#allocation9 + $0x20] sm:$0xff]
        %v2222 = vld [vmem:[#allocation9 + $0x28] sm:$0xff]
        %v2223 = vld [vmem:[#allocation9 + $0x30] sm:$0xff]
        %v2224 = vld [vmem:[#allocation9 + $0x38] sm:$0xff]
        %v2225 = vld [vmem:[#allocation9 + $0x40] sm:$0xff]
        %v2226 = vld [vmem:[#allocation9 + $0x48] sm:$0xff]
        %v2227 = vld [vmem:[#allocation9 + $0x50] sm:$0xff]
        %v2228 = vld [vmem:[#allocation9 + $0x58] sm:$0xff]
        %v2229 = vld [vmem:[#allocation9 + $0x60] sm:$0xff]
        %v2230 = vld [vmem:[#allocation9 + $0x68] sm:$0xff]
        %v2231 = vld [vmem:[#allocation9 + $0x70] sm:$0xff]
        %v2232 = vld [vmem:[#allocation9 + $0x78] sm:$0xff]
        %v2233 = vld [vmem:[#allocation9 + $0x80] sm:$0xff]
        %v2234 = vld [vmem:[#allocation9 + $0x88] sm:$0xff]
        %v2235 = vld [vmem:[#allocation9 + $0x90] sm:$0xff]
        %v2236 = vld [vmem:[#allocation9 + $0x98] sm:$0xff]
        %v2237 = vld [vmem:[#allocation9 + $0xa0] sm:$0xff]
        %v2238 = vld [vmem:[#allocation9 + $0xa8] sm:$0xff]
        %v2239 = vld [vmem:[#allocation9 + $0xb0] sm:$0xff]
        %v2240 = vld [vmem:[#allocation9 + $0xb8] sm:$0xff]
        %v2241 = vld [vmem:[#allocation9 + $0xc0] sm:$0xff]
        %v2242 = vld [vmem:[#allocation9 + $0xc8] sm:$0xff]
        %v2243 = vld [vmem:[#allocation9 + $0xd0] sm:$0xff]
        %v2244 = vld [vmem:[#allocation9 + $0xd8] sm:$0xff]
        %v2245 = vld [vmem:[#allocation9 + $0xe0] sm:$0xff]
        %v2246 = vld [vmem:[#allocation9 + $0xe8] sm:$0xff]
        %v2247 = vld [vmem:[#allocation9 + $0xf0] sm:$0xff]
        %v2248 = vld [vmem:[#allocation9 + $0xf8] sm:$0xff]
        %v2249 = vld [vmem:[#allocation10] sm:$0xf]
        %v2251 = vperm.slane %v2249, 0
        %v2252 = vperm.slane %v2249, 1
        %v2253 = vperm.slane %v2249, 2
        %v2254 = vperm.slane %v2249, 3
        %v2323 = vunpack.c.l.b16 %v2153
        %v2324 = vunpack.c.l.b16 %v2154
        %v2325 = vunpack.c.l.b16 %v2155
        %v2326 = vunpack.c.l.b16 %v2156
        %v2327 = vunpack.c.l.b16 %v2157
        %v2328 = vunpack.c.l.b16 %v2158
        %v2329 = vunpack.c.l.b16 %v2159
        %v2330 = vunpack.c.l.b16 %v2160
        %v2331 = vunpack.c.l.b16 %v2161
        %v2332 = vunpack.c.l.b16 %v2162
        %v2333 = vunpack.c.l.b16 %v2163
        %v2334 = vunpack.c.l.b16 %v2164
        %v2335 = vunpack.c.l.b16 %v2165
        %v2336 = vunpack.c.l.b16 %v2166
        %v2337 = vunpack.c.l.b16 %v2167
        %v2338 = vunpack.c.l.b16 %v2168
        %v2339 = vunpack.c.l.b16 %v2169
        %v2340 = vunpack.c.l.b16 %v2170
        %v2341 = vunpack.c.l.b16 %v2171
        %v2342 = vunpack.c.l.b16 %v2172
        %v2343 = vunpack.c.l.b16 %v2173
        %v2344 = vunpack.c.l.b16 %v2174
        %v2345 = vunpack.c.l.b16 %v2175
        %v2346 = vunpack.c.l.b16 %v2176
        %v2347 = vunpack.c.l.b16 %v2177
        %v2348 = vunpack.c.l.b16 %v2178
        %v2349 = vunpack.c.l.b16 %v2179
        %v2350 = vunpack.c.l.b16 %v2180
        %v2351 = vunpack.c.l.b16 %v2181
        %v2352 = vunpack.c.l.b16 %v2182
        %v2353 = vunpack.c.l.b16 %v2183
        %v2354 = vunpack.c.l.b16 %v2184
        %v2355 = vunpack.c.l.b16 %v2185
        %v2356 = vunpack.c.l.b16 %v2186
        %v2357 = vunpack.c.l.b16 %v2187
        %v2358 = vunpack.c.l.b16 %v2188
        %v2359 = vunpack.c.l.b16 %v2189
        %v2360 = vunpack.c.l.b16 %v2190
        %v2361 = vunpack.c.l.b16 %v2191
        %v2362 = vunpack.c.l.b16 %v2192
        %v2363 = vunpack.c.l.b16 %v2193
        %v2364 = vunpack.c.l.b16 %v2194
        %v2365 = vunpack.c.l.b16 %v2195
        %v2366 = vunpack.c.l.b16 %v2196
        %v2367 = vunpack.c.l.b16 %v2197
        %v2368 = vunpack.c.l.b16 %v2198
        %v2369 = vunpack.c.l.b16 %v2199
        %v2370 = vunpack.c.l.b16 %v2200
        %v2371 = vunpack.c.l.b16 %v2201
        %v2372 = vunpack.c.l.b16 %v2202
        %v2373 = vunpack.c.l.b16 %v2203
        %v2374 = vunpack.c.l.b16 %v2204
        %v2375 = vunpack.c.l.b16 %v2205
        %v2376 = vunpack.c.l.b16 %v2206
        %v2377 = vunpack.c.l.b16 %v2207
        %v2378 = vunpack.c.l.b16 %v2208
        %v2379 = vunpack.c.l.b16 %v2209
        %v2380 = vunpack.c.l.b16 %v2210
        %v2381 = vunpack.c.l.b16 %v2211
        %v2382 = vunpack.c.l.b16 %v2212
        %v2383 = vunpack.c.l.b16 %v2213
        %v2384 = vunpack.c.l.b16 %v2214
        %v2385 = vunpack.c.l.b16 %v2215
        %v2386 = vunpack.c.l.b16 %v2216
        %v2387 = vpack.c.b16 %v2324, %v2323
        %v2388 = vpack.c.b16 %v2326, %v2325
        %v2389 = vpack.c.b16 %v2328, %v2327
        %v2390 = vpack.c.b16 %v2330, %v2329
        %v2391 = vpack.c.b16 %v2332, %v2331
        %v2392 = vpack.c.b16 %v2334, %v2333
        %v2393 = vpack.c.b16 %v2336, %v2335
        %v2394 = vpack.c.b16 %v2338, %v2337
        %v2395 = vpack.c.b16 %v2340, %v2339
        %v2396 = vpack.c.b16 %v2342, %v2341
        %v2397 = vpack.c.b16 %v2344, %v2343
        %v2398 = vpack.c.b16 %v2346, %v2345
        %v2399 = vpack.c.b16 %v2348, %v2347
        %v2400 = vpack.c.b16 %v2350, %v2349
        %v2401 = vpack.c.b16 %v2352, %v2351
        %v2402 = vpack.c.b16 %v2354, %v2353
        %v2403 = vpack.c.b16 %v2356, %v2355
        %v2404 = vpack.c.b16 %v2358, %v2357
        %v2405 = vpack.c.b16 %v2360, %v2359
        %v2406 = vpack.c.b16 %v2362, %v2361
        %v2407 = vpack.c.b16 %v2364, %v2363
        %v2408 = vpack.c.b16 %v2366, %v2365
        %v2409 = vpack.c.b16 %v2368, %v2367
        %v2410 = vpack.c.b16 %v2370, %v2369
        %v2411 = vpack.c.b16 %v2372, %v2371
        %v2412 = vpack.c.b16 %v2374, %v2373
        %v2413 = vpack.c.b16 %v2376, %v2375
        %v2414 = vpack.c.b16 %v2378, %v2377
        %v2415 = vpack.c.b16 %v2380, %v2379
        %v2416 = vpack.c.b16 %v2382, %v2381
        %v2417 = vpack.c.b16 %v2384, %v2383
        %v2418 = vpack.c.b16 %v2386, %v2385
        %v2483 = vunpack.c.l.b16 %v2217
        %v2484 = vunpack.c.h.b16 %v2217
        %v2485 = vunpack.c.l.b16 %v2218
        %v2486 = vunpack.c.h.b16 %v2218
        %v2487 = vunpack.c.l.b16 %v2219
        %v2488 = vunpack.c.h.b16 %v2219
        %v2489 = vunpack.c.l.b16 %v2220
        %v2490 = vunpack.c.h.b16 %v2220
        %v2491 = vunpack.c.l.b16 %v2221
        %v2492 = vunpack.c.h.b16 %v2221
        %v2493 = vunpack.c.l.b16 %v2222
        %v2494 = vunpack.c.h.b16 %v2222
        %v2495 = vunpack.c.l.b16 %v2223
        %v2496 = vunpack.c.h.b16 %v2223
        %v2497 = vunpack.c.l.b16 %v2224
        %v2498 = vunpack.c.h.b16 %v2224
        %v2499 = vunpack.c.l.b16 %v2225
        %v2500 = vunpack.c.h.b16 %v2225
        %v2501 = vunpack.c.l.b16 %v2226
        %v2502 = vunpack.c.h.b16 %v2226
        %v2503 = vunpack.c.l.b16 %v2227
        %v2504 = vunpack.c.h.b16 %v2227
        %v2505 = vunpack.c.l.b16 %v2228
        %v2506 = vunpack.c.h.b16 %v2228
        %v2507 = vunpack.c.l.b16 %v2229
        %v2508 = vunpack.c.h.b16 %v2229
        %v2509 = vunpack.c.l.b16 %v2230
        %v2510 = vunpack.c.h.b16 %v2230
        %v2511 = vunpack.c.l.b16 %v2231
        %v2512 = vunpack.c.h.b16 %v2231
        %v2513 = vunpack.c.l.b16 %v2232
        %v2514 = vunpack.c.h.b16 %v2232
        %v2515 = vunpack.c.l.b16 %v2233
        %v2516 = vunpack.c.h.b16 %v2233
        %v2517 = vunpack.c.l.b16 %v2234
        %v2518 = vunpack.c.h.b16 %v2234
        %v2519 = vunpack.c.l.b16 %v2235
        %v2520 = vunpack.c.h.b16 %v2235
        %v2521 = vunpack.c.l.b16 %v2236
        %v2522 = vunpack.c.h.b16 %v2236
        %v2523 = vunpack.c.l.b16 %v2237
        %v2524 = vunpack.c.h.b16 %v2237
        %v2525 = vunpack.c.l.b16 %v2238
        %v2526 = vunpack.c.h.b16 %v2238
        %v2527 = vunpack.c.l.b16 %v2239
        %v2528 = vunpack.c.h.b16 %v2239
        %v2529 = vunpack.c.l.b16 %v2240
        %v2530 = vunpack.c.h.b16 %v2240
        %v2531 = vunpack.c.l.b16 %v2241
        %v2532 = vunpack.c.h.b16 %v2241
        %v2533 = vunpack.c.l.b16 %v2242
        %v2534 = vunpack.c.h.b16 %v2242
        %v2535 = vunpack.c.l.b16 %v2243
        %v2536 = vunpack.c.h.b16 %v2243
        %v2537 = vunpack.c.l.b16 %v2244
        %v2538 = vunpack.c.h.b16 %v2244
        %v2539 = vunpack.c.l.b16 %v2245
        %v2540 = vunpack.c.h.b16 %v2245
        %v2541 = vunpack.c.l.b16 %v2246
        %v2542 = vunpack.c.h.b16 %v2246
        %v2543 = vunpack.c.l.b16 %v2247
        %v2544 = vunpack.c.h.b16 %v2247
        %v2545 = vunpack.c.l.b16 %v2248
        %v2546 = vunpack.c.h.b16 %v2248
        %v2547 = vpack.c.b16 %v2487, %v2483
        %v2548 = vpack.c.b16 %v2488, %v2484
        %v2549 = vpack.c.b16 %v2489, %v2485
        %v2550 = vpack.c.b16 %v2490, %v2486
        %v2551 = vpack.c.b16 %v2495, %v2491
        %v2552 = vpack.c.b16 %v2496, %v2492
        %v2553 = vpack.c.b16 %v2497, %v2493
        %v2554 = vpack.c.b16 %v2498, %v2494
        %v2555 = vpack.c.b16 %v2503, %v2499
        %v2556 = vpack.c.b16 %v2504, %v2500
        %v2557 = vpack.c.b16 %v2505, %v2501
        %v2558 = vpack.c.b16 %v2506, %v2502
        %v2559 = vpack.c.b16 %v2511, %v2507
        %v2560 = vpack.c.b16 %v2512, %v2508
        %v2561 = vpack.c.b16 %v2513, %v2509
        %v2562 = vpack.c.b16 %v2514, %v2510
        %v2563 = vpack.c.b16 %v2519, %v2515
        %v2564 = vpack.c.b16 %v2520, %v2516
        %v2565 = vpack.c.b16 %v2521, %v2517
        %v2566 = vpack.c.b16 %v2522, %v2518
        %v2567 = vpack.c.b16 %v2527, %v2523
        %v2568 = vpack.c.b16 %v2528, %v2524
        %v2569 = vpack.c.b16 %v2529, %v2525
        %v2570 = vpack.c.b16 %v2530, %v2526
        %v2571 = vpack.c.b16 %v2535, %v2531
        %v2572 = vpack.c.b16 %v2536, %v2532
        %v2573 = vpack.c.b16 %v2537, %v2533
        %v2574 = vpack.c.b16 %v2538, %v2534
        %v2575 = vpack.c.b16 %v2543, %v2539
        %v2576 = vpack.c.b16 %v2544, %v2540
        %v2577 = vpack.c.b16 %v2545, %v2541
        %v2578 = vpack.c.b16 %v2546, %v2542
        %2611 = vmatpush.bf16.msra.mxu0 %v2575
        %2612 = vmatpush.bf16.msra.mxu0 %v2571
        %2613 = vmatpush.bf16.msra.mxu0 %v2567
        %2614 = vmatpush.bf16.msra.mxu0 %v2563
        %2615 = vmatpush.bf16.msra.mxu0 %v2559
        %2616 = vmatpush.bf16.msra.mxu0 %v2555
        %2617 = vmatpush.bf16.msra.mxu0 %v2551
        %2618 = vmatpush.bf16.msra.mxu0 %v2547
        %2619 = vmatmul.bf16.gmra.mxu0 %v2387
        %v2620 = vpop.f32.mrf.mxu0
        %v2621 = vadd.f32 %v2251, %v2620
        %v2622 = vpop.f32.mrf.mxu0
        %v2623 = vadd.f32 %v2251, %v2622
        %2624 = vmatmul.bf16.gmra.mxu0 %v2388
        %v2625 = vpop.f32.mrf.mxu0
        %v2626 = vadd.f32 %v2251, %v2625
        %v2627 = vpop.f32.mrf.mxu0
        %v2628 = vadd.f32 %v2251, %v2627
        %2629 = vmatmul.bf16.gmra.mxu0 %v2389
        %v2630 = vpop.f32.mrf.mxu0
        %v2631 = vadd.f32 %v2251, %v2630
        %v2632 = vpop.f32.mrf.mxu0
        %v2633 = vadd.f32 %v2251, %v2632
        %2634 = vmatmul.bf16.gmra.mxu0 %v2390
        %v2635 = vpop.f32.mrf.mxu0
        %v2636 = vadd.f32 %v2251, %v2635
        %v2637 = vpop.f32.mrf.mxu0
        %v2638 = vadd.f32 %v2251, %v2637
        %2639 = vmatmul.bf16.gmra.mxu0 %v2391
        %v2640 = vpop.f32.mrf.mxu0
        %v2641 = vadd.f32 %v2251, %v2640
        %v2642 = vpop.f32.mrf.mxu0
        %v2643 = vadd.f32 %v2251, %v2642
        %2644 = vmatmul.bf16.gmra.mxu0 %v2392
        %v2645 = vpop.f32.mrf.mxu0
        %v2646 = vadd.f32 %v2251, %v2645
        %v2647 = vpop.f32.mrf.mxu0
        %v2648 = vadd.f32 %v2251, %v2647
        %2649 = vmatmul.bf16.gmra.mxu0 %v2393
        %v2650 = vpop.f32.mrf.mxu0
        %v2651 = vadd.f32 %v2251, %v2650
        %v2652 = vpop.f32.mrf.mxu0
        %v2653 = vadd.f32 %v2251, %v2652
        %2654 = vmatmul.bf16.gmra.mxu0 %v2394
        %v2655 = vpop.f32.mrf.mxu0
        %v2656 = vadd.f32 %v2251, %v2655
        %v2657 = vpop.f32.mrf.mxu0
        %v2658 = vadd.f32 %v2251, %v2657
        %2659 = vmatmul.bf16.gmra.mxu0 %v2395
        %v2660 = vpop.f32.mrf.mxu0
        %v2661 = vadd.f32 %v2251, %v2660
        %v2662 = vpop.f32.mrf.mxu0
        %v2663 = vadd.f32 %v2251, %v2662
        %2664 = vmatmul.bf16.gmra.mxu0 %v2396
        %v2665 = vpop.f32.mrf.mxu0
        %v2666 = vadd.f32 %v2251, %v2665
        %v2667 = vpop.f32.mrf.mxu0
        %v2668 = vadd.f32 %v2251, %v2667
        %2669 = vmatmul.bf16.gmra.mxu0 %v2397
        %v2670 = vpop.f32.mrf.mxu0
        %v2671 = vadd.f32 %v2251, %v2670
        %v2672 = vpop.f32.mrf.mxu0
        %v2673 = vadd.f32 %v2251, %v2672
        %2674 = vmatmul.bf16.gmra.mxu0 %v2398
        %v2675 = vpop.f32.mrf.mxu0
        %v2676 = vadd.f32 %v2251, %v2675
        %v2677 = vpop.f32.mrf.mxu0
        %v2678 = vadd.f32 %v2251, %v2677
        %2679 = vmatmul.bf16.gmra.mxu0 %v2399
        %v2680 = vpop.f32.mrf.mxu0
        %v2681 = vadd.f32 %v2251, %v2680
        %v2682 = vpop.f32.mrf.mxu0
        %v2683 = vadd.f32 %v2251, %v2682
        %2684 = vmatmul.bf16.gmra.mxu0 %v2400
        %v2685 = vpop.f32.mrf.mxu0
        %v2686 = vadd.f32 %v2251, %v2685
        %v2687 = vpop.f32.mrf.mxu0
        %v2688 = vadd.f32 %v2251, %v2687
        %2689 = vmatmul.bf16.gmra.mxu0 %v2401
        %v2690 = vpop.f32.mrf.mxu0
        %v2691 = vadd.f32 %v2251, %v2690
        %v2692 = vpop.f32.mrf.mxu0
        %v2693 = vadd.f32 %v2251, %v2692
        %2694 = vmatmul.bf16.gmra.mxu0 %v2402
        %v2695 = vpop.f32.mrf.mxu0
        %v2696 = vadd.f32 %v2251, %v2695
        %v2697 = vpop.f32.mrf.mxu0
        %v2698 = vadd.f32 %v2251, %v2697
        %2699 = vmatmul.bf16.gmra.mxu0 %v2403
        %v2700 = vpop.f32.mrf.mxu0
        %v2701 = vadd.f32 %v2251, %v2700
        %v2702 = vpop.f32.mrf.mxu0
        %v2703 = vadd.f32 %v2251, %v2702
        %2704 = vmatmul.bf16.gmra.mxu0 %v2404
        %v2705 = vpop.f32.mrf.mxu0
        %v2706 = vadd.f32 %v2251, %v2705
        %v2707 = vpop.f32.mrf.mxu0
        %v2708 = vadd.f32 %v2251, %v2707
        %2709 = vmatmul.bf16.gmra.mxu0 %v2405
        %v2710 = vpop.f32.mrf.mxu0
        %v2711 = vadd.f32 %v2251, %v2710
        %v2712 = vpop.f32.mrf.mxu0
        %v2713 = vadd.f32 %v2251, %v2712
        %2714 = vmatmul.bf16.gmra.mxu0 %v2406
        %v2715 = vpop.f32.mrf.mxu0
        %v2716 = vadd.f32 %v2251, %v2715
        %v2717 = vpop.f32.mrf.mxu0
        %v2718 = vadd.f32 %v2251, %v2717
        %2719 = vmatmul.bf16.gmra.mxu0 %v2407
        %v2720 = vpop.f32.mrf.mxu0
        %v2721 = vadd.f32 %v2251, %v2720
        %v2722 = vpop.f32.mrf.mxu0
        %v2723 = vadd.f32 %v2251, %v2722
        %2724 = vmatmul.bf16.gmra.mxu0 %v2408
        %v2725 = vpop.f32.mrf.mxu0
        %v2726 = vadd.f32 %v2251, %v2725
        %v2727 = vpop.f32.mrf.mxu0
        %v2728 = vadd.f32 %v2251, %v2727
        %2729 = vmatmul.bf16.gmra.mxu0 %v2409
        %v2730 = vpop.f32.mrf.mxu0
        %v2731 = vadd.f32 %v2251, %v2730
        %v2732 = vpop.f32.mrf.mxu0
        %v2733 = vadd.f32 %v2251, %v2732
        %2734 = vmatmul.bf16.gmra.mxu0 %v2410
        %v2735 = vpop.f32.mrf.mxu0
        %v2736 = vadd.f32 %v2251, %v2735
        %v2737 = vpop.f32.mrf.mxu0
        %v2738 = vadd.f32 %v2251, %v2737
        %2739 = vmatmul.bf16.gmra.mxu0 %v2411
        %v2740 = vpop.f32.mrf.mxu0
        %v2741 = vadd.f32 %v2251, %v2740
        %v2742 = vpop.f32.mrf.mxu0
        %v2743 = vadd.f32 %v2251, %v2742
        %2744 = vmatmul.bf16.gmra.mxu0 %v2412
        %v2745 = vpop.f32.mrf.mxu0
        %v2746 = vadd.f32 %v2251, %v2745
        %v2747 = vpop.f32.mrf.mxu0
        %v2748 = vadd.f32 %v2251, %v2747
        %2749 = vmatmul.bf16.gmra.mxu0 %v2413
        %v2750 = vpop.f32.mrf.mxu0
        %v2751 = vadd.f32 %v2251, %v2750
        %v2752 = vpop.f32.mrf.mxu0
        %v2753 = vadd.f32 %v2251, %v2752
        %2754 = vmatmul.bf16.gmra.mxu0 %v2414
        %v2755 = vpop.f32.mrf.mxu0
        %v2756 = vadd.f32 %v2251, %v2755
        %v2757 = vpop.f32.mrf.mxu0
        %v2758 = vadd.f32 %v2251, %v2757
        %2759 = vmatmul.bf16.gmra.mxu0 %v2415
        %v2760 = vpop.f32.mrf.mxu0
        %v2761 = vadd.f32 %v2251, %v2760
        %v2762 = vpop.f32.mrf.mxu0
        %v2763 = vadd.f32 %v2251, %v2762
        %2764 = vmatmul.bf16.gmra.mxu0 %v2416
        %v2765 = vpop.f32.mrf.mxu0
        %v2766 = vadd.f32 %v2251, %v2765
        %v2767 = vpop.f32.mrf.mxu0
        %v2768 = vadd.f32 %v2251, %v2767
        %2769 = vmatmul.bf16.gmra.mxu0 %v2417
        %v2770 = vpop.f32.mrf.mxu0
        %v2771 = vadd.f32 %v2251, %v2770
        %v2772 = vpop.f32.mrf.mxu0
        %v2773 = vadd.f32 %v2251, %v2772
        %2774 = vmatmul.bf16.gmra.mxu0 %v2418
        %v2775 = vpop.f32.mrf.mxu0
        %v2776 = vadd.f32 %v2251, %v2775
        %v2777 = vpop.f32.mrf.mxu0
        %v2778 = vadd.f32 %v2251, %v2777
        %2779 = vdwg.mxu0
        %2780 = vmatpush.bf16.msra.mxu0 %v2576
        %2781 = vmatpush.bf16.msra.mxu0 %v2572
        %2782 = vmatpush.bf16.msra.mxu0 %v2568
        %2783 = vmatpush.bf16.msra.mxu0 %v2564
        %2784 = vmatpush.bf16.msra.mxu0 %v2560
        %2785 = vmatpush.bf16.msra.mxu0 %v2556
        %2786 = vmatpush.bf16.msra.mxu0 %v2552
        %2787 = vmatpush.bf16.msra.mxu0 %v2548
        %2788 = vmatmul.bf16.gmra.mxu0 %v2387
        %v2789 = vpop.f32.mrf.mxu0
        %v2790 = vadd.f32 %v2252, %v2789
        %v2791 = vpop.f32.mrf.mxu0
        %v2792 = vadd.f32 %v2252, %v2791
        %2793 = vmatmul.bf16.gmra.mxu0 %v2388
        %v2794 = vpop.f32.mrf.mxu0
        %v2795 = vadd.f32 %v2252, %v2794
        %v2796 = vpop.f32.mrf.mxu0
        %v2797 = vadd.f32 %v2252, %v2796
        %2798 = vmatmul.bf16.gmra.mxu0 %v2389
        %v2799 = vpop.f32.mrf.mxu0
        %v2800 = vadd.f32 %v2252, %v2799
        %v2801 = vpop.f32.mrf.mxu0
        %v2802 = vadd.f32 %v2252, %v2801
        %2803 = vmatmul.bf16.gmra.mxu0 %v2390
        %v2804 = vpop.f32.mrf.mxu0
        %v2805 = vadd.f32 %v2252, %v2804
        %v2806 = vpop.f32.mrf.mxu0
        %v2807 = vadd.f32 %v2252, %v2806
        %2808 = vmatmul.bf16.gmra.mxu0 %v2391
        %v2809 = vpop.f32.mrf.mxu0
        %v2810 = vadd.f32 %v2252, %v2809
        %v2811 = vpop.f32.mrf.mxu0
        %v2812 = vadd.f32 %v2252, %v2811
        %2813 = vmatmul.bf16.gmra.mxu0 %v2392
        %v2814 = vpop.f32.mrf.mxu0
        %v2815 = vadd.f32 %v2252, %v2814
        %v2816 = vpop.f32.mrf.mxu0
        %v2817 = vadd.f32 %v2252, %v2816
        %2818 = vmatmul.bf16.gmra.mxu0 %v2393
        %v2819 = vpop.f32.mrf.mxu0
        %v2820 = vadd.f32 %v2252, %v2819
        %v2821 = vpop.f32.mrf.mxu0
        %v2822 = vadd.f32 %v2252, %v2821
        %2823 = vmatmul.bf16.gmra.mxu0 %v2394
        %v2824 = vpop.f32.mrf.mxu0
        %v2825 = vadd.f32 %v2252, %v2824
        %v2826 = vpop.f32.mrf.mxu0
        %v2827 = vadd.f32 %v2252, %v2826
        %2828 = vmatmul.bf16.gmra.mxu0 %v2395
        %v2829 = vpop.f32.mrf.mxu0
        %v2830 = vadd.f32 %v2252, %v2829
        %v2831 = vpop.f32.mrf.mxu0
        %v2832 = vadd.f32 %v2252, %v2831
        %2833 = vmatmul.bf16.gmra.mxu0 %v2396
        %v2834 = vpop.f32.mrf.mxu0
        %v2835 = vadd.f32 %v2252, %v2834
        %v2836 = vpop.f32.mrf.mxu0
        %v2837 = vadd.f32 %v2252, %v2836
        %2838 = vmatmul.bf16.gmra.mxu0 %v2397
        %v2839 = vpop.f32.mrf.mxu0
        %v2840 = vadd.f32 %v2252, %v2839
        %v2841 = vpop.f32.mrf.mxu0
        %v2842 = vadd.f32 %v2252, %v2841
        %2843 = vmatmul.bf16.gmra.mxu0 %v2398
        %v2844 = vpop.f32.mrf.mxu0
        %v2845 = vadd.f32 %v2252, %v2844
        %v2846 = vpop.f32.mrf.mxu0
        %v2847 = vadd.f32 %v2252, %v2846
        %2848 = vmatmul.bf16.gmra.mxu0 %v2399
        %v2849 = vpop.f32.mrf.mxu0
        %v2850 = vadd.f32 %v2252, %v2849
        %v2851 = vpop.f32.mrf.mxu0
        %v2852 = vadd.f32 %v2252, %v2851
        %2853 = vmatmul.bf16.gmra.mxu0 %v2400
        %v2854 = vpop.f32.mrf.mxu0
        %v2855 = vadd.f32 %v2252, %v2854
        %v2856 = vpop.f32.mrf.mxu0
        %v2857 = vadd.f32 %v2252, %v2856
        %2858 = vmatmul.bf16.gmra.mxu0 %v2401
        %v2859 = vpop.f32.mrf.mxu0
        %v2860 = vadd.f32 %v2252, %v2859
        %v2861 = vpop.f32.mrf.mxu0
        %v2862 = vadd.f32 %v2252, %v2861
        %2863 = vmatmul.bf16.gmra.mxu0 %v2402
        %v2864 = vpop.f32.mrf.mxu0
        %v2865 = vadd.f32 %v2252, %v2864
        %v2866 = vpop.f32.mrf.mxu0
        %v2867 = vadd.f32 %v2252, %v2866
        %2868 = vmatmul.bf16.gmra.mxu0 %v2403
        %v2869 = vpop.f32.mrf.mxu0
        %v2870 = vadd.f32 %v2252, %v2869
        %v2871 = vpop.f32.mrf.mxu0
        %v2872 = vadd.f32 %v2252, %v2871
        %2873 = vmatmul.bf16.gmra.mxu0 %v2404
        %v2874 = vpop.f32.mrf.mxu0
        %v2875 = vadd.f32 %v2252, %v2874
        %v2876 = vpop.f32.mrf.mxu0
        %v2877 = vadd.f32 %v2252, %v2876
        %2878 = vmatmul.bf16.gmra.mxu0 %v2405
        %v2879 = vpop.f32.mrf.mxu0
        %v2880 = vadd.f32 %v2252, %v2879
        %v2881 = vpop.f32.mrf.mxu0
        %v2882 = vadd.f32 %v2252, %v2881
        %2883 = vmatmul.bf16.gmra.mxu0 %v2406
        %v2884 = vpop.f32.mrf.mxu0
        %v2885 = vadd.f32 %v2252, %v2884
        %v2886 = vpop.f32.mrf.mxu0
        %v2887 = vadd.f32 %v2252, %v2886
        %2888 = vmatmul.bf16.gmra.mxu0 %v2407
        %v2889 = vpop.f32.mrf.mxu0
        %v2890 = vadd.f32 %v2252, %v2889
        %v2891 = vpop.f32.mrf.mxu0
        %v2892 = vadd.f32 %v2252, %v2891
        %2893 = vmatmul.bf16.gmra.mxu0 %v2408
        %v2894 = vpop.f32.mrf.mxu0
        %v2895 = vadd.f32 %v2252, %v2894
        %v2896 = vpop.f32.mrf.mxu0
        %v2897 = vadd.f32 %v2252, %v2896
        %2898 = vmatmul.bf16.gmra.mxu0 %v2409
        %v2899 = vpop.f32.mrf.mxu0
        %v2900 = vadd.f32 %v2252, %v2899
        %v2901 = vpop.f32.mrf.mxu0
        %v2902 = vadd.f32 %v2252, %v2901
        %2903 = vmatmul.bf16.gmra.mxu0 %v2410
        %v2904 = vpop.f32.mrf.mxu0
        %v2905 = vadd.f32 %v2252, %v2904
        %v2906 = vpop.f32.mrf.mxu0
        %v2907 = vadd.f32 %v2252, %v2906
        %2908 = vmatmul.bf16.gmra.mxu0 %v2411
        %v2909 = vpop.f32.mrf.mxu0
        %v2910 = vadd.f32 %v2252, %v2909
        %v2911 = vpop.f32.mrf.mxu0
        %v2912 = vadd.f32 %v2252, %v2911
        %2913 = vmatmul.bf16.gmra.mxu0 %v2412
        %v2914 = vpop.f32.mrf.mxu0
        %v2915 = vadd.f32 %v2252, %v2914
        %v2916 = vpop.f32.mrf.mxu0
        %v2917 = vadd.f32 %v2252, %v2916
        %2918 = vmatmul.bf16.gmra.mxu0 %v2413
        %v2919 = vpop.f32.mrf.mxu0
        %v2920 = vadd.f32 %v2252, %v2919
        %v2921 = vpop.f32.mrf.mxu0
        %v2922 = vadd.f32 %v2252, %v2921
        %2923 = vmatmul.bf16.gmra.mxu0 %v2414
        %v2924 = vpop.f32.mrf.mxu0
        %v2925 = vadd.f32 %v2252, %v2924
        %v2926 = vpop.f32.mrf.mxu0
        %v2927 = vadd.f32 %v2252, %v2926
        %2928 = vmatmul.bf16.gmra.mxu0 %v2415
        %v2929 = vpop.f32.mrf.mxu0
        %v2930 = vadd.f32 %v2252, %v2929
        %v2931 = vpop.f32.mrf.mxu0
        %v2932 = vadd.f32 %v2252, %v2931
        %2933 = vmatmul.bf16.gmra.mxu0 %v2416
        %v2934 = vpop.f32.mrf.mxu0
        %v2935 = vadd.f32 %v2252, %v2934
        %v2936 = vpop.f32.mrf.mxu0
        %v2937 = vadd.f32 %v2252, %v2936
        %2938 = vmatmul.bf16.gmra.mxu0 %v2417
        %v2939 = vpop.f32.mrf.mxu0
        %v2940 = vadd.f32 %v2252, %v2939
        %v2941 = vpop.f32.mrf.mxu0
        %v2942 = vadd.f32 %v2252, %v2941
        %2943 = vmatmul.bf16.gmra.mxu0 %v2418
        %v2944 = vpop.f32.mrf.mxu0
        %v2945 = vadd.f32 %v2252, %v2944
        %v2946 = vpop.f32.mrf.mxu0
        %v2947 = vadd.f32 %v2252, %v2946
        %2948 = vdwg.mxu0
        %2949 = vmatpush.bf16.msra.mxu0 %v2577
        %2950 = vmatpush.bf16.msra.mxu0 %v2573
        %2951 = vmatpush.bf16.msra.mxu0 %v2569
        %2952 = vmatpush.bf16.msra.mxu0 %v2565
        %2953 = vmatpush.bf16.msra.mxu0 %v2561
        %2954 = vmatpush.bf16.msra.mxu0 %v2557
        %2955 = vmatpush.bf16.msra.mxu0 %v2553
        %2956 = vmatpush.bf16.msra.mxu0 %v2549
        %2957 = vmatmul.bf16.gmra.mxu0 %v2387
        %v2958 = vpop.f32.mrf.mxu0
        %v2959 = vadd.f32 %v2253, %v2958
        %v2960 = vpop.f32.mrf.mxu0
        %v2961 = vadd.f32 %v2253, %v2960
        %2962 = vmatmul.bf16.gmra.mxu0 %v2388
        %v2963 = vpop.f32.mrf.mxu0
        %v2964 = vadd.f32 %v2253, %v2963
        %v2965 = vpop.f32.mrf.mxu0
        %v2966 = vadd.f32 %v2253, %v2965
        %2967 = vmatmul.bf16.gmra.mxu0 %v2389
        %v2968 = vpop.f32.mrf.mxu0
        %v2969 = vadd.f32 %v2253, %v2968
        %v2970 = vpop.f32.mrf.mxu0
        %v2971 = vadd.f32 %v2253, %v2970
        %2972 = vmatmul.bf16.gmra.mxu0 %v2390
        %v2973 = vpop.f32.mrf.mxu0
        %v2974 = vadd.f32 %v2253, %v2973
        %v2975 = vpop.f32.mrf.mxu0
        %v2976 = vadd.f32 %v2253, %v2975
        %2977 = vmatmul.bf16.gmra.mxu0 %v2391
        %v2978 = vpop.f32.mrf.mxu0
        %v2979 = vadd.f32 %v2253, %v2978
        %v2980 = vpop.f32.mrf.mxu0
        %v2981 = vadd.f32 %v2253, %v2980
        %2982 = vmatmul.bf16.gmra.mxu0 %v2392
        %v2983 = vpop.f32.mrf.mxu0
        %v2984 = vadd.f32 %v2253, %v2983
        %v2985 = vpop.f32.mrf.mxu0
        %v2986 = vadd.f32 %v2253, %v2985
        %2987 = vmatmul.bf16.gmra.mxu0 %v2393
        %v2988 = vpop.f32.mrf.mxu0
        %v2989 = vadd.f32 %v2253, %v2988
        %v2990 = vpop.f32.mrf.mxu0
        %v2991 = vadd.f32 %v2253, %v2990
        %2992 = vmatmul.bf16.gmra.mxu0 %v2394
        %v2993 = vpop.f32.mrf.mxu0
        %v2994 = vadd.f32 %v2253, %v2993
        %v2995 = vpop.f32.mrf.mxu0
        %v2996 = vadd.f32 %v2253, %v2995
        %2997 = vmatmul.bf16.gmra.mxu0 %v2395
        %v2998 = vpop.f32.mrf.mxu0
        %v2999 = vadd.f32 %v2253, %v2998
        %v3000 = vpop.f32.mrf.mxu0
        %v3001 = vadd.f32 %v2253, %v3000
        %3002 = vmatmul.bf16.gmra.mxu0 %v2396
        %v3003 = vpop.f32.mrf.mxu0
        %v3004 = vadd.f32 %v2253, %v3003
        %v3005 = vpop.f32.mrf.mxu0
        %v3006 = vadd.f32 %v2253, %v3005
        %3007 = vmatmul.bf16.gmra.mxu0 %v2397
        %v3008 = vpop.f32.mrf.mxu0
        %v3009 = vadd.f32 %v2253, %v3008
        %v3010 = vpop.f32.mrf.mxu0
        %v3011 = vadd.f32 %v2253, %v3010
        %3012 = vmatmul.bf16.gmra.mxu0 %v2398
        %v3013 = vpop.f32.mrf.mxu0
        %v3014 = vadd.f32 %v2253, %v3013
        %v3015 = vpop.f32.mrf.mxu0
        %v3016 = vadd.f32 %v2253, %v3015
        %3017 = vmatmul.bf16.gmra.mxu0 %v2399
        %v3018 = vpop.f32.mrf.mxu0
        %v3019 = vadd.f32 %v2253, %v3018
        %v3020 = vpop.f32.mrf.mxu0
        %v3021 = vadd.f32 %v2253, %v3020
        %3022 = vmatmul.bf16.gmra.mxu0 %v2400
        %v3023 = vpop.f32.mrf.mxu0
        %v3024 = vadd.f32 %v2253, %v3023
        %v3025 = vpop.f32.mrf.mxu0
        %v3026 = vadd.f32 %v2253, %v3025
        %3027 = vmatmul.bf16.gmra.mxu0 %v2401
        %v3028 = vpop.f32.mrf.mxu0
        %v3029 = vadd.f32 %v2253, %v3028
        %v3030 = vpop.f32.mrf.mxu0
        %v3031 = vadd.f32 %v2253, %v3030
        %3032 = vmatmul.bf16.gmra.mxu0 %v2402
        %v3033 = vpop.f32.mrf.mxu0
        %v3034 = vadd.f32 %v2253, %v3033
        %v3035 = vpop.f32.mrf.mxu0
        %v3036 = vadd.f32 %v2253, %v3035
        %3037 = vmatmul.bf16.gmra.mxu0 %v2403
        %v3038 = vpop.f32.mrf.mxu0
        %v3039 = vadd.f32 %v2253, %v3038
        %v3040 = vpop.f32.mrf.mxu0
        %v3041 = vadd.f32 %v2253, %v3040
        %3042 = vmatmul.bf16.gmra.mxu0 %v2404
        %v3043 = vpop.f32.mrf.mxu0
        %v3044 = vadd.f32 %v2253, %v3043
        %v3045 = vpop.f32.mrf.mxu0
        %v3046 = vadd.f32 %v2253, %v3045
        %3047 = vmatmul.bf16.gmra.mxu0 %v2405
        %v3048 = vpop.f32.mrf.mxu0
        %v3049 = vadd.f32 %v2253, %v3048
        %v3050 = vpop.f32.mrf.mxu0
        %v3051 = vadd.f32 %v2253, %v3050
        %3052 = vmatmul.bf16.gmra.mxu0 %v2406
        %v3053 = vpop.f32.mrf.mxu0
        %v3054 = vadd.f32 %v2253, %v3053
        %v3055 = vpop.f32.mrf.mxu0
        %v3056 = vadd.f32 %v2253, %v3055
        %3057 = vmatmul.bf16.gmra.mxu0 %v2407
        %v3058 = vpop.f32.mrf.mxu0
        %v3059 = vadd.f32 %v2253, %v3058
        %v3060 = vpop.f32.mrf.mxu0
        %v3061 = vadd.f32 %v2253, %v3060
        %3062 = vmatmul.bf16.gmra.mxu0 %v2408
        %v3063 = vpop.f32.mrf.mxu0
        %v3064 = vadd.f32 %v2253, %v3063
        %v3065 = vpop.f32.mrf.mxu0
        %v3066 = vadd.f32 %v2253, %v3065
        %3067 = vmatmul.bf16.gmra.mxu0 %v2409
        %v3068 = vpop.f32.mrf.mxu0
        %v3069 = vadd.f32 %v2253, %v3068
        %v3070 = vpop.f32.mrf.mxu0
        %v3071 = vadd.f32 %v2253, %v3070
        %3072 = vmatmul.bf16.gmra.mxu0 %v2410
        %v3073 = vpop.f32.mrf.mxu0
        %v3074 = vadd.f32 %v2253, %v3073
        %v3075 = vpop.f32.mrf.mxu0
        %v3076 = vadd.f32 %v2253, %v3075
        %3077 = vmatmul.bf16.gmra.mxu0 %v2411
        %v3078 = vpop.f32.mrf.mxu0
        %v3079 = vadd.f32 %v2253, %v3078
        %v3080 = vpop.f32.mrf.mxu0
        %v3081 = vadd.f32 %v2253, %v3080
        %3082 = vmatmul.bf16.gmra.mxu0 %v2412
        %v3083 = vpop.f32.mrf.mxu0
        %v3084 = vadd.f32 %v2253, %v3083
        %v3085 = vpop.f32.mrf.mxu0
        %v3086 = vadd.f32 %v2253, %v3085
        %3087 = vmatmul.bf16.gmra.mxu0 %v2413
        %v3088 = vpop.f32.mrf.mxu0
        %v3089 = vadd.f32 %v2253, %v3088
        %v3090 = vpop.f32.mrf.mxu0
        %v3091 = vadd.f32 %v2253, %v3090
        %3092 = vmatmul.bf16.gmra.mxu0 %v2414
        %v3093 = vpop.f32.mrf.mxu0
        %v3094 = vadd.f32 %v2253, %v3093
        %v3095 = vpop.f32.mrf.mxu0
        %v3096 = vadd.f32 %v2253, %v3095
        %3097 = vmatmul.bf16.gmra.mxu0 %v2415
        %v3098 = vpop.f32.mrf.mxu0
        %v3099 = vadd.f32 %v2253, %v3098
        %v3100 = vpop.f32.mrf.mxu0
        %v3101 = vadd.f32 %v2253, %v3100
        %3102 = vmatmul.bf16.gmra.mxu0 %v2416
        %v3103 = vpop.f32.mrf.mxu0
        %v3104 = vadd.f32 %v2253, %v3103
        %v3105 = vpop.f32.mrf.mxu0
        %v3106 = vadd.f32 %v2253, %v3105
        %3107 = vmatmul.bf16.gmra.mxu0 %v2417
        %v3108 = vpop.f32.mrf.mxu0
        %v3109 = vadd.f32 %v2253, %v3108
        %v3110 = vpop.f32.mrf.mxu0
        %v3111 = vadd.f32 %v2253, %v3110
        %3112 = vmatmul.bf16.gmra.mxu0 %v2418
        %v3113 = vpop.f32.mrf.mxu0
        %v3114 = vadd.f32 %v2253, %v3113
        %v3115 = vpop.f32.mrf.mxu0
        %v3116 = vadd.f32 %v2253, %v3115
        %3117 = vdwg.mxu0
        %3118 = vmatpush.bf16.msra.mxu0 %v2578
        %3119 = vmatpush.bf16.msra.mxu0 %v2574
        %3120 = vmatpush.bf16.msra.mxu0 %v2570
        %3121 = vmatpush.bf16.msra.mxu0 %v2566
        %3122 = vmatpush.bf16.msra.mxu0 %v2562
        %3123 = vmatpush.bf16.msra.mxu0 %v2558
        %3124 = vmatpush.bf16.msra.mxu0 %v2554
        %3125 = vmatpush.bf16.msra.mxu0 %v2550
        %3126 = vmatmul.bf16.gmra.mxu0 %v2387
        %v3127 = vpop.f32.mrf.mxu0
        %v3128 = vadd.f32 %v2254, %v3127
        %v3129 = vpop.f32.mrf.mxu0
        %v3130 = vadd.f32 %v2254, %v3129
        %3131 = vmatmul.bf16.gmra.mxu0 %v2388
        %v3132 = vpop.f32.mrf.mxu0
        %v3133 = vadd.f32 %v2254, %v3132
        %v3134 = vpop.f32.mrf.mxu0
        %v3135 = vadd.f32 %v2254, %v3134
        %3136 = vmatmul.bf16.gmra.mxu0 %v2389
        %v3137 = vpop.f32.mrf.mxu0
        %v3138 = vadd.f32 %v2254, %v3137
        %v3139 = vpop.f32.mrf.mxu0
        %v3140 = vadd.f32 %v2254, %v3139
        %3141 = vmatmul.bf16.gmra.mxu0 %v2390
        %v3142 = vpop.f32.mrf.mxu0
        %v3143 = vadd.f32 %v2254, %v3142
        %v3144 = vpop.f32.mrf.mxu0
        %v3145 = vadd.f32 %v2254, %v3144
        %3146 = vmatmul.bf16.gmra.mxu0 %v2391
        %v3147 = vpop.f32.mrf.mxu0
        %v3148 = vadd.f32 %v2254, %v3147
        %v3149 = vpop.f32.mrf.mxu0
        %v3150 = vadd.f32 %v2254, %v3149
        %3151 = vmatmul.bf16.gmra.mxu0 %v2392
        %v3152 = vpop.f32.mrf.mxu0
        %v3153 = vadd.f32 %v2254, %v3152
        %v3154 = vpop.f32.mrf.mxu0
        %v3155 = vadd.f32 %v2254, %v3154
        %3156 = vmatmul.bf16.gmra.mxu0 %v2393
        %v3157 = vpop.f32.mrf.mxu0
        %v3158 = vadd.f32 %v2254, %v3157
        %v3159 = vpop.f32.mrf.mxu0
        %v3160 = vadd.f32 %v2254, %v3159
        %3161 = vmatmul.bf16.gmra.mxu0 %v2394
        %v3162 = vpop.f32.mrf.mxu0
        %v3163 = vadd.f32 %v2254, %v3162
        %v3164 = vpop.f32.mrf.mxu0
        %v3165 = vadd.f32 %v2254, %v3164
        %3166 = vmatmul.bf16.gmra.mxu0 %v2395
        %v3167 = vpop.f32.mrf.mxu0
        %v3168 = vadd.f32 %v2254, %v3167
        %v3169 = vpop.f32.mrf.mxu0
        %v3170 = vadd.f32 %v2254, %v3169
        %3171 = vmatmul.bf16.gmra.mxu0 %v2396
        %v3172 = vpop.f32.mrf.mxu0
        %v3173 = vadd.f32 %v2254, %v3172
        %v3174 = vpop.f32.mrf.mxu0
        %v3175 = vadd.f32 %v2254, %v3174
        %3176 = vmatmul.bf16.gmra.mxu0 %v2397
        %v3177 = vpop.f32.mrf.mxu0
        %v3178 = vadd.f32 %v2254, %v3177
        %v3179 = vpop.f32.mrf.mxu0
        %v3180 = vadd.f32 %v2254, %v3179
        %3181 = vmatmul.bf16.gmra.mxu0 %v2398
        %v3182 = vpop.f32.mrf.mxu0
        %v3183 = vadd.f32 %v2254, %v3182
        %v3184 = vpop.f32.mrf.mxu0
        %v3185 = vadd.f32 %v2254, %v3184
        %3186 = vmatmul.bf16.gmra.mxu0 %v2399
        %v3187 = vpop.f32.mrf.mxu0
        %v3188 = vadd.f32 %v2254, %v3187
        %v3189 = vpop.f32.mrf.mxu0
        %v3190 = vadd.f32 %v2254, %v3189
        %3191 = vmatmul.bf16.gmra.mxu0 %v2400
        %v3192 = vpop.f32.mrf.mxu0
        %v3193 = vadd.f32 %v2254, %v3192
        %v3194 = vpop.f32.mrf.mxu0
        %v3195 = vadd.f32 %v2254, %v3194
        %3196 = vmatmul.bf16.gmra.mxu0 %v2401
        %v3197 = vpop.f32.mrf.mxu0
        %v3198 = vadd.f32 %v2254, %v3197
        %v3199 = vpop.f32.mrf.mxu0
        %v3200 = vadd.f32 %v2254, %v3199
        %3201 = vmatmul.bf16.gmra.mxu0 %v2402
        %v3202 = vpop.f32.mrf.mxu0
        %v3203 = vadd.f32 %v2254, %v3202
        %v3204 = vpop.f32.mrf.mxu0
        %v3205 = vadd.f32 %v2254, %v3204
        %3206 = vmatmul.bf16.gmra.mxu0 %v2403
        %v3207 = vpop.f32.mrf.mxu0
        %v3208 = vadd.f32 %v2254, %v3207
        %v3209 = vpop.f32.mrf.mxu0
        %v3210 = vadd.f32 %v2254, %v3209
        %3211 = vmatmul.bf16.gmra.mxu0 %v2404
        %v3212 = vpop.f32.mrf.mxu0
        %v3213 = vadd.f32 %v2254, %v3212
        %v3214 = vpop.f32.mrf.mxu0
        %v3215 = vadd.f32 %v2254, %v3214
        %3216 = vmatmul.bf16.gmra.mxu0 %v2405
        %v3217 = vpop.f32.mrf.mxu0
        %v3218 = vadd.f32 %v2254, %v3217
        %v3219 = vpop.f32.mrf.mxu0
        %v3220 = vadd.f32 %v2254, %v3219
        %3221 = vmatmul.bf16.gmra.mxu0 %v2406
        %v3222 = vpop.f32.mrf.mxu0
        %v3223 = vadd.f32 %v2254, %v3222
        %v3224 = vpop.f32.mrf.mxu0
        %v3225 = vadd.f32 %v2254, %v3224
        %3226 = vmatmul.bf16.gmra.mxu0 %v2407
        %v3227 = vpop.f32.mrf.mxu0
        %v3228 = vadd.f32 %v2254, %v3227
        %v3229 = vpop.f32.mrf.mxu0
        %v3230 = vadd.f32 %v2254, %v3229
        %3231 = vmatmul.bf16.gmra.mxu0 %v2408
        %v3232 = vpop.f32.mrf.mxu0
        %v3233 = vadd.f32 %v2254, %v3232
        %v3234 = vpop.f32.mrf.mxu0
        %v3235 = vadd.f32 %v2254, %v3234
        %3236 = vmatmul.bf16.gmra.mxu0 %v2409
        %v3237 = vpop.f32.mrf.mxu0
        %v3238 = vadd.f32 %v2254, %v3237
        %v3239 = vpop.f32.mrf.mxu0
        %v3240 = vadd.f32 %v2254, %v3239
        %3241 = vmatmul.bf16.gmra.mxu0 %v2410
        %v3242 = vpop.f32.mrf.mxu0
        %v3243 = vadd.f32 %v2254, %v3242
        %v3244 = vpop.f32.mrf.mxu0
        %v3245 = vadd.f32 %v2254, %v3244
        %3246 = vmatmul.bf16.gmra.mxu0 %v2411
        %v3247 = vpop.f32.mrf.mxu0
        %v3248 = vadd.f32 %v2254, %v3247
        %v3249 = vpop.f32.mrf.mxu0
        %v3250 = vadd.f32 %v2254, %v3249
        %3251 = vmatmul.bf16.gmra.mxu0 %v2412
        %v3252 = vpop.f32.mrf.mxu0
        %v3253 = vadd.f32 %v2254, %v3252
        %v3254 = vpop.f32.mrf.mxu0
        %v3255 = vadd.f32 %v2254, %v3254
        %3256 = vmatmul.bf16.gmra.mxu0 %v2413
        %v3257 = vpop.f32.mrf.mxu0
        %v3258 = vadd.f32 %v2254, %v3257
        %v3259 = vpop.f32.mrf.mxu0
        %v3260 = vadd.f32 %v2254, %v3259
        %3261 = vmatmul.bf16.gmra.mxu0 %v2414
        %v3262 = vpop.f32.mrf.mxu0
        %v3263 = vadd.f32 %v2254, %v3262
        %v3264 = vpop.f32.mrf.mxu0
        %v3265 = vadd.f32 %v2254, %v3264
        %3266 = vmatmul.bf16.gmra.mxu0 %v2415
        %v3267 = vpop.f32.mrf.mxu0
        %v3268 = vadd.f32 %v2254, %v3267
        %v3269 = vpop.f32.mrf.mxu0
        %v3270 = vadd.f32 %v2254, %v3269
        %3271 = vmatmul.bf16.gmra.mxu0 %v2416
        %v3272 = vpop.f32.mrf.mxu0
        %v3273 = vadd.f32 %v2254, %v3272
        %v3274 = vpop.f32.mrf.mxu0
        %v3275 = vadd.f32 %v2254, %v3274
        %3276 = vmatmul.bf16.gmra.mxu0 %v2417
        %v3277 = vpop.f32.mrf.mxu0
        %v3278 = vadd.f32 %v2254, %v3277
        %v3279 = vpop.f32.mrf.mxu0
        %v3280 = vadd.f32 %v2254, %v3279
        %3281 = vmatmul.bf16.gmra.mxu0 %v2418
        %v3282 = vpop.f32.mrf.mxu0
        %v3283 = vadd.f32 %v2254, %v3282
        %v3284 = vpop.f32.mrf.mxu0
        %v3285 = vadd.f32 %v2254, %v3284
        %3286 = vdwg.mxu0
        %v3287 = vmax.f32 %v2621, 0.0
        %v3288 = vmax.f32 %v2790, 0.0
        %v3289 = vmax.f32 %v2959, 0.0
        %v3290 = vmax.f32 %v3128, 0.0
        %v3291 = vmax.f32 %v2623, 0.0
        %v3292 = vmax.f32 %v2792, 0.0
        %v3293 = vmax.f32 %v2961, 0.0
        %v3294 = vmax.f32 %v3130, 0.0
        %v3295 = vmax.f32 %v2626, 0.0
        %v3296 = vmax.f32 %v2795, 0.0
        %v3297 = vmax.f32 %v2964, 0.0
        %v3298 = vmax.f32 %v3133, 0.0
        %v3299 = vmax.f32 %v2628, 0.0
        %v3300 = vmax.f32 %v2797, 0.0
        %v3301 = vmax.f32 %v2966, 0.0
        %v3302 = vmax.f32 %v3135, 0.0
        %v3303 = vmax.f32 %v2631, 0.0
        %v3304 = vmax.f32 %v2800, 0.0
        %v3305 = vmax.f32 %v2969, 0.0
        %v3306 = vmax.f32 %v3138, 0.0
        %v3307 = vmax.f32 %v2633, 0.0
        %v3308 = vmax.f32 %v2802, 0.0
        %v3309 = vmax.f32 %v2971, 0.0
        %v3310 = vmax.f32 %v3140, 0.0
        %v3311 = vmax.f32 %v2636, 0.0
        %v3312 = vmax.f32 %v2805, 0.0
        %v3313 = vmax.f32 %v2974, 0.0
        %v3314 = vmax.f32 %v3143, 0.0
        %v3315 = vmax.f32 %v2638, 0.0
        %v3316 = vmax.f32 %v2807, 0.0
        %v3317 = vmax.f32 %v2976, 0.0
        %v3318 = vmax.f32 %v3145, 0.0
        %v3319 = vmax.f32 %v2641, 0.0
        %v3320 = vmax.f32 %v2810, 0.0
        %v3321 = vmax.f32 %v2979, 0.0
        %v3322 = vmax.f32 %v3148, 0.0
        %v3323 = vmax.f32 %v2643, 0.0
        %v3324 = vmax.f32 %v2812, 0.0
        %v3325 = vmax.f32 %v2981, 0.0
        %v3326 = vmax.f32 %v3150, 0.0
        %v3327 = vmax.f32 %v2646, 0.0
        %v3328 = vmax.f32 %v2815, 0.0
        %v3329 = vmax.f32 %v2984, 0.0
        %v3330 = vmax.f32 %v3153, 0.0
        %v3331 = vmax.f32 %v2648, 0.0
        %v3332 = vmax.f32 %v2817, 0.0
        %v3333 = vmax.f32 %v2986, 0.0
        %v3334 = vmax.f32 %v3155, 0.0
        %v3335 = vmax.f32 %v2651, 0.0
        %v3336 = vmax.f32 %v2820, 0.0
        %v3337 = vmax.f32 %v2989, 0.0
        %v3338 = vmax.f32 %v3158, 0.0
        %v3339 = vmax.f32 %v2653, 0.0
        %v3340 = vmax.f32 %v2822, 0.0
        %v3341 = vmax.f32 %v2991, 0.0
        %v3342 = vmax.f32 %v3160, 0.0
        %v3343 = vmax.f32 %v2656, 0.0
        %v3344 = vmax.f32 %v2825, 0.0
        %v3345 = vmax.f32 %v2994, 0.0
        %v3346 = vmax.f32 %v3163, 0.0
        %v3347 = vmax.f32 %v2658, 0.0
        %v3348 = vmax.f32 %v2827, 0.0
        %v3349 = vmax.f32 %v2996, 0.0
        %v3350 = vmax.f32 %v3165, 0.0
        %v3351 = vmax.f32 %v2661, 0.0
        %v3352 = vmax.f32 %v2830, 0.0
        %v3353 = vmax.f32 %v2999, 0.0
        %v3354 = vmax.f32 %v3168, 0.0
        %v3355 = vmax.f32 %v2663, 0.0
        %v3356 = vmax.f32 %v2832, 0.0
        %v3357 = vmax.f32 %v3001, 0.0
        %v3358 = vmax.f32 %v3170, 0.0
        %v3359 = vmax.f32 %v2666, 0.0
        %v3360 = vmax.f32 %v2835, 0.0
        %v3361 = vmax.f32 %v3004, 0.0
        %v3362 = vmax.f32 %v3173, 0.0
        %v3363 = vmax.f32 %v2668, 0.0
        %v3364 = vmax.f32 %v2837, 0.0
        %v3365 = vmax.f32 %v3006, 0.0
        %v3366 = vmax.f32 %v3175, 0.0
        %v3367 = vmax.f32 %v2671, 0.0
        %v3368 = vmax.f32 %v2840, 0.0
        %v3369 = vmax.f32 %v3009, 0.0
        %v3370 = vmax.f32 %v3178, 0.0
        %v3371 = vmax.f32 %v2673, 0.0
        %v3372 = vmax.f32 %v2842, 0.0
        %v3373 = vmax.f32 %v3011, 0.0
        %v3374 = vmax.f32 %v3180, 0.0
        %v3375 = vmax.f32 %v2676, 0.0
        %v3376 = vmax.f32 %v2845, 0.0
        %v3377 = vmax.f32 %v3014, 0.0
        %v3378 = vmax.f32 %v3183, 0.0
        %v3379 = vmax.f32 %v2678, 0.0
        %v3380 = vmax.f32 %v2847, 0.0
        %v3381 = vmax.f32 %v3016, 0.0
        %v3382 = vmax.f32 %v3185, 0.0
        %v3383 = vmax.f32 %v2681, 0.0
        %v3384 = vmax.f32 %v2850, 0.0
        %v3385 = vmax.f32 %v3019, 0.0
        %v3386 = vmax.f32 %v3188, 0.0
        %v3387 = vmax.f32 %v2683, 0.0
        %v3388 = vmax.f32 %v2852, 0.0
        %v3389 = vmax.f32 %v3021, 0.0
        %v3390 = vmax.f32 %v3190, 0.0
        %v3391 = vmax.f32 %v2686, 0.0
        %v3392 = vmax.f32 %v2855, 0.0
        %v3393 = vmax.f32 %v3024, 0.0
        %v3394 = vmax.f32 %v3193, 0.0
        %v3395 = vmax.f32 %v2688, 0.0
        %v3396 = vmax.f32 %v2857, 0.0
        %v3397 = vmax.f32 %v3026, 0.0
        %v3398 = vmax.f32 %v3195, 0.0
        %v3399 = vmax.f32 %v2691, 0.0
        %v3400 = vmax.f32 %v2860, 0.0
        %v3401 = vmax.f32 %v3029, 0.0
        %v3402 = vmax.f32 %v3198, 0.0
        %v3403 = vmax.f32 %v2693, 0.0
        %v3404 = vmax.f32 %v2862, 0.0
        %v3405 = vmax.f32 %v3031, 0.0
        %v3406 = vmax.f32 %v3200, 0.0
        %v3407 = vmax.f32 %v2696, 0.0
        %v3408 = vmax.f32 %v2865, 0.0
        %v3409 = vmax.f32 %v3034, 0.0
        %v3410 = vmax.f32 %v3203, 0.0
        %v3411 = vmax.f32 %v2698, 0.0
        %v3412 = vmax.f32 %v2867, 0.0
        %v3413 = vmax.f32 %v3036, 0.0
        %v3414 = vmax.f32 %v3205, 0.0
        %v3415 = vmax.f32 %v2701, 0.0
        %v3416 = vmax.f32 %v2870, 0.0
        %v3417 = vmax.f32 %v3039, 0.0
        %v3418 = vmax.f32 %v3208, 0.0
        %v3419 = vmax.f32 %v2703, 0.0
        %v3420 = vmax.f32 %v2872, 0.0
        %v3421 = vmax.f32 %v3041, 0.0
        %v3422 = vmax.f32 %v3210, 0.0
        %v3423 = vmax.f32 %v2706, 0.0
        %v3424 = vmax.f32 %v2875, 0.0
        %v3425 = vmax.f32 %v3044, 0.0
        %v3426 = vmax.f32 %v3213, 0.0
        %v3427 = vmax.f32 %v2708, 0.0
        %v3428 = vmax.f32 %v2877, 0.0
        %v3429 = vmax.f32 %v3046, 0.0
        %v3430 = vmax.f32 %v3215, 0.0
        %v3431 = vmax.f32 %v2711, 0.0
        %v3432 = vmax.f32 %v2880, 0.0
        %v3433 = vmax.f32 %v3049, 0.0
        %v3434 = vmax.f32 %v3218, 0.0
        %v3435 = vmax.f32 %v2713, 0.0
        %v3436 = vmax.f32 %v2882, 0.0
        %v3437 = vmax.f32 %v3051, 0.0
        %v3438 = vmax.f32 %v3220, 0.0
        %v3439 = vmax.f32 %v2716, 0.0
        %v3440 = vmax.f32 %v2885, 0.0
        %v3441 = vmax.f32 %v3054, 0.0
        %v3442 = vmax.f32 %v3223, 0.0
        %v3443 = vmax.f32 %v2718, 0.0
        %v3444 = vmax.f32 %v2887, 0.0
        %v3445 = vmax.f32 %v3056, 0.0
        %v3446 = vmax.f32 %v3225, 0.0
        %v3447 = vmax.f32 %v2721, 0.0
        %v3448 = vmax.f32 %v2890, 0.0
        %v3449 = vmax.f32 %v3059, 0.0
        %v3450 = vmax.f32 %v3228, 0.0
        %v3451 = vmax.f32 %v2723, 0.0
        %v3452 = vmax.f32 %v2892, 0.0
        %v3453 = vmax.f32 %v3061, 0.0
        %v3454 = vmax.f32 %v3230, 0.0
        %v3455 = vmax.f32 %v2726, 0.0
        %v3456 = vmax.f32 %v2895, 0.0
        %v3457 = vmax.f32 %v3064, 0.0
        %v3458 = vmax.f32 %v3233, 0.0
        %v3459 = vmax.f32 %v2728, 0.0
        %v3460 = vmax.f32 %v2897, 0.0
        %v3461 = vmax.f32 %v3066, 0.0
        %v3462 = vmax.f32 %v3235, 0.0
        %v3463 = vmax.f32 %v2731, 0.0
        %v3464 = vmax.f32 %v2900, 0.0
        %v3465 = vmax.f32 %v3069, 0.0
        %v3466 = vmax.f32 %v3238, 0.0
        %v3467 = vmax.f32 %v2733, 0.0
        %v3468 = vmax.f32 %v2902, 0.0
        %v3469 = vmax.f32 %v3071, 0.0
        %v3470 = vmax.f32 %v3240, 0.0
        %v3471 = vmax.f32 %v2736, 0.0
        %v3472 = vmax.f32 %v2905, 0.0
        %v3473 = vmax.f32 %v3074, 0.0
        %v3474 = vmax.f32 %v3243, 0.0
        %v3475 = vmax.f32 %v2738, 0.0
        %v3476 = vmax.f32 %v2907, 0.0
        %v3477 = vmax.f32 %v3076, 0.0
        %v3478 = vmax.f32 %v3245, 0.0
        %v3479 = vmax.f32 %v2741, 0.0
        %v3480 = vmax.f32 %v2910, 0.0
        %v3481 = vmax.f32 %v3079, 0.0
        %v3482 = vmax.f32 %v3248, 0.0
        %v3483 = vmax.f32 %v2743, 0.0
        %v3484 = vmax.f32 %v2912, 0.0
        %v3485 = vmax.f32 %v3081, 0.0
        %v3486 = vmax.f32 %v3250, 0.0
        %v3487 = vmax.f32 %v2746, 0.0
        %v3488 = vmax.f32 %v2915, 0.0
        %v3489 = vmax.f32 %v3084, 0.0
        %v3490 = vmax.f32 %v3253, 0.0
        %v3491 = vmax.f32 %v2748, 0.0
        %v3492 = vmax.f32 %v2917, 0.0
        %v3493 = vmax.f32 %v3086, 0.0
        %v3494 = vmax.f32 %v3255, 0.0
        %v3495 = vmax.f32 %v2751, 0.0
        %v3496 = vmax.f32 %v2920, 0.0
        %v3497 = vmax.f32 %v3089, 0.0
        %v3498 = vmax.f32 %v3258, 0.0
        %v3499 = vmax.f32 %v2753, 0.0
        %v3500 = vmax.f32 %v2922, 0.0
        %v3501 = vmax.f32 %v3091, 0.0
        %v3502 = vmax.f32 %v3260, 0.0
        %v3503 = vmax.f32 %v2756, 0.0
        %v3504 = vmax.f32 %v2925, 0.0
        %v3505 = vmax.f32 %v3094, 0.0
        %v3506 = vmax.f32 %v3263, 0.0
        %v3507 = vmax.f32 %v2758, 0.0
        %v3508 = vmax.f32 %v2927, 0.0
        %v3509 = vmax.f32 %v3096, 0.0
        %v3510 = vmax.f32 %v3265, 0.0
        %v3511 = vmax.f32 %v2761, 0.0
        %v3512 = vmax.f32 %v2930, 0.0
        %v3513 = vmax.f32 %v3099, 0.0
        %v3514 = vmax.f32 %v3268, 0.0
        %v3515 = vmax.f32 %v2763, 0.0
        %v3516 = vmax.f32 %v2932, 0.0
        %v3517 = vmax.f32 %v3101, 0.0
        %v3518 = vmax.f32 %v3270, 0.0
        %v3519 = vmax.f32 %v2766, 0.0
        %v3520 = vmax.f32 %v2935, 0.0
        %v3521 = vmax.f32 %v3104, 0.0
        %v3522 = vmax.f32 %v3273, 0.0
        %v3523 = vmax.f32 %v2768, 0.0
        %v3524 = vmax.f32 %v2937, 0.0
        %v3525 = vmax.f32 %v3106, 0.0
        %v3526 = vmax.f32 %v3275, 0.0
        %v3527 = vmax.f32 %v2771, 0.0
        %v3528 = vmax.f32 %v2940, 0.0
        %v3529 = vmax.f32 %v3109, 0.0
        %v3530 = vmax.f32 %v3278, 0.0
        %v3531 = vmax.f32 %v2773, 0.0
        %v3532 = vmax.f32 %v2942, 0.0
        %v3533 = vmax.f32 %v3111, 0.0
        %v3534 = vmax.f32 %v3280, 0.0
        %v3535 = vmax.f32 %v2776, 0.0
        %v3536 = vmax.f32 %v2945, 0.0
        %v3537 = vmax.f32 %v3114, 0.0
        %v3538 = vmax.f32 %v3283, 0.0
        %v3539 = vmax.f32 %v2778, 0.0
        %v3540 = vmax.f32 %v2947, 0.0
        %v3541 = vmax.f32 %v3116, 0.0
        %v3542 = vmax.f32 %v3285, 0.0
        %v3543 = vpack.c.bf16 %v3291, %v3287
        %v3544 = vpack.c.bf16 %v3292, %v3288
        %v3545 = vpack.c.bf16 %v3293, %v3289
        %v3546 = vpack.c.bf16 %v3294, %v3290
        %v3547 = vpack.c.bf16 %v3299, %v3295
        %v3548 = vpack.c.bf16 %v3300, %v3296
        %v3549 = vpack.c.bf16 %v3301, %v3297
        %v3550 = vpack.c.bf16 %v3302, %v3298
        %v3551 = vpack.c.bf16 %v3307, %v3303
        %v3552 = vpack.c.bf16 %v3308, %v3304
        %v3553 = vpack.c.bf16 %v3309, %v3305
        %v3554 = vpack.c.bf16 %v3310, %v3306
        %v3555 = vpack.c.bf16 %v3315, %v3311
        %v3556 = vpack.c.bf16 %v3316, %v3312
        %v3557 = vpack.c.bf16 %v3317, %v3313
        %v3558 = vpack.c.bf16 %v3318, %v3314
        %v3559 = vpack.c.bf16 %v3323, %v3319
        %v3560 = vpack.c.bf16 %v3324, %v3320
        %v3561 = vpack.c.bf16 %v3325, %v3321
        %v3562 = vpack.c.bf16 %v3326, %v3322
        %v3563 = vpack.c.bf16 %v3331, %v3327
        %v3564 = vpack.c.bf16 %v3332, %v3328
        %v3565 = vpack.c.bf16 %v3333, %v3329
        %v3566 = vpack.c.bf16 %v3334, %v3330
        %v3567 = vpack.c.bf16 %v3339, %v3335
        %v3568 = vpack.c.bf16 %v3340, %v3336
        %v3569 = vpack.c.bf16 %v3341, %v3337
        %v3570 = vpack.c.bf16 %v3342, %v3338
        %v3571 = vpack.c.bf16 %v3347, %v3343
        %v3572 = vpack.c.bf16 %v3348, %v3344
        %v3573 = vpack.c.bf16 %v3349, %v3345
        %v3574 = vpack.c.bf16 %v3350, %v3346
        %v3575 = vpack.c.bf16 %v3355, %v3351
        %v3576 = vpack.c.bf16 %v3356, %v3352
        %v3577 = vpack.c.bf16 %v3357, %v3353
        %v3578 = vpack.c.bf16 %v3358, %v3354
        %v3579 = vpack.c.bf16 %v3363, %v3359
        %v3580 = vpack.c.bf16 %v3364, %v3360
        %v3581 = vpack.c.bf16 %v3365, %v3361
        %v3582 = vpack.c.bf16 %v3366, %v3362
        %v3583 = vpack.c.bf16 %v3371, %v3367
        %v3584 = vpack.c.bf16 %v3372, %v3368
        %v3585 = vpack.c.bf16 %v3373, %v3369
        %v3586 = vpack.c.bf16 %v3374, %v3370
        %v3587 = vpack.c.bf16 %v3379, %v3375
        %v3588 = vpack.c.bf16 %v3380, %v3376
        %v3589 = vpack.c.bf16 %v3381, %v3377
        %v3590 = vpack.c.bf16 %v3382, %v3378
        %v3591 = vpack.c.bf16 %v3387, %v3383
        %v3592 = vpack.c.bf16 %v3388, %v3384
        %v3593 = vpack.c.bf16 %v3389, %v3385
        %v3594 = vpack.c.bf16 %v3390, %v3386
        %v3595 = vpack.c.bf16 %v3395, %v3391
        %v3596 = vpack.c.bf16 %v3396, %v3392
        %v3597 = vpack.c.bf16 %v3397, %v3393
        %v3598 = vpack.c.bf16 %v3398, %v3394
        %v3599 = vpack.c.bf16 %v3403, %v3399
        %v3600 = vpack.c.bf16 %v3404, %v3400
        %v3601 = vpack.c.bf16 %v3405, %v3401
        %v3602 = vpack.c.bf16 %v3406, %v3402
        %v3603 = vpack.c.bf16 %v3411, %v3407
        %v3604 = vpack.c.bf16 %v3412, %v3408
        %v3605 = vpack.c.bf16 %v3413, %v3409
        %v3606 = vpack.c.bf16 %v3414, %v3410
        %v3607 = vpack.c.bf16 %v3419, %v3415
        %v3608 = vpack.c.bf16 %v3420, %v3416
        %v3609 = vpack.c.bf16 %v3421, %v3417
        %v3610 = vpack.c.bf16 %v3422, %v3418
        %v3611 = vpack.c.bf16 %v3427, %v3423
        %v3612 = vpack.c.bf16 %v3428, %v3424
        %v3613 = vpack.c.bf16 %v3429, %v3425
        %v3614 = vpack.c.bf16 %v3430, %v3426
        %v3615 = vpack.c.bf16 %v3435, %v3431
        %v3616 = vpack.c.bf16 %v3436, %v3432
        %v3617 = vpack.c.bf16 %v3437, %v3433
        %v3618 = vpack.c.bf16 %v3438, %v3434
        %v3619 = vpack.c.bf16 %v3443, %v3439
        %v3620 = vpack.c.bf16 %v3444, %v3440
        %v3621 = vpack.c.bf16 %v3445, %v3441
        %v3622 = vpack.c.bf16 %v3446, %v3442
        %v3623 = vpack.c.bf16 %v3451, %v3447
        %v3624 = vpack.c.bf16 %v3452, %v3448
        %v3625 = vpack.c.bf16 %v3453, %v3449
        %v3626 = vpack.c.bf16 %v3454, %v3450
        %v3627 = vpack.c.bf16 %v3459, %v3455
        %v3628 = vpack.c.bf16 %v3460, %v3456
        %v3629 = vpack.c.bf16 %v3461, %v3457
        %v3630 = vpack.c.bf16 %v3462, %v3458
        %v3631 = vpack.c.bf16 %v3467, %v3463
        %v3632 = vpack.c.bf16 %v3468, %v3464
        %v3633 = vpack.c.bf16 %v3469, %v3465
        %v3634 = vpack.c.bf16 %v3470, %v3466
        %v3635 = vpack.c.bf16 %v3475, %v3471
        %v3636 = vpack.c.bf16 %v3476, %v3472
        %v3637 = vpack.c.bf16 %v3477, %v3473
        %v3638 = vpack.c.bf16 %v3478, %v3474
        %v3639 = vpack.c.bf16 %v3483, %v3479
        %v3640 = vpack.c.bf16 %v3484, %v3480
        %v3641 = vpack.c.bf16 %v3485, %v3481
        %v3642 = vpack.c.bf16 %v3486, %v3482
        %v3643 = vpack.c.bf16 %v3491, %v3487
        %v3644 = vpack.c.bf16 %v3492, %v3488
        %v3645 = vpack.c.bf16 %v3493, %v3489
        %v3646 = vpack.c.bf16 %v3494, %v3490
        %v3647 = vpack.c.bf16 %v3499, %v3495
        %v3648 = vpack.c.bf16 %v3500, %v3496
        %v3649 = vpack.c.bf16 %v3501, %v3497
        %v3650 = vpack.c.bf16 %v3502, %v3498
        %v3651 = vpack.c.bf16 %v3507, %v3503
        %v3652 = vpack.c.bf16 %v3508, %v3504
        %v3653 = vpack.c.bf16 %v3509, %v3505
        %v3654 = vpack.c.bf16 %v3510, %v3506
        %v3655 = vpack.c.bf16 %v3515, %v3511
        %v3656 = vpack.c.bf16 %v3516, %v3512
        %v3657 = vpack.c.bf16 %v3517, %v3513
        %v3658 = vpack.c.bf16 %v3518, %v3514
        %v3659 = vpack.c.bf16 %v3523, %v3519
        %v3660 = vpack.c.bf16 %v3524, %v3520
        %v3661 = vpack.c.bf16 %v3525, %v3521
        %v3662 = vpack.c.bf16 %v3526, %v3522
        %v3663 = vpack.c.bf16 %v3531, %v3527
        %v3664 = vpack.c.bf16 %v3532, %v3528
        %v3665 = vpack.c.bf16 %v3533, %v3529
        %v3666 = vpack.c.bf16 %v3534, %v3530
        %v3667 = vpack.c.bf16 %v3539, %v3535
        %v3668 = vpack.c.bf16 %v3540, %v3536
        %v3669 = vpack.c.bf16 %v3541, %v3537
        %v3670 = vpack.c.bf16 %v3542, %v3538
        %v3671 = vld [vmem:[#allocation3] sm:$0xff]
        %v3672 = vld [vmem:[#allocation3 + $0x8] sm:$0xff]
        %v3673 = vld [vmem:[#allocation3 + $0x10] sm:$0xff]
        %v3674 = vld [vmem:[#allocation3 + $0x18] sm:$0xff]
        %v3675 = vld [vmem:[#allocation3 + $0x20] sm:$0xff]
        %v3676 = vld [vmem:[#allocation3 + $0x28] sm:$0xff]
        %v3677 = vld [vmem:[#allocation3 + $0x30] sm:$0xff]
        %v3678 = vld [vmem:[#allocation3 + $0x38] sm:$0xff]
        %v3679 = vld [vmem:[#allocation3 + $0x40] sm:$0xff]
        %v3680 = vld [vmem:[#allocation3 + $0x48] sm:$0xff]
        %v3681 = vld [vmem:[#allocation3 + $0x50] sm:$0xff]
        %v3682 = vld [vmem:[#allocation3 + $0x58] sm:$0xff]
        %v3683 = vld [vmem:[#allocation3 + $0x60] sm:$0xff]
        %v3684 = vld [vmem:[#allocation3 + $0x68] sm:$0xff]
        %v3685 = vld [vmem:[#allocation3 + $0x70] sm:$0xff]
        %v3686 = vld [vmem:[#allocation3 + $0x78] sm:$0xff]
        %v3687 = vld [vmem:[#allocation3 + $0x80] sm:$0xff]
        %v3688 = vld [vmem:[#allocation3 + $0x88] sm:$0xff]
        %v3689 = vld [vmem:[#allocation3 + $0x90] sm:$0xff]
        %v3690 = vld [vmem:[#allocation3 + $0x98] sm:$0xff]
        %v3691 = vld [vmem:[#allocation3 + $0xa0] sm:$0xff]
        %v3692 = vld [vmem:[#allocation3 + $0xa8] sm:$0xff]
        %v3693 = vld [vmem:[#allocation3 + $0xb0] sm:$0xff]
        %v3694 = vld [vmem:[#allocation3 + $0xb8] sm:$0xff]
        %v3695 = vld [vmem:[#allocation3 + $0xc0] sm:$0xff]
        %v3696 = vld [vmem:[#allocation3 + $0xc8] sm:$0xff]
        %v3697 = vld [vmem:[#allocation3 + $0xd0] sm:$0xff]
        %v3698 = vld [vmem:[#allocation3 + $0xd8] sm:$0xff]
        %v3699 = vld [vmem:[#allocation3 + $0xe0] sm:$0xff]
        %v3700 = vld [vmem:[#allocation3 + $0xe8] sm:$0xff]
        %v3701 = vld [vmem:[#allocation3 + $0xf0] sm:$0xff]
        %v3702 = vld [vmem:[#allocation3 + $0xf8] sm:$0xff]
        %v3703 = vld [vmem:[#allocation3 + $0x100] sm:$0xff]
        %v3704 = vld [vmem:[#allocation3 + $0x108] sm:$0xff]
        %v3705 = vld [vmem:[#allocation3 + $0x110] sm:$0xff]
        %v3706 = vld [vmem:[#allocation3 + $0x118] sm:$0xff]
        %v3707 = vld [vmem:[#allocation3 + $0x120] sm:$0xff]
        %v3708 = vld [vmem:[#allocation3 + $0x128] sm:$0xff]
        %v3709 = vld [vmem:[#allocation3 + $0x130] sm:$0xff]
        %v3710 = vld [vmem:[#allocation3 + $0x138] sm:$0xff]
        %v3711 = vld [vmem:[#allocation3 + $0x140] sm:$0xff]
        %v3712 = vld [vmem:[#allocation3 + $0x148] sm:$0xff]
        %v3713 = vld [vmem:[#allocation3 + $0x150] sm:$0xff]
        %v3714 = vld [vmem:[#allocation3 + $0x158] sm:$0xff]
        %v3715 = vld [vmem:[#allocation3 + $0x160] sm:$0xff]
        %v3716 = vld [vmem:[#allocation3 + $0x168] sm:$0xff]
        %v3717 = vld [vmem:[#allocation3 + $0x170] sm:$0xff]
        %v3718 = vld [vmem:[#allocation3 + $0x178] sm:$0xff]
        %v3719 = vld [vmem:[#allocation3 + $0x180] sm:$0xff]
        %v3720 = vld [vmem:[#allocation3 + $0x188] sm:$0xff]
        %v3721 = vld [vmem:[#allocation3 + $0x190] sm:$0xff]
        %v3722 = vld [vmem:[#allocation3 + $0x198] sm:$0xff]
        %v3723 = vld [vmem:[#allocation3 + $0x1a0] sm:$0xff]
        %v3724 = vld [vmem:[#allocation3 + $0x1a8] sm:$0xff]
        %v3725 = vld [vmem:[#allocation3 + $0x1b0] sm:$0xff]
        %v3726 = vld [vmem:[#allocation3 + $0x1b8] sm:$0xff]
        %v3727 = vld [vmem:[#allocation3 + $0x1c0] sm:$0xff]
        %v3728 = vld [vmem:[#allocation3 + $0x1c8] sm:$0xff]
        %v3729 = vld [vmem:[#allocation3 + $0x1d0] sm:$0xff]
        %v3730 = vld [vmem:[#allocation3 + $0x1d8] sm:$0xff]
        %v3731 = vld [vmem:[#allocation3 + $0x1e0] sm:$0xff]
        %v3732 = vld [vmem:[#allocation3 + $0x1e8] sm:$0xff]
        %v3733 = vld [vmem:[#allocation3 + $0x1f0] sm:$0xff]
        %v3734 = vld [vmem:[#allocation3 + $0x1f8] sm:$0xff]
        %v3735 = vld [vmem:[#allocation12] sm:$0xf]
        %v3736 = vld [vmem:[#allocation12 + $0x4] sm:$0xf]
        %v3737 = vld [vmem:[#allocation12 + $0x8] sm:$0xf]
        %v3738 = vld [vmem:[#allocation12 + $0xc] sm:$0xf]
        %v3739 = vld [vmem:[#allocation12 + $0x10] sm:$0xf]
        %v3740 = vld [vmem:[#allocation12 + $0x14] sm:$0xf]
        %v3741 = vld [vmem:[#allocation12 + $0x18] sm:$0xf]
        %v3742 = vld [vmem:[#allocation12 + $0x1c] sm:$0xf]
        %v3743 = vld [vmem:[#allocation12 + $0x20] sm:$0xf]
        %v3744 = vld [vmem:[#allocation12 + $0x24] sm:$0xf]
        %v3745 = vld [vmem:[#allocation12 + $0x28] sm:$0xf]
        %v3746 = vld [vmem:[#allocation12 + $0x2c] sm:$0xf]
        %v3747 = vld [vmem:[#allocation12 + $0x30] sm:$0xf]
        %v3748 = vld [vmem:[#allocation12 + $0x34] sm:$0xf]
        %v3749 = vld [vmem:[#allocation12 + $0x38] sm:$0xf]
        %v3750 = vld [vmem:[#allocation12 + $0x3c] sm:$0xf]
        %v3751 = vld [vmem:[#allocation12 + $0x40] sm:$0xf]
        %v3752 = vld [vmem:[#allocation12 + $0x44] sm:$0xf]
        %v3753 = vld [vmem:[#allocation12 + $0x48] sm:$0xf]
        %v3754 = vld [vmem:[#allocation12 + $0x4c] sm:$0xf]
        %v3755 = vld [vmem:[#allocation12 + $0x50] sm:$0xf]
        %v3756 = vld [vmem:[#allocation12 + $0x54] sm:$0xf]
        %v3757 = vld [vmem:[#allocation12 + $0x58] sm:$0xf]
        %v3758 = vld [vmem:[#allocation12 + $0x5c] sm:$0xf]
        %v3759 = vld [vmem:[#allocation12 + $0x60] sm:$0xf]
        %v3760 = vld [vmem:[#allocation12 + $0x64] sm:$0xf]
        %v3761 = vld [vmem:[#allocation12 + $0x68] sm:$0xf]
        %v3762 = vld [vmem:[#allocation12 + $0x6c] sm:$0xf]
        %v3763 = vld [vmem:[#allocation12 + $0x70] sm:$0xf]
        %v3764 = vld [vmem:[#allocation12 + $0x74] sm:$0xf]
        %v3765 = vld [vmem:[#allocation12 + $0x78] sm:$0xf]
        %v3766 = vld [vmem:[#allocation12 + $0x7c] sm:$0xf]
        %v3767 = vld [vmem:[#allocation12 + $0x80] sm:$0xf]
        %v3768 = vld [vmem:[#allocation12 + $0x84] sm:$0xf]
        %v3769 = vld [vmem:[#allocation12 + $0x88] sm:$0xf]
        %v3770 = vld [vmem:[#allocation12 + $0x8c] sm:$0xf]
        %v3771 = vld [vmem:[#allocation12 + $0x90] sm:$0xf]
        %v3772 = vld [vmem:[#allocation12 + $0x94] sm:$0xf]
        %v3773 = vld [vmem:[#allocation12 + $0x98] sm:$0xf]
        %v3774 = vld [vmem:[#allocation12 + $0x9c] sm:$0xf]
        %v3775 = vld [vmem:[#allocation12 + $0xa0] sm:$0xf]
        %v3776 = vld [vmem:[#allocation12 + $0xa4] sm:$0xf]
        %v3777 = vld [vmem:[#allocation12 + $0xa8] sm:$0xf]
        %v3778 = vld [vmem:[#allocation12 + $0xac] sm:$0xf]
        %v3779 = vld [vmem:[#allocation12 + $0xb0] sm:$0xf]
        %v3780 = vld [vmem:[#allocation12 + $0xb4] sm:$0xf]
        %v3781 = vld [vmem:[#allocation12 + $0xb8] sm:$0xf]
        %v3782 = vld [vmem:[#allocation12 + $0xbc] sm:$0xf]
        %v3783 = vld [vmem:[#allocation12 + $0xc0] sm:$0xf]
        %v3784 = vld [vmem:[#allocation12 + $0xc4] sm:$0xf]
        %v3785 = vld [vmem:[#allocation12 + $0xc8] sm:$0xf]
        %v3786 = vld [vmem:[#allocation12 + $0xcc] sm:$0xf]
        %v3787 = vld [vmem:[#allocation12 + $0xd0] sm:$0xf]
        %v3788 = vld [vmem:[#allocation12 + $0xd4] sm:$0xf]
        %v3789 = vld [vmem:[#allocation12 + $0xd8] sm:$0xf]
        %v3790 = vld [vmem:[#allocation12 + $0xdc] sm:$0xf]
        %v3791 = vld [vmem:[#allocation12 + $0xe0] sm:$0xf]
        %v3792 = vld [vmem:[#allocation12 + $0xe4] sm:$0xf]
        %v3793 = vld [vmem:[#allocation12 + $0xe8] sm:$0xf]
        %v3794 = vld [vmem:[#allocation12 + $0xec] sm:$0xf]
        %v3795 = vld [vmem:[#allocation12 + $0xf0] sm:$0xf]
        %v3796 = vld [vmem:[#allocation12 + $0xf4] sm:$0xf]
        %v3797 = vld [vmem:[#allocation12 + $0xf8] sm:$0xf]
        %v3798 = vld [vmem:[#allocation12 + $0xfc] sm:$0xf]
        %v3863 = vunpack.c.l.b16 %v3735
        %v3864 = vunpack.c.l.b16 %v3736
        %v3865 = vunpack.c.l.b16 %v3737
        %v3866 = vunpack.c.l.b16 %v3738
        %v3867 = vunpack.c.l.b16 %v3739
        %v3868 = vunpack.c.l.b16 %v3740
        %v3869 = vunpack.c.l.b16 %v3741
        %v3870 = vunpack.c.l.b16 %v3742
        %v3871 = vunpack.c.l.b16 %v3743
        %v3872 = vunpack.c.l.b16 %v3744
        %v3873 = vunpack.c.l.b16 %v3745
        %v3874 = vunpack.c.l.b16 %v3746
        %v3875 = vunpack.c.l.b16 %v3747
        %v3876 = vunpack.c.l.b16 %v3748
        %v3877 = vunpack.c.l.b16 %v3749
        %v3878 = vunpack.c.l.b16 %v3750
        %v3879 = vunpack.c.l.b16 %v3751
        %v3880 = vunpack.c.l.b16 %v3752
        %v3881 = vunpack.c.l.b16 %v3753
        %v3882 = vunpack.c.l.b16 %v3754
        %v3883 = vunpack.c.l.b16 %v3755
        %v3884 = vunpack.c.l.b16 %v3756
        %v3885 = vunpack.c.l.b16 %v3757
        %v3886 = vunpack.c.l.b16 %v3758
        %v3887 = vunpack.c.l.b16 %v3759
        %v3888 = vunpack.c.l.b16 %v3760
        %v3889 = vunpack.c.l.b16 %v3761
        %v3890 = vunpack.c.l.b16 %v3762
        %v3891 = vunpack.c.l.b16 %v3763
        %v3892 = vunpack.c.l.b16 %v3764
        %v3893 = vunpack.c.l.b16 %v3765
        %v3894 = vunpack.c.l.b16 %v3766
        %v3895 = vunpack.c.l.b16 %v3767
        %v3896 = vunpack.c.l.b16 %v3768
        %v3897 = vunpack.c.l.b16 %v3769
        %v3898 = vunpack.c.l.b16 %v3770
        %v3899 = vunpack.c.l.b16 %v3771
        %v3900 = vunpack.c.l.b16 %v3772
        %v3901 = vunpack.c.l.b16 %v3773
        %v3902 = vunpack.c.l.b16 %v3774
        %v3903 = vunpack.c.l.b16 %v3775
        %v3904 = vunpack.c.l.b16 %v3776
        %v3905 = vunpack.c.l.b16 %v3777
        %v3906 = vunpack.c.l.b16 %v3778
        %v3907 = vunpack.c.l.b16 %v3779
        %v3908 = vunpack.c.l.b16 %v3780
        %v3909 = vunpack.c.l.b16 %v3781
        %v3910 = vunpack.c.l.b16 %v3782
        %v3911 = vunpack.c.l.b16 %v3783
        %v3912 = vunpack.c.l.b16 %v3784
        %v3913 = vunpack.c.l.b16 %v3785
        %v3914 = vunpack.c.l.b16 %v3786
        %v3915 = vunpack.c.l.b16 %v3787
        %v3916 = vunpack.c.l.b16 %v3788
        %v3917 = vunpack.c.l.b16 %v3789
        %v3918 = vunpack.c.l.b16 %v3790
        %v3919 = vunpack.c.l.b16 %v3791
        %v3920 = vunpack.c.l.b16 %v3792
        %v3921 = vunpack.c.l.b16 %v3793
        %v3922 = vunpack.c.l.b16 %v3794
        %v3923 = vunpack.c.l.b16 %v3795
        %v3924 = vunpack.c.l.b16 %v3796
        %v3925 = vunpack.c.l.b16 %v3797
        %v3926 = vunpack.c.l.b16 %v3798
        %v3927 = vpack.c.b16 %v3864, %v3863
        %v3928 = vpack.c.b16 %v3866, %v3865
        %v3929 = vpack.c.b16 %v3868, %v3867
        %v3930 = vpack.c.b16 %v3870, %v3869
        %v3931 = vpack.c.b16 %v3872, %v3871
        %v3932 = vpack.c.b16 %v3874, %v3873
        %v3933 = vpack.c.b16 %v3876, %v3875
        %v3934 = vpack.c.b16 %v3878, %v3877
        %v3935 = vpack.c.b16 %v3880, %v3879
        %v3936 = vpack.c.b16 %v3882, %v3881
        %v3937 = vpack.c.b16 %v3884, %v3883
        %v3938 = vpack.c.b16 %v3886, %v3885
        %v3939 = vpack.c.b16 %v3888, %v3887
        %v3940 = vpack.c.b16 %v3890, %v3889
        %v3941 = vpack.c.b16 %v3892, %v3891
        %v3942 = vpack.c.b16 %v3894, %v3893
        %v3943 = vpack.c.b16 %v3896, %v3895
        %v3944 = vpack.c.b16 %v3898, %v3897
        %v3945 = vpack.c.b16 %v3900, %v3899
        %v3946 = vpack.c.b16 %v3902, %v3901
        %v3947 = vpack.c.b16 %v3904, %v3903
        %v3948 = vpack.c.b16 %v3906, %v3905
        %v3949 = vpack.c.b16 %v3908, %v3907
        %v3950 = vpack.c.b16 %v3910, %v3909
        %v3951 = vpack.c.b16 %v3912, %v3911
        %v3952 = vpack.c.b16 %v3914, %v3913
        %v3953 = vpack.c.b16 %v3916, %v3915
        %v3954 = vpack.c.b16 %v3918, %v3917
        %v3955 = vpack.c.b16 %v3920, %v3919
        %v3956 = vpack.c.b16 %v3922, %v3921
        %v3957 = vpack.c.b16 %v3924, %v3923
        %v3958 = vpack.c.b16 %v3926, %v3925
        %3991 = vmatpush.bf16.msra.mxu0 %v3934
        %3992 = vmatpush.bf16.msra.mxu0 %v3933
        %3993 = vmatpush.bf16.msra.mxu0 %v3932
        %3994 = vmatpush.bf16.msra.mxu0 %v3931
        %3995 = vmatpush.bf16.msra.mxu0 %v3930
        %3996 = vmatpush.bf16.msra.mxu0 %v3929
        %3997 = vmatpush.bf16.msra.mxu0 %v3928
        %3998 = vmatpush.bf16.msra.mxu0 %v3927
        %3999 = vmatmul.bf16.gmra.mxu0 %v3543
        %v4000 = vpop.f32.mrf.mxu0
        %v4001 = vadd.f32 0.0, %v4000
        %v4002 = vpop.f32.mrf.mxu0
        %v4003 = vadd.f32 0.0, %v4002
        %4004 = vmatmul.bf16.gmra.mxu0 %v3547
        %v4005 = vpop.f32.mrf.mxu0
        %v4006 = vadd.f32 0.0, %v4005
        %v4007 = vpop.f32.mrf.mxu0
        %v4008 = vadd.f32 0.0, %v4007
        %4009 = vmatmul.bf16.gmra.mxu0 %v3551
        %v4010 = vpop.f32.mrf.mxu0
        %v4011 = vadd.f32 0.0, %v4010
        %v4012 = vpop.f32.mrf.mxu0
        %v4013 = vadd.f32 0.0, %v4012
        %4014 = vmatmul.bf16.gmra.mxu0 %v3555
        %v4015 = vpop.f32.mrf.mxu0
        %v4016 = vadd.f32 0.0, %v4015
        %v4017 = vpop.f32.mrf.mxu0
        %v4018 = vadd.f32 0.0, %v4017
        %4019 = vmatmul.bf16.gmra.mxu0 %v3559
        %v4020 = vpop.f32.mrf.mxu0
        %v4021 = vadd.f32 0.0, %v4020
        %v4022 = vpop.f32.mrf.mxu0
        %v4023 = vadd.f32 0.0, %v4022
        %4024 = vmatmul.bf16.gmra.mxu0 %v3563
        %v4025 = vpop.f32.mrf.mxu0
        %v4026 = vadd.f32 0.0, %v4025
        %v4027 = vpop.f32.mrf.mxu0
        %v4028 = vadd.f32 0.0, %v4027
        %4029 = vmatmul.bf16.gmra.mxu0 %v3567
        %v4030 = vpop.f32.mrf.mxu0
        %v4031 = vadd.f32 0.0, %v4030
        %v4032 = vpop.f32.mrf.mxu0
        %v4033 = vadd.f32 0.0, %v4032
        %4034 = vmatmul.bf16.gmra.mxu0 %v3571
        %v4035 = vpop.f32.mrf.mxu0
        %v4036 = vadd.f32 0.0, %v4035
        %v4037 = vpop.f32.mrf.mxu0
        %v4038 = vadd.f32 0.0, %v4037
        %4039 = vmatmul.bf16.gmra.mxu0 %v3575
        %v4040 = vpop.f32.mrf.mxu0
        %v4041 = vadd.f32 0.0, %v4040
        %v4042 = vpop.f32.mrf.mxu0
        %v4043 = vadd.f32 0.0, %v4042
        %4044 = vmatmul.bf16.gmra.mxu0 %v3579
        %v4045 = vpop.f32.mrf.mxu0
        %v4046 = vadd.f32 0.0, %v4045
        %v4047 = vpop.f32.mrf.mxu0
        %v4048 = vadd.f32 0.0, %v4047
        %4049 = vmatmul.bf16.gmra.mxu0 %v3583
        %v4050 = vpop.f32.mrf.mxu0
        %v4051 = vadd.f32 0.0, %v4050
        %v4052 = vpop.f32.mrf.mxu0
        %v4053 = vadd.f32 0.0, %v4052
        %4054 = vmatmul.bf16.gmra.mxu0 %v3587
        %v4055 = vpop.f32.mrf.mxu0
        %v4056 = vadd.f32 0.0, %v4055
        %v4057 = vpop.f32.mrf.mxu0
        %v4058 = vadd.f32 0.0, %v4057
        %4059 = vmatmul.bf16.gmra.mxu0 %v3591
        %v4060 = vpop.f32.mrf.mxu0
        %v4061 = vadd.f32 0.0, %v4060
        %v4062 = vpop.f32.mrf.mxu0
        %v4063 = vadd.f32 0.0, %v4062
        %4064 = vmatmul.bf16.gmra.mxu0 %v3595
        %v4065 = vpop.f32.mrf.mxu0
        %v4066 = vadd.f32 0.0, %v4065
        %v4067 = vpop.f32.mrf.mxu0
        %v4068 = vadd.f32 0.0, %v4067
        %4069 = vmatmul.bf16.gmra.mxu0 %v3599
        %v4070 = vpop.f32.mrf.mxu0
        %v4071 = vadd.f32 0.0, %v4070
        %v4072 = vpop.f32.mrf.mxu0
        %v4073 = vadd.f32 0.0, %v4072
        %4074 = vmatmul.bf16.gmra.mxu0 %v3603
        %v4075 = vpop.f32.mrf.mxu0
        %v4076 = vadd.f32 0.0, %v4075
        %v4077 = vpop.f32.mrf.mxu0
        %v4078 = vadd.f32 0.0, %v4077
        %4079 = vmatmul.bf16.gmra.mxu0 %v3607
        %v4080 = vpop.f32.mrf.mxu0
        %v4081 = vadd.f32 0.0, %v4080
        %v4082 = vpop.f32.mrf.mxu0
        %v4083 = vadd.f32 0.0, %v4082
        %4084 = vmatmul.bf16.gmra.mxu0 %v3611
        %v4085 = vpop.f32.mrf.mxu0
        %v4086 = vadd.f32 0.0, %v4085
        %v4087 = vpop.f32.mrf.mxu0
        %v4088 = vadd.f32 0.0, %v4087
        %4089 = vmatmul.bf16.gmra.mxu0 %v3615
        %v4090 = vpop.f32.mrf.mxu0
        %v4091 = vadd.f32 0.0, %v4090
        %v4092 = vpop.f32.mrf.mxu0
        %v4093 = vadd.f32 0.0, %v4092
        %4094 = vmatmul.bf16.gmra.mxu0 %v3619
        %v4095 = vpop.f32.mrf.mxu0
        %v4096 = vadd.f32 0.0, %v4095
        %v4097 = vpop.f32.mrf.mxu0
        %v4098 = vadd.f32 0.0, %v4097
        %4099 = vmatmul.bf16.gmra.mxu0 %v3623
        %v4100 = vpop.f32.mrf.mxu0
        %v4101 = vadd.f32 0.0, %v4100
        %v4102 = vpop.f32.mrf.mxu0
        %v4103 = vadd.f32 0.0, %v4102
        %4104 = vmatmul.bf16.gmra.mxu0 %v3627
        %v4105 = vpop.f32.mrf.mxu0
        %v4106 = vadd.f32 0.0, %v4105
        %v4107 = vpop.f32.mrf.mxu0
        %v4108 = vadd.f32 0.0, %v4107
        %4109 = vmatmul.bf16.gmra.mxu0 %v3631
        %v4110 = vpop.f32.mrf.mxu0
        %v4111 = vadd.f32 0.0, %v4110
        %v4112 = vpop.f32.mrf.mxu0
        %v4113 = vadd.f32 0.0, %v4112
        %4114 = vmatmul.bf16.gmra.mxu0 %v3635
        %v4115 = vpop.f32.mrf.mxu0
        %v4116 = vadd.f32 0.0, %v4115
        %v4117 = vpop.f32.mrf.mxu0
        %v4118 = vadd.f32 0.0, %v4117
        %4119 = vmatmul.bf16.gmra.mxu0 %v3639
        %v4120 = vpop.f32.mrf.mxu0
        %v4121 = vadd.f32 0.0, %v4120
        %v4122 = vpop.f32.mrf.mxu0
        %v4123 = vadd.f32 0.0, %v4122
        %4124 = vmatmul.bf16.gmra.mxu0 %v3643
        %v4125 = vpop.f32.mrf.mxu0
        %v4126 = vadd.f32 0.0, %v4125
        %v4127 = vpop.f32.mrf.mxu0
        %v4128 = vadd.f32 0.0, %v4127
        %4129 = vmatmul.bf16.gmra.mxu0 %v3647
        %v4130 = vpop.f32.mrf.mxu0
        %v4131 = vadd.f32 0.0, %v4130
        %v4132 = vpop.f32.mrf.mxu0
        %v4133 = vadd.f32 0.0, %v4132
        %4134 = vmatmul.bf16.gmra.mxu0 %v3651
        %v4135 = vpop.f32.mrf.mxu0
        %v4136 = vadd.f32 0.0, %v4135
        %v4137 = vpop.f32.mrf.mxu0
        %v4138 = vadd.f32 0.0, %v4137
        %4139 = vmatmul.bf16.gmra.mxu0 %v3655
        %v4140 = vpop.f32.mrf.mxu0
        %v4141 = vadd.f32 0.0, %v4140
        %v4142 = vpop.f32.mrf.mxu0
        %v4143 = vadd.f32 0.0, %v4142
        %4144 = vmatmul.bf16.gmra.mxu0 %v3659
        %v4145 = vpop.f32.mrf.mxu0
        %v4146 = vadd.f32 0.0, %v4145
        %v4147 = vpop.f32.mrf.mxu0
        %v4148 = vadd.f32 0.0, %v4147
        %4149 = vmatmul.bf16.gmra.mxu0 %v3663
        %v4150 = vpop.f32.mrf.mxu0
        %v4151 = vadd.f32 0.0, %v4150
        %v4152 = vpop.f32.mrf.mxu0
        %v4153 = vadd.f32 0.0, %v4152
        %4154 = vmatmul.bf16.gmra.mxu0 %v3667
        %v4155 = vpop.f32.mrf.mxu0
        %v4156 = vadd.f32 0.0, %v4155
        %v4157 = vpop.f32.mrf.mxu0
        %v4158 = vadd.f32 0.0, %v4157
        %4159 = vdwg.mxu0
        %4160 = vmatpush.bf16.msra.mxu0 %v3942
        %4161 = vmatpush.bf16.msra.mxu0 %v3941
        %4162 = vmatpush.bf16.msra.mxu0 %v3940
        %4163 = vmatpush.bf16.msra.mxu0 %v3939
        %4164 = vmatpush.bf16.msra.mxu0 %v3938
        %4165 = vmatpush.bf16.msra.mxu0 %v3937
        %4166 = vmatpush.bf16.msra.mxu0 %v3936
        %4167 = vmatpush.bf16.msra.mxu0 %v3935
        %4168 = vmatmul.bf16.gmra.mxu0 %v3544
        %v4169 = vpop.f32.mrf.mxu0
        %v4170 = vadd.f32 %v4001, %v4169
        %v4171 = vpop.f32.mrf.mxu0
        %v4172 = vadd.f32 %v4003, %v4171
        %4173 = vmatmul.bf16.gmra.mxu0 %v3548
        %v4174 = vpop.f32.mrf.mxu0
        %v4175 = vadd.f32 %v4006, %v4174
        %v4176 = vpop.f32.mrf.mxu0
        %v4177 = vadd.f32 %v4008, %v4176
        %4178 = vmatmul.bf16.gmra.mxu0 %v3552
        %v4179 = vpop.f32.mrf.mxu0
        %v4180 = vadd.f32 %v4011, %v4179
        %v4181 = vpop.f32.mrf.mxu0
        %v4182 = vadd.f32 %v4013, %v4181
        %4183 = vmatmul.bf16.gmra.mxu0 %v3556
        %v4184 = vpop.f32.mrf.mxu0
        %v4185 = vadd.f32 %v4016, %v4184
        %v4186 = vpop.f32.mrf.mxu0
        %v4187 = vadd.f32 %v4018, %v4186
        %4188 = vmatmul.bf16.gmra.mxu0 %v3560
        %v4189 = vpop.f32.mrf.mxu0
        %v4190 = vadd.f32 %v4021, %v4189
        %v4191 = vpop.f32.mrf.mxu0
        %v4192 = vadd.f32 %v4023, %v4191
        %4193 = vmatmul.bf16.gmra.mxu0 %v3564
        %v4194 = vpop.f32.mrf.mxu0
        %v4195 = vadd.f32 %v4026, %v4194
        %v4196 = vpop.f32.mrf.mxu0
        %v4197 = vadd.f32 %v4028, %v4196
        %4198 = vmatmul.bf16.gmra.mxu0 %v3568
        %v4199 = vpop.f32.mrf.mxu0
        %v4200 = vadd.f32 %v4031, %v4199
        %v4201 = vpop.f32.mrf.mxu0
        %v4202 = vadd.f32 %v4033, %v4201
        %4203 = vmatmul.bf16.gmra.mxu0 %v3572
        %v4204 = vpop.f32.mrf.mxu0
        %v4205 = vadd.f32 %v4036, %v4204
        %v4206 = vpop.f32.mrf.mxu0
        %v4207 = vadd.f32 %v4038, %v4206
        %4208 = vmatmul.bf16.gmra.mxu0 %v3576
        %v4209 = vpop.f32.mrf.mxu0
        %v4210 = vadd.f32 %v4041, %v4209
        %v4211 = vpop.f32.mrf.mxu0
        %v4212 = vadd.f32 %v4043, %v4211
        %4213 = vmatmul.bf16.gmra.mxu0 %v3580
        %v4214 = vpop.f32.mrf.mxu0
        %v4215 = vadd.f32 %v4046, %v4214
        %v4216 = vpop.f32.mrf.mxu0
        %v4217 = vadd.f32 %v4048, %v4216
        %4218 = vmatmul.bf16.gmra.mxu0 %v3584
        %v4219 = vpop.f32.mrf.mxu0
        %v4220 = vadd.f32 %v4051, %v4219
        %v4221 = vpop.f32.mrf.mxu0
        %v4222 = vadd.f32 %v4053, %v4221
        %4223 = vmatmul.bf16.gmra.mxu0 %v3588
        %v4224 = vpop.f32.mrf.mxu0
        %v4225 = vadd.f32 %v4056, %v4224
        %v4226 = vpop.f32.mrf.mxu0
        %v4227 = vadd.f32 %v4058, %v4226
        %4228 = vmatmul.bf16.gmra.mxu0 %v3592
        %v4229 = vpop.f32.mrf.mxu0
        %v4230 = vadd.f32 %v4061, %v4229
        %v4231 = vpop.f32.mrf.mxu0
        %v4232 = vadd.f32 %v4063, %v4231
        %4233 = vmatmul.bf16.gmra.mxu0 %v3596
        %v4234 = vpop.f32.mrf.mxu0
        %v4235 = vadd.f32 %v4066, %v4234
        %v4236 = vpop.f32.mrf.mxu0
        %v4237 = vadd.f32 %v4068, %v4236
        %4238 = vmatmul.bf16.gmra.mxu0 %v3600
        %v4239 = vpop.f32.mrf.mxu0
        %v4240 = vadd.f32 %v4071, %v4239
        %v4241 = vpop.f32.mrf.mxu0
        %v4242 = vadd.f32 %v4073, %v4241
        %4243 = vmatmul.bf16.gmra.mxu0 %v3604
        %v4244 = vpop.f32.mrf.mxu0
        %v4245 = vadd.f32 %v4076, %v4244
        %v4246 = vpop.f32.mrf.mxu0
        %v4247 = vadd.f32 %v4078, %v4246
        %4248 = vmatmul.bf16.gmra.mxu0 %v3608
        %v4249 = vpop.f32.mrf.mxu0
        %v4250 = vadd.f32 %v4081, %v4249
        %v4251 = vpop.f32.mrf.mxu0
        %v4252 = vadd.f32 %v4083, %v4251
        %4253 = vmatmul.bf16.gmra.mxu0 %v3612
        %v4254 = vpop.f32.mrf.mxu0
        %v4255 = vadd.f32 %v4086, %v4254
        %v4256 = vpop.f32.mrf.mxu0
        %v4257 = vadd.f32 %v4088, %v4256
        %4258 = vmatmul.bf16.gmra.mxu0 %v3616
        %v4259 = vpop.f32.mrf.mxu0
        %v4260 = vadd.f32 %v4091, %v4259
        %v4261 = vpop.f32.mrf.mxu0
        %v4262 = vadd.f32 %v4093, %v4261
        %4263 = vmatmul.bf16.gmra.mxu0 %v3620
        %v4264 = vpop.f32.mrf.mxu0
        %v4265 = vadd.f32 %v4096, %v4264
        %v4266 = vpop.f32.mrf.mxu0
        %v4267 = vadd.f32 %v4098, %v4266
        %4268 = vmatmul.bf16.gmra.mxu0 %v3624
        %v4269 = vpop.f32.mrf.mxu0
        %v4270 = vadd.f32 %v4101, %v4269
        %v4271 = vpop.f32.mrf.mxu0
        %v4272 = vadd.f32 %v4103, %v4271
        %4273 = vmatmul.bf16.gmra.mxu0 %v3628
        %v4274 = vpop.f32.mrf.mxu0
        %v4275 = vadd.f32 %v4106, %v4274
        %v4276 = vpop.f32.mrf.mxu0
        %v4277 = vadd.f32 %v4108, %v4276
        %4278 = vmatmul.bf16.gmra.mxu0 %v3632
        %v4279 = vpop.f32.mrf.mxu0
        %v4280 = vadd.f32 %v4111, %v4279
        %v4281 = vpop.f32.mrf.mxu0
        %v4282 = vadd.f32 %v4113, %v4281
        %4283 = vmatmul.bf16.gmra.mxu0 %v3636
        %v4284 = vpop.f32.mrf.mxu0
        %v4285 = vadd.f32 %v4116, %v4284
        %v4286 = vpop.f32.mrf.mxu0
        %v4287 = vadd.f32 %v4118, %v4286
        %4288 = vmatmul.bf16.gmra.mxu0 %v3640
        %v4289 = vpop.f32.mrf.mxu0
        %v4290 = vadd.f32 %v4121, %v4289
        %v4291 = vpop.f32.mrf.mxu0
        %v4292 = vadd.f32 %v4123, %v4291
        %4293 = vmatmul.bf16.gmra.mxu0 %v3644
        %v4294 = vpop.f32.mrf.mxu0
        %v4295 = vadd.f32 %v4126, %v4294
        %v4296 = vpop.f32.mrf.mxu0
        %v4297 = vadd.f32 %v4128, %v4296
        %4298 = vmatmul.bf16.gmra.mxu0 %v3648
        %v4299 = vpop.f32.mrf.mxu0
        %v4300 = vadd.f32 %v4131, %v4299
        %v4301 = vpop.f32.mrf.mxu0
        %v4302 = vadd.f32 %v4133, %v4301
        %4303 = vmatmul.bf16.gmra.mxu0 %v3652
        %v4304 = vpop.f32.mrf.mxu0
        %v4305 = vadd.f32 %v4136, %v4304
        %v4306 = vpop.f32.mrf.mxu0
        %v4307 = vadd.f32 %v4138, %v4306
        %4308 = vmatmul.bf16.gmra.mxu0 %v3656
        %v4309 = vpop.f32.mrf.mxu0
        %v4310 = vadd.f32 %v4141, %v4309
        %v4311 = vpop.f32.mrf.mxu0
        %v4312 = vadd.f32 %v4143, %v4311
        %4313 = vmatmul.bf16.gmra.mxu0 %v3660
        %v4314 = vpop.f32.mrf.mxu0
        %v4315 = vadd.f32 %v4146, %v4314
        %v4316 = vpop.f32.mrf.mxu0
        %v4317 = vadd.f32 %v4148, %v4316
        %4318 = vmatmul.bf16.gmra.mxu0 %v3664
        %v4319 = vpop.f32.mrf.mxu0
        %v4320 = vadd.f32 %v4151, %v4319
        %v4321 = vpop.f32.mrf.mxu0
        %v4322 = vadd.f32 %v4153, %v4321
        %4323 = vmatmul.bf16.gmra.mxu0 %v3668
        %v4324 = vpop.f32.mrf.mxu0
        %v4325 = vadd.f32 %v4156, %v4324
        %v4326 = vpop.f32.mrf.mxu0
        %v4327 = vadd.f32 %v4158, %v4326
        %4328 = vdwg.mxu0
        %4329 = vmatpush.bf16.msra.mxu0 %v3950
        %4330 = vmatpush.bf16.msra.mxu0 %v3949
        %4331 = vmatpush.bf16.msra.mxu0 %v3948
        %4332 = vmatpush.bf16.msra.mxu0 %v3947
        %4333 = vmatpush.bf16.msra.mxu0 %v3946
        %4334 = vmatpush.bf16.msra.mxu0 %v3945
        %4335 = vmatpush.bf16.msra.mxu0 %v3944
        %4336 = vmatpush.bf16.msra.mxu0 %v3943
        %4337 = vmatmul.bf16.gmra.mxu0 %v3545
        %v4338 = vpop.f32.mrf.mxu0
        %v4339 = vadd.f32 %v4170, %v4338
        %v4340 = vpop.f32.mrf.mxu0
        %v4341 = vadd.f32 %v4172, %v4340
        %4342 = vmatmul.bf16.gmra.mxu0 %v3549
        %v4343 = vpop.f32.mrf.mxu0
        %v4344 = vadd.f32 %v4175, %v4343
        %v4345 = vpop.f32.mrf.mxu0
        %v4346 = vadd.f32 %v4177, %v4345
        %4347 = vmatmul.bf16.gmra.mxu0 %v3553
        %v4348 = vpop.f32.mrf.mxu0
        %v4349 = vadd.f32 %v4180, %v4348
        %v4350 = vpop.f32.mrf.mxu0
        %v4351 = vadd.f32 %v4182, %v4350
        %4352 = vmatmul.bf16.gmra.mxu0 %v3557
        %v4353 = vpop.f32.mrf.mxu0
        %v4354 = vadd.f32 %v4185, %v4353
        %v4355 = vpop.f32.mrf.mxu0
        %v4356 = vadd.f32 %v4187, %v4355
        %4357 = vmatmul.bf16.gmra.mxu0 %v3561
        %v4358 = vpop.f32.mrf.mxu0
        %v4359 = vadd.f32 %v4190, %v4358
        %v4360 = vpop.f32.mrf.mxu0
        %v4361 = vadd.f32 %v4192, %v4360
        %4362 = vmatmul.bf16.gmra.mxu0 %v3565
        %v4363 = vpop.f32.mrf.mxu0
        %v4364 = vadd.f32 %v4195, %v4363
        %v4365 = vpop.f32.mrf.mxu0
        %v4366 = vadd.f32 %v4197, %v4365
        %4367 = vmatmul.bf16.gmra.mxu0 %v3569
        %v4368 = vpop.f32.mrf.mxu0
        %v4369 = vadd.f32 %v4200, %v4368
        %v4370 = vpop.f32.mrf.mxu0
        %v4371 = vadd.f32 %v4202, %v4370
        %4372 = vmatmul.bf16.gmra.mxu0 %v3573
        %v4373 = vpop.f32.mrf.mxu0
        %v4374 = vadd.f32 %v4205, %v4373
        %v4375 = vpop.f32.mrf.mxu0
        %v4376 = vadd.f32 %v4207, %v4375
        %4377 = vmatmul.bf16.gmra.mxu0 %v3577
        %v4378 = vpop.f32.mrf.mxu0
        %v4379 = vadd.f32 %v4210, %v4378
        %v4380 = vpop.f32.mrf.mxu0
        %v4381 = vadd.f32 %v4212, %v4380
        %4382 = vmatmul.bf16.gmra.mxu0 %v3581
        %v4383 = vpop.f32.mrf.mxu0
        %v4384 = vadd.f32 %v4215, %v4383
        %v4385 = vpop.f32.mrf.mxu0
        %v4386 = vadd.f32 %v4217, %v4385
        %4387 = vmatmul.bf16.gmra.mxu0 %v3585
        %v4388 = vpop.f32.mrf.mxu0
        %v4389 = vadd.f32 %v4220, %v4388
        %v4390 = vpop.f32.mrf.mxu0
        %v4391 = vadd.f32 %v4222, %v4390
        %4392 = vmatmul.bf16.gmra.mxu0 %v3589
        %v4393 = vpop.f32.mrf.mxu0
        %v4394 = vadd.f32 %v4225, %v4393
        %v4395 = vpop.f32.mrf.mxu0
        %v4396 = vadd.f32 %v4227, %v4395
        %4397 = vmatmul.bf16.gmra.mxu0 %v3593
        %v4398 = vpop.f32.mrf.mxu0
        %v4399 = vadd.f32 %v4230, %v4398
        %v4400 = vpop.f32.mrf.mxu0
        %v4401 = vadd.f32 %v4232, %v4400
        %4402 = vmatmul.bf16.gmra.mxu0 %v3597
        %v4403 = vpop.f32.mrf.mxu0
        %v4404 = vadd.f32 %v4235, %v4403
        %v4405 = vpop.f32.mrf.mxu0
        %v4406 = vadd.f32 %v4237, %v4405
        %4407 = vmatmul.bf16.gmra.mxu0 %v3601
        %v4408 = vpop.f32.mrf.mxu0
        %v4409 = vadd.f32 %v4240, %v4408
        %v4410 = vpop.f32.mrf.mxu0
        %v4411 = vadd.f32 %v4242, %v4410
        %4412 = vmatmul.bf16.gmra.mxu0 %v3605
        %v4413 = vpop.f32.mrf.mxu0
        %v4414 = vadd.f32 %v4245, %v4413
        %v4415 = vpop.f32.mrf.mxu0
        %v4416 = vadd.f32 %v4247, %v4415
        %4417 = vmatmul.bf16.gmra.mxu0 %v3609
        %v4418 = vpop.f32.mrf.mxu0
        %v4419 = vadd.f32 %v4250, %v4418
        %v4420 = vpop.f32.mrf.mxu0
        %v4421 = vadd.f32 %v4252, %v4420
        %4422 = vmatmul.bf16.gmra.mxu0 %v3613
        %v4423 = vpop.f32.mrf.mxu0
        %v4424 = vadd.f32 %v4255, %v4423
        %v4425 = vpop.f32.mrf.mxu0
        %v4426 = vadd.f32 %v4257, %v4425
        %4427 = vmatmul.bf16.gmra.mxu0 %v3617
        %v4428 = vpop.f32.mrf.mxu0
        %v4429 = vadd.f32 %v4260, %v4428
        %v4430 = vpop.f32.mrf.mxu0
        %v4431 = vadd.f32 %v4262, %v4430
        %4432 = vmatmul.bf16.gmra.mxu0 %v3621
        %v4433 = vpop.f32.mrf.mxu0
        %v4434 = vadd.f32 %v4265, %v4433
        %v4435 = vpop.f32.mrf.mxu0
        %v4436 = vadd.f32 %v4267, %v4435
        %4437 = vmatmul.bf16.gmra.mxu0 %v3625
        %v4438 = vpop.f32.mrf.mxu0
        %v4439 = vadd.f32 %v4270, %v4438
        %v4440 = vpop.f32.mrf.mxu0
        %v4441 = vadd.f32 %v4272, %v4440
        %4442 = vmatmul.bf16.gmra.mxu0 %v3629
        %v4443 = vpop.f32.mrf.mxu0
        %v4444 = vadd.f32 %v4275, %v4443
        %v4445 = vpop.f32.mrf.mxu0
        %v4446 = vadd.f32 %v4277, %v4445
        %4447 = vmatmul.bf16.gmra.mxu0 %v3633
        %v4448 = vpop.f32.mrf.mxu0
        %v4449 = vadd.f32 %v4280, %v4448
        %v4450 = vpop.f32.mrf.mxu0
        %v4451 = vadd.f32 %v4282, %v4450
        %4452 = vmatmul.bf16.gmra.mxu0 %v3637
        %v4453 = vpop.f32.mrf.mxu0
        %v4454 = vadd.f32 %v4285, %v4453
        %v4455 = vpop.f32.mrf.mxu0
        %v4456 = vadd.f32 %v4287, %v4455
        %4457 = vmatmul.bf16.gmra.mxu0 %v3641
        %v4458 = vpop.f32.mrf.mxu0
        %v4459 = vadd.f32 %v4290, %v4458
        %v4460 = vpop.f32.mrf.mxu0
        %v4461 = vadd.f32 %v4292, %v4460
        %4462 = vmatmul.bf16.gmra.mxu0 %v3645
        %v4463 = vpop.f32.mrf.mxu0
        %v4464 = vadd.f32 %v4295, %v4463
        %v4465 = vpop.f32.mrf.mxu0
        %v4466 = vadd.f32 %v4297, %v4465
        %4467 = vmatmul.bf16.gmra.mxu0 %v3649
        %v4468 = vpop.f32.mrf.mxu0
        %v4469 = vadd.f32 %v4300, %v4468
        %v4470 = vpop.f32.mrf.mxu0
        %v4471 = vadd.f32 %v4302, %v4470
        %4472 = vmatmul.bf16.gmra.mxu0 %v3653
        %v4473 = vpop.f32.mrf.mxu0
        %v4474 = vadd.f32 %v4305, %v4473
        %v4475 = vpop.f32.mrf.mxu0
        %v4476 = vadd.f32 %v4307, %v4475
        %4477 = vmatmul.bf16.gmra.mxu0 %v3657
        %v4478 = vpop.f32.mrf.mxu0
        %v4479 = vadd.f32 %v4310, %v4478
        %v4480 = vpop.f32.mrf.mxu0
        %v4481 = vadd.f32 %v4312, %v4480
        %4482 = vmatmul.bf16.gmra.mxu0 %v3661
        %v4483 = vpop.f32.mrf.mxu0
        %v4484 = vadd.f32 %v4315, %v4483
        %v4485 = vpop.f32.mrf.mxu0
        %v4486 = vadd.f32 %v4317, %v4485
        %4487 = vmatmul.bf16.gmra.mxu0 %v3665
        %v4488 = vpop.f32.mrf.mxu0
        %v4489 = vadd.f32 %v4320, %v4488
        %v4490 = vpop.f32.mrf.mxu0
        %v4491 = vadd.f32 %v4322, %v4490
        %4492 = vmatmul.bf16.gmra.mxu0 %v3669
        %v4493 = vpop.f32.mrf.mxu0
        %v4494 = vadd.f32 %v4325, %v4493
        %v4495 = vpop.f32.mrf.mxu0
        %v4496 = vadd.f32 %v4327, %v4495
        %4497 = vdwg.mxu0
        %4498 = vmatpush.bf16.msra.mxu0 %v3958
        %4499 = vmatpush.bf16.msra.mxu0 %v3957
        %4500 = vmatpush.bf16.msra.mxu0 %v3956
        %4501 = vmatpush.bf16.msra.mxu0 %v3955
        %4502 = vmatpush.bf16.msra.mxu0 %v3954
        %4503 = vmatpush.bf16.msra.mxu0 %v3953
        %4504 = vmatpush.bf16.msra.mxu0 %v3952
        %4505 = vmatpush.bf16.msra.mxu0 %v3951
        %4506 = vmatmul.bf16.gmra.mxu0 %v3546
        %v4507 = vpop.f32.mrf.mxu0
        %v4508 = vadd.f32 %v4339, %v4507
        %v4509 = vpop.f32.mrf.mxu0
        %v4510 = vadd.f32 %v4341, %v4509
        %4511 = vmatmul.bf16.gmra.mxu0 %v3550
        %v4512 = vpop.f32.mrf.mxu0
        %v4513 = vadd.f32 %v4344, %v4512
        %v4514 = vpop.f32.mrf.mxu0
        %v4515 = vadd.f32 %v4346, %v4514
        %4516 = vmatmul.bf16.gmra.mxu0 %v3554
        %v4517 = vpop.f32.mrf.mxu0
        %v4518 = vadd.f32 %v4349, %v4517
        %v4519 = vpop.f32.mrf.mxu0
        %v4520 = vadd.f32 %v4351, %v4519
        %4521 = vmatmul.bf16.gmra.mxu0 %v3558
        %v4522 = vpop.f32.mrf.mxu0
        %v4523 = vadd.f32 %v4354, %v4522
        %v4524 = vpop.f32.mrf.mxu0
        %v4525 = vadd.f32 %v4356, %v4524
        %4526 = vmatmul.bf16.gmra.mxu0 %v3562
        %v4527 = vpop.f32.mrf.mxu0
        %v4528 = vadd.f32 %v4359, %v4527
        %v4529 = vpop.f32.mrf.mxu0
        %v4530 = vadd.f32 %v4361, %v4529
        %4531 = vmatmul.bf16.gmra.mxu0 %v3566
        %v4532 = vpop.f32.mrf.mxu0
        %v4533 = vadd.f32 %v4364, %v4532
        %v4534 = vpop.f32.mrf.mxu0
        %v4535 = vadd.f32 %v4366, %v4534
        %4536 = vmatmul.bf16.gmra.mxu0 %v3570
        %v4537 = vpop.f32.mrf.mxu0
        %v4538 = vadd.f32 %v4369, %v4537
        %v4539 = vpop.f32.mrf.mxu0
        %v4540 = vadd.f32 %v4371, %v4539
        %4541 = vmatmul.bf16.gmra.mxu0 %v3574
        %v4542 = vpop.f32.mrf.mxu0
        %v4543 = vadd.f32 %v4374, %v4542
        %v4544 = vpop.f32.mrf.mxu0
        %v4545 = vadd.f32 %v4376, %v4544
        %4546 = vmatmul.bf16.gmra.mxu0 %v3578
        %v4547 = vpop.f32.mrf.mxu0
        %v4548 = vadd.f32 %v4379, %v4547
        %v4549 = vpop.f32.mrf.mxu0
        %v4550 = vadd.f32 %v4381, %v4549
        %4551 = vmatmul.bf16.gmra.mxu0 %v3582
        %v4552 = vpop.f32.mrf.mxu0
        %v4553 = vadd.f32 %v4384, %v4552
        %v4554 = vpop.f32.mrf.mxu0
        %v4555 = vadd.f32 %v4386, %v4554
        %4556 = vmatmul.bf16.gmra.mxu0 %v3586
        %v4557 = vpop.f32.mrf.mxu0
        %v4558 = vadd.f32 %v4389, %v4557
        %v4559 = vpop.f32.mrf.mxu0
        %v4560 = vadd.f32 %v4391, %v4559
        %4561 = vmatmul.bf16.gmra.mxu0 %v3590
        %v4562 = vpop.f32.mrf.mxu0
        %v4563 = vadd.f32 %v4394, %v4562
        %v4564 = vpop.f32.mrf.mxu0
        %v4565 = vadd.f32 %v4396, %v4564
        %4566 = vmatmul.bf16.gmra.mxu0 %v3594
        %v4567 = vpop.f32.mrf.mxu0
        %v4568 = vadd.f32 %v4399, %v4567
        %v4569 = vpop.f32.mrf.mxu0
        %v4570 = vadd.f32 %v4401, %v4569
        %4571 = vmatmul.bf16.gmra.mxu0 %v3598
        %v4572 = vpop.f32.mrf.mxu0
        %v4573 = vadd.f32 %v4404, %v4572
        %v4574 = vpop.f32.mrf.mxu0
        %v4575 = vadd.f32 %v4406, %v4574
        %4576 = vmatmul.bf16.gmra.mxu0 %v3602
        %v4577 = vpop.f32.mrf.mxu0
        %v4578 = vadd.f32 %v4409, %v4577
        %v4579 = vpop.f32.mrf.mxu0
        %v4580 = vadd.f32 %v4411, %v4579
        %4581 = vmatmul.bf16.gmra.mxu0 %v3606
        %v4582 = vpop.f32.mrf.mxu0
        %v4583 = vadd.f32 %v4414, %v4582
        %v4584 = vpop.f32.mrf.mxu0
        %v4585 = vadd.f32 %v4416, %v4584
        %4586 = vmatmul.bf16.gmra.mxu0 %v3610
        %v4587 = vpop.f32.mrf.mxu0
        %v4588 = vadd.f32 %v4419, %v4587
        %v4589 = vpop.f32.mrf.mxu0
        %v4590 = vadd.f32 %v4421, %v4589
        %4591 = vmatmul.bf16.gmra.mxu0 %v3614
        %v4592 = vpop.f32.mrf.mxu0
        %v4593 = vadd.f32 %v4424, %v4592
        %v4594 = vpop.f32.mrf.mxu0
        %v4595 = vadd.f32 %v4426, %v4594
        %4596 = vmatmul.bf16.gmra.mxu0 %v3618
        %v4597 = vpop.f32.mrf.mxu0
        %v4598 = vadd.f32 %v4429, %v4597
        %v4599 = vpop.f32.mrf.mxu0
        %v4600 = vadd.f32 %v4431, %v4599
        %4601 = vmatmul.bf16.gmra.mxu0 %v3622
        %v4602 = vpop.f32.mrf.mxu0
        %v4603 = vadd.f32 %v4434, %v4602
        %v4604 = vpop.f32.mrf.mxu0
        %v4605 = vadd.f32 %v4436, %v4604
        %4606 = vmatmul.bf16.gmra.mxu0 %v3626
        %v4607 = vpop.f32.mrf.mxu0
        %v4608 = vadd.f32 %v4439, %v4607
        %v4609 = vpop.f32.mrf.mxu0
        %v4610 = vadd.f32 %v4441, %v4609
        %4611 = vmatmul.bf16.gmra.mxu0 %v3630
        %v4612 = vpop.f32.mrf.mxu0
        %v4613 = vadd.f32 %v4444, %v4612
        %v4614 = vpop.f32.mrf.mxu0
        %v4615 = vadd.f32 %v4446, %v4614
        %4616 = vmatmul.bf16.gmra.mxu0 %v3634
        %v4617 = vpop.f32.mrf.mxu0
        %v4618 = vadd.f32 %v4449, %v4617
        %v4619 = vpop.f32.mrf.mxu0
        %v4620 = vadd.f32 %v4451, %v4619
        %4621 = vmatmul.bf16.gmra.mxu0 %v3638
        %v4622 = vpop.f32.mrf.mxu0
        %v4623 = vadd.f32 %v4454, %v4622
        %v4624 = vpop.f32.mrf.mxu0
        %v4625 = vadd.f32 %v4456, %v4624
        %4626 = vmatmul.bf16.gmra.mxu0 %v3642
        %v4627 = vpop.f32.mrf.mxu0
        %v4628 = vadd.f32 %v4459, %v4627
        %v4629 = vpop.f32.mrf.mxu0
        %v4630 = vadd.f32 %v4461, %v4629
        %4631 = vmatmul.bf16.gmra.mxu0 %v3646
        %v4632 = vpop.f32.mrf.mxu0
        %v4633 = vadd.f32 %v4464, %v4632
        %v4634 = vpop.f32.mrf.mxu0
        %v4635 = vadd.f32 %v4466, %v4634
        %4636 = vmatmul.bf16.gmra.mxu0 %v3650
        %v4637 = vpop.f32.mrf.mxu0
        %v4638 = vadd.f32 %v4469, %v4637
        %v4639 = vpop.f32.mrf.mxu0
        %v4640 = vadd.f32 %v4471, %v4639
        %4641 = vmatmul.bf16.gmra.mxu0 %v3654
        %v4642 = vpop.f32.mrf.mxu0
        %v4643 = vadd.f32 %v4474, %v4642
        %v4644 = vpop.f32.mrf.mxu0
        %v4645 = vadd.f32 %v4476, %v4644
        %4646 = vmatmul.bf16.gmra.mxu0 %v3658
        %v4647 = vpop.f32.mrf.mxu0
        %v4648 = vadd.f32 %v4479, %v4647
        %v4649 = vpop.f32.mrf.mxu0
        %v4650 = vadd.f32 %v4481, %v4649
        %4651 = vmatmul.bf16.gmra.mxu0 %v3662
        %v4652 = vpop.f32.mrf.mxu0
        %v4653 = vadd.f32 %v4484, %v4652
        %v4654 = vpop.f32.mrf.mxu0
        %v4655 = vadd.f32 %v4486, %v4654
        %4656 = vmatmul.bf16.gmra.mxu0 %v3666
        %v4657 = vpop.f32.mrf.mxu0
        %v4658 = vadd.f32 %v4489, %v4657
        %v4659 = vpop.f32.mrf.mxu0
        %v4660 = vadd.f32 %v4491, %v4659
        %4661 = vmatmul.bf16.gmra.mxu0 %v3670
        %v4662 = vpop.f32.mrf.mxu0
        %v4663 = vadd.f32 %v4494, %v4662
        %v4664 = vpop.f32.mrf.mxu0
        %v4665 = vadd.f32 %v4496, %v4664
        %4666 = vdwg.mxu0
        %v4667 = vadd.f32 %v3671, %v4508
        %v4668 = vadd.f32 %v3672, %v4510
        %v4669 = vadd.f32 %v3673, %v4513
        %v4670 = vadd.f32 %v3674, %v4515
        %v4671 = vadd.f32 %v3675, %v4518
        %v4672 = vadd.f32 %v3676, %v4520
        %v4673 = vadd.f32 %v3677, %v4523
        %v4674 = vadd.f32 %v3678, %v4525
        %v4675 = vadd.f32 %v3679, %v4528
        %v4676 = vadd.f32 %v3680, %v4530
        %v4677 = vadd.f32 %v3681, %v4533
        %v4678 = vadd.f32 %v3682, %v4535
        %v4679 = vadd.f32 %v3683, %v4538
        %v4680 = vadd.f32 %v3684, %v4540
        %v4681 = vadd.f32 %v3685, %v4543
        %v4682 = vadd.f32 %v3686, %v4545
        %v4683 = vadd.f32 %v3687, %v4548
        %v4684 = vadd.f32 %v3688, %v4550
        %v4685 = vadd.f32 %v3689, %v4553
        %v4686 = vadd.f32 %v3690, %v4555
        %v4687 = vadd.f32 %v3691, %v4558
        %v4688 = vadd.f32 %v3692, %v4560
        %v4689 = vadd.f32 %v3693, %v4563
        %v4690 = vadd.f32 %v3694, %v4565
        %v4691 = vadd.f32 %v3695, %v4568
        %v4692 = vadd.f32 %v3696, %v4570
        %v4693 = vadd.f32 %v3697, %v4573
        %v4694 = vadd.f32 %v3698, %v4575
        %v4695 = vadd.f32 %v3699, %v4578
        %v4696 = vadd.f32 %v3700, %v4580
        %v4697 = vadd.f32 %v3701, %v4583
        %v4698 = vadd.f32 %v3702, %v4585
        %v4699 = vadd.f32 %v3703, %v4588
        %v4700 = vadd.f32 %v3704, %v4590
        %v4701 = vadd.f32 %v3705, %v4593
        %v4702 = vadd.f32 %v3706, %v4595
        %v4703 = vadd.f32 %v3707, %v4598
        %v4704 = vadd.f32 %v3708, %v4600
        %v4705 = vadd.f32 %v3709, %v4603
        %v4706 = vadd.f32 %v3710, %v4605
        %v4707 = vadd.f32 %v3711, %v4608
        %v4708 = vadd.f32 %v3712, %v4610
        %v4709 = vadd.f32 %v3713, %v4613
        %v4710 = vadd.f32 %v3714, %v4615
        %v4711 = vadd.f32 %v3715, %v4618
        %v4712 = vadd.f32 %v3716, %v4620
        %v4713 = vadd.f32 %v3717, %v4623
        %v4714 = vadd.f32 %v3718, %v4625
        %v4715 = vadd.f32 %v3719, %v4628
        %v4716 = vadd.f32 %v3720, %v4630
        %v4717 = vadd.f32 %v3721, %v4633
        %v4718 = vadd.f32 %v3722, %v4635
        %v4719 = vadd.f32 %v3723, %v4638
        %v4720 = vadd.f32 %v3724, %v4640
        %v4721 = vadd.f32 %v3725, %v4643
        %v4722 = vadd.f32 %v3726, %v4645
        %v4723 = vadd.f32 %v3727, %v4648
        %v4724 = vadd.f32 %v3728, %v4650
        %v4725 = vadd.f32 %v3729, %v4653
        %v4726 = vadd.f32 %v3730, %v4655
        %v4727 = vadd.f32 %v3731, %v4658
        %v4728 = vadd.f32 %v3732, %v4660
        %v4729 = vadd.f32 %v3733, %v4663
        %v4730 = vadd.f32 %v3734, %v4665
        %4731 = vst [vmem:[#allocation3] sm:$0xff] %v4667
        %4732 = vst [vmem:[#allocation3 + $0x8] sm:$0xff] %v4668
        %4733 = vst [vmem:[#allocation3 + $0x10] sm:$0xff] %v4669
        %4734 = vst [vmem:[#allocation3 + $0x18] sm:$0xff] %v4670
        %4735 = vst [vmem:[#allocation3 + $0x20] sm:$0xff] %v4671
        %4736 = vst [vmem:[#allocation3 + $0x28] sm:$0xff] %v4672
        %4737 = vst [vmem:[#allocation3 + $0x30] sm:$0xff] %v4673
        %4738 = vst [vmem:[#allocation3 + $0x38] sm:$0xff] %v4674
        %4739 = vst [vmem:[#allocation3 + $0x40] sm:$0xff] %v4675
        %4740 = vst [vmem:[#allocation3 + $0x48] sm:$0xff] %v4676
        %4741 = vst [vmem:[#allocation3 + $0x50] sm:$0xff] %v4677
        %4742 = vst [vmem:[#allocation3 + $0x58] sm:$0xff] %v4678
        %4743 = vst [vmem:[#allocation3 + $0x60] sm:$0xff] %v4679
        %4744 = vst [vmem:[#allocation3 + $0x68] sm:$0xff] %v4680
        %4745 = vst [vmem:[#allocation3 + $0x70] sm:$0xff] %v4681
        %4746 = vst [vmem:[#allocation3 + $0x78] sm:$0xff] %v4682
        %4747 = vst [vmem:[#allocation3 + $0x80] sm:$0xff] %v4683
        %4748 = vst [vmem:[#allocation3 + $0x88] sm:$0xff] %v4684
        %4749 = vst [vmem:[#allocation3 + $0x90] sm:$0xff] %v4685
        %4750 = vst [vmem:[#allocation3 + $0x98] sm:$0xff] %v4686
        %4751 = vst [vmem:[#allocation3 + $0xa0] sm:$0xff] %v4687
        %4752 = vst [vmem:[#allocation3 + $0xa8] sm:$0xff] %v4688
        %4753 = vst [vmem:[#allocation3 + $0xb0] sm:$0xff] %v4689
        %4754 = vst [vmem:[#allocation3 + $0xb8] sm:$0xff] %v4690
        %4755 = vst [vmem:[#allocation3 + $0xc0] sm:$0xff] %v4691
        %4756 = vst [vmem:[#allocation3 + $0xc8] sm:$0xff] %v4692
        %4757 = vst [vmem:[#allocation3 + $0xd0] sm:$0xff] %v4693
        %4758 = vst [vmem:[#allocation3 + $0xd8] sm:$0xff] %v4694
        %4759 = vst [vmem:[#allocation3 + $0xe0] sm:$0xff] %v4695
        %4760 = vst [vmem:[#allocation3 + $0xe8] sm:$0xff] %v4696
        %4761 = vst [vmem:[#allocation3 + $0xf0] sm:$0xff] %v4697
        %4762 = vst [vmem:[#allocation3 + $0xf8] sm:$0xff] %v4698
        %4763 = vst [vmem:[#allocation3 + $0x100] sm:$0xff] %v4699
        %4764 = vst [vmem:[#allocation3 + $0x108] sm:$0xff] %v4700
        %4765 = vst [vmem:[#allocation3 + $0x110] sm:$0xff] %v4701
        %4766 = vst [vmem:[#allocation3 + $0x118] sm:$0xff] %v4702
        %4767 = vst [vmem:[#allocation3 + $0x120] sm:$0xff] %v4703
        %4768 = vst [vmem:[#allocation3 + $0x128] sm:$0xff] %v4704
        %4769 = vst [vmem:[#allocation3 + $0x130] sm:$0xff] %v4705
        %4770 = vst [vmem:[#allocation3 + $0x138] sm:$0xff] %v4706
        %4771 = vst [vmem:[#allocation3 + $0x140] sm:$0xff] %v4707
        %4772 = vst [vmem:[#allocation3 + $0x148] sm:$0xff] %v4708
        %4773 = vst [vmem:[#allocation3 + $0x150] sm:$0xff] %v4709
        %4774 = vst [vmem:[#allocation3 + $0x158] sm:$0xff] %v4710
        %4775 = vst [vmem:[#allocation3 + $0x160] sm:$0xff] %v4711
        %4776 = vst [vmem:[#allocation3 + $0x168] sm:$0xff] %v4712
        %4777 = vst [vmem:[#allocation3 + $0x170] sm:$0xff] %v4713
        %4778 = vst [vmem:[#allocation3 + $0x178] sm:$0xff] %v4714
        %4779 = vst [vmem:[#allocation3 + $0x180] sm:$0xff] %v4715
        %4780 = vst [vmem:[#allocation3 + $0x188] sm:$0xff] %v4716
        %4781 = vst [vmem:[#allocation3 + $0x190] sm:$0xff] %v4717
        %4782 = vst [vmem:[#allocation3 + $0x198] sm:$0xff] %v4718
        %4783 = vst [vmem:[#allocation3 + $0x1a0] sm:$0xff] %v4719
        %4784 = vst [vmem:[#allocation3 + $0x1a8] sm:$0xff] %v4720
        %4785 = vst [vmem:[#allocation3 + $0x1b0] sm:$0xff] %v4721
        %4786 = vst [vmem:[#allocation3 + $0x1b8] sm:$0xff] %v4722
        %4787 = vst [vmem:[#allocation3 + $0x1c0] sm:$0xff] %v4723
        %4788 = vst [vmem:[#allocation3 + $0x1c8] sm:$0xff] %v4724
        %4789 = vst [vmem:[#allocation3 + $0x1d0] sm:$0xff] %v4725
        %4790 = vst [vmem:[#allocation3 + $0x1d8] sm:$0xff] %v4726
        %4791 = vst [vmem:[#allocation3 + $0x1e0] sm:$0xff] %v4727
        %4792 = vst [vmem:[#allocation3 + $0x1e8] sm:$0xff] %v4728
        %4793 = vst [vmem:[#allocation3 + $0x1f0] sm:$0xff] %v4729
        %4794 = vst [vmem:[#allocation3 + $0x1f8] sm:$0xff] %v4730
        // Predicated region
        $region65: #{tpu_custom_call.1} parent=39 // pred_check
          %p4795 = pneg %p347
        $region66: #{tpu_custom_call.1} parent=39 // pred_check_branch
          %4797 = sbr.rel (%p4795) target = $region68
        $region67: #{tpu_custom_call.1} parent=39 // pred_region
          %v4798 = vld [vmem:[%s294] sm:$0xff]
          %v4799 = vld [vmem:[%s294 + $0x8] sm:$0xff]
          %v4800 = vld [vmem:[%s294 + $0x10] sm:$0xff]
          %v4801 = vld [vmem:[%s294 + $0x18] sm:$0xff]
          %v4802 = vld [vmem:[%s294 + $0x20] sm:$0xff]
          %v4803 = vld [vmem:[%s294 + $0x28] sm:$0xff]
          %v4804 = vld [vmem:[%s294 + $0x30] sm:$0xff]
          %v4805 = vld [vmem:[%s294 + $0x38] sm:$0xff]
          %v4806 = vld [vmem:[%s294 + $0x40] sm:$0xff]
          %v4807 = vld [vmem:[%s294 + $0x48] sm:$0xff]
          %v4808 = vld [vmem:[%s294 + $0x50] sm:$0xff]
          %v4809 = vld [vmem:[%s294 + $0x58] sm:$0xff]
          %v4810 = vld [vmem:[%s294 + $0x60] sm:$0xff]
          %v4811 = vld [vmem:[%s294 + $0x68] sm:$0xff]
          %v4812 = vld [vmem:[%s294 + $0x70] sm:$0xff]
          %v4813 = vld [vmem:[%s294 + $0x78] sm:$0xff]
          %v4814 = vld [vmem:[%s294 + $0x80] sm:$0xff]
          %v4815 = vld [vmem:[%s294 + $0x88] sm:$0xff]
          %v4816 = vld [vmem:[%s294 + $0x90] sm:$0xff]
          %v4817 = vld [vmem:[%s294 + $0x98] sm:$0xff]
          %v4818 = vld [vmem:[%s294 + $0xa0] sm:$0xff]
          %v4819 = vld [vmem:[%s294 + $0xa8] sm:$0xff]
          %v4820 = vld [vmem:[%s294 + $0xb0] sm:$0xff]
          %v4821 = vld [vmem:[%s294 + $0xb8] sm:$0xff]
          %v4822 = vld [vmem:[%s294 + $0xc0] sm:$0xff]
          %v4823 = vld [vmem:[%s294 + $0xc8] sm:$0xff]
          %v4824 = vld [vmem:[%s294 + $0xd0] sm:$0xff]
          %v4825 = vld [vmem:[%s294 + $0xd8] sm:$0xff]
          %v4826 = vld [vmem:[%s294 + $0xe0] sm:$0xff]
          %v4827 = vld [vmem:[%s294 + $0xe8] sm:$0xff]
          %v4828 = vld [vmem:[%s294 + $0xf0] sm:$0xff]
          %v4829 = vld [vmem:[%s294 + $0xf8] sm:$0xff]
          %v4830 = vld [vmem:[%s294 + $0x100] sm:$0xff]
          %v4831 = vld [vmem:[%s294 + $0x108] sm:$0xff]
          %v4832 = vld [vmem:[%s294 + $0x110] sm:$0xff]
          %v4833 = vld [vmem:[%s294 + $0x118] sm:$0xff]
          %v4834 = vld [vmem:[%s294 + $0x120] sm:$0xff]
          %v4835 = vld [vmem:[%s294 + $0x128] sm:$0xff]
          %v4836 = vld [vmem:[%s294 + $0x130] sm:$0xff]
          %v4837 = vld [vmem:[%s294 + $0x138] sm:$0xff]
          %v4838 = vld [vmem:[%s294 + $0x140] sm:$0xff]
          %v4839 = vld [vmem:[%s294 + $0x148] sm:$0xff]
          %v4840 = vld [vmem:[%s294 + $0x150] sm:$0xff]
          %v4841 = vld [vmem:[%s294 + $0x158] sm:$0xff]
          %v4842 = vld [vmem:[%s294 + $0x160] sm:$0xff]
          %v4843 = vld [vmem:[%s294 + $0x168] sm:$0xff]
          %v4844 = vld [vmem:[%s294 + $0x170] sm:$0xff]
          %v4845 = vld [vmem:[%s294 + $0x178] sm:$0xff]
          %v4846 = vld [vmem:[%s294 + $0x180] sm:$0xff]
          %v4847 = vld [vmem:[%s294 + $0x188] sm:$0xff]
          %v4848 = vld [vmem:[%s294 + $0x190] sm:$0xff]
          %v4849 = vld [vmem:[%s294 + $0x198] sm:$0xff]
          %v4850 = vld [vmem:[%s294 + $0x1a0] sm:$0xff]
          %v4851 = vld [vmem:[%s294 + $0x1a8] sm:$0xff]
          %v4852 = vld [vmem:[%s294 + $0x1b0] sm:$0xff]
          %v4853 = vld [vmem:[%s294 + $0x1b8] sm:$0xff]
          %v4854 = vld [vmem:[%s294 + $0x1c0] sm:$0xff]
          %v4855 = vld [vmem:[%s294 + $0x1c8] sm:$0xff]
          %v4856 = vld [vmem:[%s294 + $0x1d0] sm:$0xff]
          %v4857 = vld [vmem:[%s294 + $0x1d8] sm:$0xff]
          %v4858 = vld [vmem:[%s294 + $0x1e0] sm:$0xff]
          %v4859 = vld [vmem:[%s294 + $0x1e8] sm:$0xff]
          %v4860 = vld [vmem:[%s294 + $0x1f0] sm:$0xff]
          %v4861 = vld [vmem:[%s294 + $0x1f8] sm:$0xff]
          %v4862 = vld [vmem:[#allocation7] sm:$0x7]
          %v4863 = vld [vmem:[#allocation3] sm:$0xff]
          %v4864 = vld [vmem:[#allocation3 + $0x8] sm:$0xff]
          %v4865 = vld [vmem:[#allocation3 + $0x10] sm:$0xff]
          %v4866 = vld [vmem:[#allocation3 + $0x18] sm:$0xff]
          %v4867 = vld [vmem:[#allocation3 + $0x20] sm:$0xff]
          %v4868 = vld [vmem:[#allocation3 + $0x28] sm:$0xff]
          %v4869 = vld [vmem:[#allocation3 + $0x30] sm:$0xff]
          %v4870 = vld [vmem:[#allocation3 + $0x38] sm:$0xff]
          %v4871 = vld [vmem:[#allocation3 + $0x40] sm:$0xff]
          %v4872 = vld [vmem:[#allocation3 + $0x48] sm:$0xff]
          %v4873 = vld [vmem:[#allocation3 + $0x50] sm:$0xff]
          %v4874 = vld [vmem:[#allocation3 + $0x58] sm:$0xff]
          %v4875 = vld [vmem:[#allocation3 + $0x60] sm:$0xff]
          %v4876 = vld [vmem:[#allocation3 + $0x68] sm:$0xff]
          %v4877 = vld [vmem:[#allocation3 + $0x70] sm:$0xff]
          %v4878 = vld [vmem:[#allocation3 + $0x78] sm:$0xff]
          %v4879 = vld [vmem:[#allocation3 + $0x80] sm:$0xff]
          %v4880 = vld [vmem:[#allocation3 + $0x88] sm:$0xff]
          %v4881 = vld [vmem:[#allocation3 + $0x90] sm:$0xff]
          %v4882 = vld [vmem:[#allocation3 + $0x98] sm:$0xff]
          %v4883 = vld [vmem:[#allocation3 + $0xa0] sm:$0xff]
          %v4884 = vld [vmem:[#allocation3 + $0xa8] sm:$0xff]
          %v4885 = vld [vmem:[#allocation3 + $0xb0] sm:$0xff]
          %v4886 = vld [vmem:[#allocation3 + $0xb8] sm:$0xff]
          %v4887 = vld [vmem:[#allocation3 + $0xc0] sm:$0xff]
          %v4888 = vld [vmem:[#allocation3 + $0xc8] sm:$0xff]
          %v4889 = vld [vmem:[#allocation3 + $0xd0] sm:$0xff]
          %v4890 = vld [vmem:[#allocation3 + $0xd8] sm:$0xff]
          %v4891 = vld [vmem:[#allocation3 + $0xe0] sm:$0xff]
          %v4892 = vld [vmem:[#allocation3 + $0xe8] sm:$0xff]
          %v4893 = vld [vmem:[#allocation3 + $0xf0] sm:$0xff]
          %v4894 = vld [vmem:[#allocation3 + $0xf8] sm:$0xff]
          %v4895 = vld [vmem:[#allocation3 + $0x100] sm:$0xff]
          %v4896 = vld [vmem:[#allocation3 + $0x108] sm:$0xff]
          %v4897 = vld [vmem:[#allocation3 + $0x110] sm:$0xff]
          %v4898 = vld [vmem:[#allocation3 + $0x118] sm:$0xff]
          %v4899 = vld [vmem:[#allocation3 + $0x120] sm:$0xff]
          %v4900 = vld [vmem:[#allocation3 + $0x128] sm:$0xff]
          %v4901 = vld [vmem:[#allocation3 + $0x130] sm:$0xff]
          %v4902 = vld [vmem:[#allocation3 + $0x138] sm:$0xff]
          %v4903 = vld [vmem:[#allocation3 + $0x140] sm:$0xff]
          %v4904 = vld [vmem:[#allocation3 + $0x148] sm:$0xff]
          %v4905 = vld [vmem:[#allocation3 + $0x150] sm:$0xff]
          %v4906 = vld [vmem:[#allocation3 + $0x158] sm:$0xff]
          %v4907 = vld [vmem:[#allocation3 + $0x160] sm:$0xff]
          %v4908 = vld [vmem:[#allocation3 + $0x168] sm:$0xff]
          %v4909 = vld [vmem:[#allocation3 + $0x170] sm:$0xff]
          %v4910 = vld [vmem:[#allocation3 + $0x178] sm:$0xff]
          %v4911 = vld [vmem:[#allocation3 + $0x180] sm:$0xff]
          %v4912 = vld [vmem:[#allocation3 + $0x188] sm:$0xff]
          %v4913 = vld [vmem:[#allocation3 + $0x190] sm:$0xff]
          %v4914 = vld [vmem:[#allocation3 + $0x198] sm:$0xff]
          %v4915 = vld [vmem:[#allocation3 + $0x1a0] sm:$0xff]
          %v4916 = vld [vmem:[#allocation3 + $0x1a8] sm:$0xff]
          %v4917 = vld [vmem:[#allocation3 + $0x1b0] sm:$0xff]
          %v4918 = vld [vmem:[#allocation3 + $0x1b8] sm:$0xff]
          %v4919 = vld [vmem:[#allocation3 + $0x1c0] sm:$0xff]
          %v4920 = vld [vmem:[#allocation3 + $0x1c8] sm:$0xff]
          %v4921 = vld [vmem:[#allocation3 + $0x1d0] sm:$0xff]
          %v4922 = vld [vmem:[#allocation3 + $0x1d8] sm:$0xff]
          %v4923 = vld [vmem:[#allocation3 + $0x1e0] sm:$0xff]
          %v4924 = vld [vmem:[#allocation3 + $0x1e8] sm:$0xff]
          %v4925 = vld [vmem:[#allocation3 + $0x1f0] sm:$0xff]
          %v4926 = vld [vmem:[#allocation3 + $0x1f8] sm:$0xff]
          %v4927 = vadd.f32 %v4798, %v4863
          %v4928 = vadd.f32 %v4799, %v4864
          %v4929 = vadd.f32 %v4800, %v4865
          %v4930 = vadd.f32 %v4801, %v4866
          %v4931 = vadd.f32 %v4802, %v4867
          %v4932 = vadd.f32 %v4803, %v4868
          %v4933 = vadd.f32 %v4804, %v4869
          %v4934 = vadd.f32 %v4805, %v4870
          %v4935 = vadd.f32 %v4806, %v4871
          %v4936 = vadd.f32 %v4807, %v4872
          %v4937 = vadd.f32 %v4808, %v4873
          %v4938 = vadd.f32 %v4809, %v4874
          %v4939 = vadd.f32 %v4810, %v4875
          %v4940 = vadd.f32 %v4811, %v4876
          %v4941 = vadd.f32 %v4812, %v4877
          %v4942 = vadd.f32 %v4813, %v4878
          %v4943 = vadd.f32 %v4814, %v4879
          %v4944 = vadd.f32 %v4815, %v4880
          %v4945 = vadd.f32 %v4816, %v4881
          %v4946 = vadd.f32 %v4817, %v4882
          %v4947 = vadd.f32 %v4818, %v4883
          %v4948 = vadd.f32 %v4819, %v4884
          %v4949 = vadd.f32 %v4820, %v4885
          %v4950 = vadd.f32 %v4821, %v4886
          %v4951 = vadd.f32 %v4822, %v4887
          %v4952 = vadd.f32 %v4823, %v4888
          %v4953 = vadd.f32 %v4824, %v4889
          %v4954 = vadd.f32 %v4825, %v4890
          %v4955 = vadd.f32 %v4826, %v4891
          %v4956 = vadd.f32 %v4827, %v4892
          %v4957 = vadd.f32 %v4828, %v4893
          %v4958 = vadd.f32 %v4829, %v4894
          %v4959 = vadd.f32 %v4830, %v4895
          %v4960 = vadd.f32 %v4831, %v4896
          %v4961 = vadd.f32 %v4832, %v4897
          %v4962 = vadd.f32 %v4833, %v4898
          %v4963 = vadd.f32 %v4834, %v4899
          %v4964 = vadd.f32 %v4835, %v4900
          %v4965 = vadd.f32 %v4836, %v4901
          %v4966 = vadd.f32 %v4837, %v4902
          %v4967 = vadd.f32 %v4838, %v4903
          %v4968 = vadd.f32 %v4839, %v4904
          %v4969 = vadd.f32 %v4840, %v4905
          %v4970 = vadd.f32 %v4841, %v4906
          %v4971 = vadd.f32 %v4842, %v4907
          %v4972 = vadd.f32 %v4843, %v4908
          %v4973 = vadd.f32 %v4844, %v4909
          %v4974 = vadd.f32 %v4845, %v4910
          %v4975 = vadd.f32 %v4846, %v4911
          %v4976 = vadd.f32 %v4847, %v4912
          %v4977 = vadd.f32 %v4848, %v4913
          %v4978 = vadd.f32 %v4849, %v4914
          %v4979 = vadd.f32 %v4850, %v4915
          %v4980 = vadd.f32 %v4851, %v4916
          %v4981 = vadd.f32 %v4852, %v4917
          %v4982 = vadd.f32 %v4853, %v4918
          %v4983 = vadd.f32 %v4854, %v4919
          %v4984 = vadd.f32 %v4855, %v4920
          %v4985 = vadd.f32 %v4856, %v4921
          %v4986 = vadd.f32 %v4857, %v4922
          %v4987 = vadd.f32 %v4858, %v4923
          %v4988 = vadd.f32 %v4859, %v4924
          %v4989 = vadd.f32 %v4860, %v4925
          %v4990 = vadd.f32 %v4861, %v4926
          %v4991 = vperm.slane %v4862, 2
          %v4992 = vadd.f32 %v4927, %v4991
          %v4993 = vadd.f32 %v4928, %v4991
          %v4994 = vadd.f32 %v4929, %v4991
          %v4995 = vadd.f32 %v4930, %v4991
          %v4996 = vadd.f32 %v4931, %v4991
          %v4997 = vadd.f32 %v4932, %v4991
          %v4998 = vadd.f32 %v4933, %v4991
          %v4999 = vadd.f32 %v4934, %v4991
          %v5000 = vadd.f32 %v4935, %v4991
          %v5001 = vadd.f32 %v4936, %v4991
          %v5002 = vadd.f32 %v4937, %v4991
          %v5003 = vadd.f32 %v4938, %v4991
          %v5004 = vadd.f32 %v4939, %v4991
          %v5005 = vadd.f32 %v4940, %v4991
          %v5006 = vadd.f32 %v4941, %v4991
          %v5007 = vadd.f32 %v4942, %v4991
          %v5008 = vadd.f32 %v4943, %v4991
          %v5009 = vadd.f32 %v4944, %v4991
          %v5010 = vadd.f32 %v4945, %v4991
          %v5011 = vadd.f32 %v4946, %v4991
          %v5012 = vadd.f32 %v4947, %v4991
          %v5013 = vadd.f32 %v4948, %v4991
          %v5014 = vadd.f32 %v4949, %v4991
          %v5015 = vadd.f32 %v4950, %v4991
          %v5016 = vadd.f32 %v4951, %v4991
          %v5017 = vadd.f32 %v4952, %v4991
          %v5018 = vadd.f32 %v4953, %v4991
          %v5019 = vadd.f32 %v4954, %v4991
          %v5020 = vadd.f32 %v4955, %v4991
          %v5021 = vadd.f32 %v4956, %v4991
          %v5022 = vadd.f32 %v4957, %v4991
          %v5023 = vadd.f32 %v4958, %v4991
          %v5024 = vadd.f32 %v4959, %v4991
          %v5025 = vadd.f32 %v4960, %v4991
          %v5026 = vadd.f32 %v4961, %v4991
          %v5027 = vadd.f32 %v4962, %v4991
          %v5028 = vadd.f32 %v4963, %v4991
          %v5029 = vadd.f32 %v4964, %v4991
          %v5030 = vadd.f32 %v4965, %v4991
          %v5031 = vadd.f32 %v4966, %v4991
          %v5032 = vadd.f32 %v4967, %v4991
          %v5033 = vadd.f32 %v4968, %v4991
          %v5034 = vadd.f32 %v4969, %v4991
          %v5035 = vadd.f32 %v4970, %v4991
          %v5036 = vadd.f32 %v4971, %v4991
          %v5037 = vadd.f32 %v4972, %v4991
          %v5038 = vadd.f32 %v4973, %v4991
          %v5039 = vadd.f32 %v4974, %v4991
          %v5040 = vadd.f32 %v4975, %v4991
          %v5041 = vadd.f32 %v4976, %v4991
          %v5042 = vadd.f32 %v4977, %v4991
          %v5043 = vadd.f32 %v4978, %v4991
          %v5044 = vadd.f32 %v4979, %v4991
          %v5045 = vadd.f32 %v4980, %v4991
          %v5046 = vadd.f32 %v4981, %v4991
          %v5047 = vadd.f32 %v4982, %v4991
          %v5048 = vadd.f32 %v4983, %v4991
          %v5049 = vadd.f32 %v4984, %v4991
          %v5050 = vadd.f32 %v4985, %v4991
          %v5051 = vadd.f32 %v4986, %v4991
          %v5052 = vadd.f32 %v4987, %v4991
          %v5053 = vadd.f32 %v4988, %v4991
          %v5054 = vadd.f32 %v4989, %v4991
          %v5055 = vadd.f32 %v4990, %v4991
          %5056 = vst [vmem:[%s341] sm:$0xff] %v4992
          %5057 = vst [vmem:[%s341 + $0x8] sm:$0xff] %v4993
          %5058 = vst [vmem:[%s341 + $0x10] sm:$0xff] %v4994
          %5059 = vst [vmem:[%s341 + $0x18] sm:$0xff] %v4995
          %5060 = vst [vmem:[%s341 + $0x20] sm:$0xff] %v4996
          %5061 = vst [vmem:[%s341 + $0x28] sm:$0xff] %v4997
          %5062 = vst [vmem:[%s341 + $0x30] sm:$0xff] %v4998
          %5063 = vst [vmem:[%s341 + $0x38] sm:$0xff] %v4999
          %5064 = vst [vmem:[%s341 + $0x40] sm:$0xff] %v5000
          %5065 = vst [vmem:[%s341 + $0x48] sm:$0xff] %v5001
          %5066 = vst [vmem:[%s341 + $0x50] sm:$0xff] %v5002
          %5067 = vst [vmem:[%s341 + $0x58] sm:$0xff] %v5003
          %5068 = vst [vmem:[%s341 + $0x60] sm:$0xff] %v5004
          %5069 = vst [vmem:[%s341 + $0x68] sm:$0xff] %v5005
          %5070 = vst [vmem:[%s341 + $0x70] sm:$0xff] %v5006
          %5071 = vst [vmem:[%s341 + $0x78] sm:$0xff] %v5007
          %5072 = vst [vmem:[%s341 + $0x80] sm:$0xff] %v5008
          %5073 = vst [vmem:[%s341 + $0x88] sm:$0xff] %v5009
          %5074 = vst [vmem:[%s341 + $0x90] sm:$0xff] %v5010
          %5075 = vst [vmem:[%s341 + $0x98] sm:$0xff] %v5011
          %5076 = vst [vmem:[%s341 + $0xa0] sm:$0xff] %v5012
          %5077 = vst [vmem:[%s341 + $0xa8] sm:$0xff] %v5013
          %5078 = vst [vmem:[%s341 + $0xb0] sm:$0xff] %v5014
          %5079 = vst [vmem:[%s341 + $0xb8] sm:$0xff] %v5015
          %5080 = vst [vmem:[%s341 + $0xc0] sm:$0xff] %v5016
          %5081 = vst [vmem:[%s341 + $0xc8] sm:$0xff] %v5017
          %5082 = vst [vmem:[%s341 + $0xd0] sm:$0xff] %v5018
          %5083 = vst [vmem:[%s341 + $0xd8] sm:$0xff] %v5019
          %5084 = vst [vmem:[%s341 + $0xe0] sm:$0xff] %v5020
          %5085 = vst [vmem:[%s341 + $0xe8] sm:$0xff] %v5021
          %5086 = vst [vmem:[%s341 + $0xf0] sm:$0xff] %v5022
          %5087 = vst [vmem:[%s341 + $0xf8] sm:$0xff] %v5023
          %5088 = vst [vmem:[%s341 + $0x100] sm:$0xff] %v5024
          %5089 = vst [vmem:[%s341 + $0x108] sm:$0xff] %v5025
          %5090 = vst [vmem:[%s341 + $0x110] sm:$0xff] %v5026
          %5091 = vst [vmem:[%s341 + $0x118] sm:$0xff] %v5027
          %5092 = vst [vmem:[%s341 + $0x120] sm:$0xff] %v5028
          %5093 = vst [vmem:[%s341 + $0x128] sm:$0xff] %v5029
          %5094 = vst [vmem:[%s341 + $0x130] sm:$0xff] %v5030
          %5095 = vst [vmem:[%s341 + $0x138] sm:$0xff] %v5031
          %5096 = vst [vmem:[%s341 + $0x140] sm:$0xff] %v5032
          %5097 = vst [vmem:[%s341 + $0x148] sm:$0xff] %v5033
          %5098 = vst [vmem:[%s341 + $0x150] sm:$0xff] %v5034
          %5099 = vst [vmem:[%s341 + $0x158] sm:$0xff] %v5035
          %5100 = vst [vmem:[%s341 + $0x160] sm:$0xff] %v5036
          %5101 = vst [vmem:[%s341 + $0x168] sm:$0xff] %v5037
          %5102 = vst [vmem:[%s341 + $0x170] sm:$0xff] %v5038
          %5103 = vst [vmem:[%s341 + $0x178] sm:$0xff] %v5039
          %5104 = vst [vmem:[%s341 + $0x180] sm:$0xff] %v5040
          %5105 = vst [vmem:[%s341 + $0x188] sm:$0xff] %v5041
          %5106 = vst [vmem:[%s341 + $0x190] sm:$0xff] %v5042
          %5107 = vst [vmem:[%s341 + $0x198] sm:$0xff] %v5043
          %5108 = vst [vmem:[%s341 + $0x1a0] sm:$0xff] %v5044
          %5109 = vst [vmem:[%s341 + $0x1a8] sm:$0xff] %v5045
          %5110 = vst [vmem:[%s341 + $0x1b0] sm:$0xff] %v5046
          %5111 = vst [vmem:[%s341 + $0x1b8] sm:$0xff] %v5047
          %5112 = vst [vmem:[%s341 + $0x1c0] sm:$0xff] %v5048
          %5113 = vst [vmem:[%s341 + $0x1c8] sm:$0xff] %v5049
          %5114 = vst [vmem:[%s341 + $0x1d0] sm:$0xff] %v5050
          %5115 = vst [vmem:[%s341 + $0x1d8] sm:$0xff] %v5051
          %5116 = vst [vmem:[%s341 + $0x1e0] sm:$0xff] %v5052
          %5117 = vst [vmem:[%s341 + $0x1e8] sm:$0xff] %v5053
          %5118 = vst [vmem:[%s341 + $0x1f0] sm:$0xff] %v5054
          %5119 = vst [vmem:[%s341 + $0x1f8] sm:$0xff] %v5055
        $region68: #{tpu_custom_call.1} parent=39 // pred_fallthru
          _
        %s5120 = sand.u32 %s169, 1
        %s5121 = scalar_lea.sflag [#allocation6], %s5120
        %s5122 = sand.u32 %s169, 1
        %s5123 = smul.addr %s5122, 512
        %s5124 = scalar_lea.vmem [#allocation13], %s5123
        // Predicated region
        $region69: #{tpu_custom_call.1} parent=39 // pred_check
          %p5125 = pneg %p179
        $region70: #{tpu_custom_call.1} parent=39 // pred_check_branch
          %5127 = sbr.rel (%p5125) target = $region72
        $region71: #{tpu_custom_call.1} parent=39 // pred_region
          %s5128 = smul.u32 64, %s28
          %5130 = vsyncadd %s5121, 0
          %s5131 = smul.addr %s5128, 8
          %s5132 = scalar_lea.hbm %s5, %s5131
          %s5133 = sshll.u32 %s5124, 4
          %s5134 = int_to_ptr.vmem [resolvable:$true] %s5133
          %s5135 = sshll.u32 %s5132, 4
          %s5136 = int_to_ptr.hbm [resolvable:$true] %s5135
          %5141 = dma.vmem_to_hbm [thread:$0]  %s5134, 8192, %s5136, %s5121, 128, 128, 8
        $region72: #{tpu_custom_call.1} parent=39 // pred_fallthru
          _
      $region40: #{tpu_custom_call.1} parent=5 // pred_fallthru
        _
      %p5142 = scmp.le.s32.totalorder 2, %s19
      // Predicated region
      $region73: #{tpu_custom_call.1} parent=5 // pred_check
        %p5143 = pneg %p5142
      $region74: #{tpu_custom_call.1} parent=5 // pred_check_branch
        %5145 = sbr.rel (%p5143) target = $region76
      $region75: #{tpu_custom_call.1} parent=5 // pred_region
        %s5146 = ssub.s32 %s19, 2
        // Predicated region
        $region77: #{tpu_custom_call.1} parent=75 // pred_check
          %p5147 = pneg %p185
        $region78: #{tpu_custom_call.1} parent=75 // pred_check_branch
          %5149 = sbr.rel (%p5147) target = $region80
        $region79: #{tpu_custom_call.1} parent=75 // pred_region
          %s5150 = sand.u32 %s170, 1
          %s5151 = scalar_lea.sflag [#allocation6], %s5150
          %s5152 = sand.u32 %s170, 1
          %s5153 = smul.addr %s5152, 512
          %s5154 = scalar_lea.vmem [#allocation13], %s5153
          %5156 = dma.done %s5151, 8192
        $region80: #{tpu_custom_call.1} parent=75 // pred_fallthru
          _
      $region76: #{tpu_custom_call.1} parent=5 // pred_fallthru
        _
    $region6: #{tpu_custom_call.1} parent=1 // loop_footer
      %s23 = sadd.s32 1, %s19
    $region7: #{tpu_custom_call.1} parent=1 // loop_footer_branch
      %18 = sbr.rel target = $region3
    $region8: #{tpu_custom_call.1} parent=1 // loop_exit
      _
    %5157 = vsyncpa [#allocation5], 1
    %s5158 = scalar_lea.sflag [#allocation5], 1
    %5159 = vsyncpa %s5158, 1
    %5160 = vsyncpa [#allocation8], 1
    %5161 = vsyncpa [#allocation11], 1
    %5162 = vsyncpa [#allocation6], 1
    %s5163 = scalar_lea.sflag [#allocation6], 1
    %5164 = vsyncpa %s5163, 1

</llo_original>
